<compile_context>
chip_gen: v7x
topology: tpu7x:2x2x1
jax: 0.10.0
libtpu: 0.0.40
codegen_flags: <defaults>
</compile_context>

<pallas_src>
import functools
import math

import jax
import jax.numpy as jnp
from jax import lax
from jax.experimental import pallas as pl
from jax.experimental.pallas import tpu as pltpu


# ----------------------------- hardware sizing -------------------------------

@functools.lru_cache(maxsize=None)
def _vmem_limit_bytes():
    """~75% of physical per-core VMEM (96 MiB on v5e/v6e, 48 MiB on v7x)."""
    try:
        info = pltpu.get_tpu_info()
        for name in ("vmem_capacity_bytes", "vmem_size_bytes", "vmem_bytes"):
            cap = getattr(info, name, None)
            if cap:
                return int(cap) * 3 // 4
    except Exception:
        pass
    return 48 * 1024 * 1024


@functools.lru_cache(maxsize=None)
def _bf16_exp_ok():
    """bf16 EUP exists on v6e and later; keep exp in f32 on v2-v5."""
    try:
        kind = jax.devices()[0].device_kind.lower()
    except Exception:
        return False
    return not any(("v%d" % g) in kind for g in (2, 3, 4, 5))


# ------------------------------ tiling helpers --------------------------------

def _pick_block(dim, target, aligns=(256, 128, 8)):
    """Largest block <= target dividing `dim` and a multiple of one of `aligns`
    (tried in order).  Falls back to the full dimension (always legal)."""
    if dim <= target:
        return dim
    for align in aligns:
        t = (target // align) * align
        while t >= align:
            if dim % t == 0:
                return t
            t -= align
    return dim


def _pick_head_block(H, Dh, bq, bk, budget_bytes=2 << 20):
    """Largest legal head-packing factor whose per-head score tiles fit the budget.
    Legal: hb divides H and (hb == H or (hb % 8 == 0 and (hb*Dh) % 128 == 0))."""
    legal = [hb for hb in range(1, H + 1)
             if H % hb == 0 and (hb == H or (hb % 8 == 0 and (hb * Dh) % 128 == 0))]
    cap = max(1, budget_bytes // max(1, bq * bk * 4))
    fitting = [hb for hb in legal if hb <= cap]
    return max(fitting) if fitting else min(legal)


# ------------------------------- Pallas kernels --------------------------------

def _linear_kernel(x_ref, w_ref, b_ref, o_ref, acc_ref, *, activation):
    k = pl.program_id(2)

    @pl.when(k == 0)
    def _():
        acc_ref[...] = jnp.zeros_like(acc_ref)

    # bf16 operands straight from HBM, f32 accumulation on the MXU.
    acc_ref[...] += jnp.dot(x_ref[...], w_ref[...], preferred_element_type=jnp.float32)

    @pl.when(k == pl.num_programs(2) - 1)
    def _():
        y = acc_ref[...] + b_ref[...]
        if activation == "relu":
            y = jnp.maximum(y, 0.0)
        elif activation == "tanh":
            y = jnp.tanh(y)
        o_ref[...] = y.astype(o_ref.dtype)


def linear(x, w, b, activation="none", *, tm=512, tn=512, tk=512):
    """x: (M, K) @ w: (K, N) + b: (N,) with fused activation -> (M, N)."""
    M, K = x.shape
    _, N = w.shape
    bm = _pick_block(M, tm, aligns=(256, 128, 8))
    bn = _pick_block(N, tn, aligns=(256, 128))
    bk = _pick_block(K, tk, aligns=(256, 128))
    grid = (M // bm, N // bn, K // bk)
    return pl.pallas_call(
        functools.partial(_linear_kernel, activation=activation),
        out_shape=jax.ShapeDtypeStruct((M, N), x.dtype),
        grid=grid,
        in_specs=[
            pl.BlockSpec((bm, bk), lambda i, j, k: (i, k)),
            pl.BlockSpec((bk, bn), lambda i, j, k: (k, j)),
            pl.BlockSpec((1, bn), lambda i, j, k: (0, j)),
        ],
        out_specs=pl.BlockSpec((bm, bn), lambda i, j, k: (i, j)),
        scratch_shapes=[pltpu.VMEM((bm, bn), jnp.float32)],
        compiler_params=pltpu.CompilerParams(
            dimension_semantics=("parallel", "parallel", "arbitrary"),
            vmem_limit_bytes=_vmem_limit_bytes(),
        ),
        cost_estimate=pl.CostEstimate(
            flops=2 * M * N * K,
            transcendentals=M * N if activation == "tanh" else 0,
            bytes_accessed=2 * (M * K + K * N + M * N) + 4 * N,
        ),
    )(x, w, b.reshape(1, N))


def _linear_add_ln_kernel(x_ref, w_ref, b_ref, r_ref, g_ref, bb_ref, o_ref, acc_ref,
                          *, eps):
    k = pl.program_id(1)

    @pl.when(k == 0)
    def _():
        acc_ref[...] = jnp.zeros_like(acc_ref)

    acc_ref[...] += jnp.dot(x_ref[...], w_ref[...], preferred_element_type=jnp.float32)

    @pl.when(k == pl.num_programs(1) - 1)
    def _():
        # epilogue: bias + residual add + LayerNorm over the full (resident) feature dim
        y = acc_ref[...] + b_ref[...] + r_ref[...].astype(jnp.float32)
        mean = jnp.mean(y, axis=-1, keepdims=True)
        var = jnp.mean(jnp.square(y - mean), axis=-1, keepdims=True)
        inv = lax.rsqrt(var + eps)
        o_ref[...] = ((y - mean) * inv * g_ref[...] + bb_ref[...]).astype(o_ref.dtype)


def linear_add_layernorm(x, w, b, residual, gamma, beta, *, tm=512, tk=512, eps=1e-5):
    """out = LayerNorm(residual + x @ w + b); requires the full feature dim per tile."""
    M, K = x.shape
    _, N = w.shape
    bm = _pick_block(M, tm, aligns=(256, 128, 8))
    bk = _pick_block(K, tk, aligns=(256, 128))
    grid = (M // bm, K // bk)
    return pl.pallas_call(
        functools.partial(_linear_add_ln_kernel, eps=eps),
        out_shape=jax.ShapeDtypeStruct((M, N), x.dtype),
        grid=grid,
        in_specs=[
            pl.BlockSpec((bm, bk), lambda i, k: (i, k)),
            pl.BlockSpec((bk, N), lambda i, k: (k, 0)),
            pl.BlockSpec((1, N), lambda i, k: (0, 0)),
            pl.BlockSpec((bm, N), lambda i, k: (i, 0)),
            pl.BlockSpec((1, N), lambda i, k: (0, 0)),
            pl.BlockSpec((1, N), lambda i, k: (0, 0)),
        ],
        out_specs=pl.BlockSpec((bm, N), lambda i, k: (i, 0)),
        scratch_shapes=[pltpu.VMEM((bm, N), jnp.float32)],
        compiler_params=pltpu.CompilerParams(
            dimension_semantics=("parallel", "arbitrary"),
            vmem_limit_bytes=_vmem_limit_bytes(),
        ),
        cost_estimate=pl.CostEstimate(
            flops=2 * M * N * K + 10 * M * N,
            transcendentals=0,
            bytes_accessed=2 * (M * K + K * N + 2 * M * N) + 12 * N,
        ),
    )(x, w, b.reshape(1, N), residual, gamma.reshape(1, N), beta.reshape(1, N))


def _flash_attention_kernel(q_ref, k_ref, v_ref, bias_ref, o_ref,
                            m_sc, l_sc, acc_sc, *, exp_bf16):
    ki = pl.program_id(3)
    hb, _, dh = acc_sc.shape

    @pl.when(ki == 0)
    def _():
        m_sc[...] = jnp.full_like(m_sc, -jnp.inf)
        l_sc[...] = jnp.zeros_like(l_sc)
        acc_sc[...] = jnp.zeros_like(acc_sc)

    bias = bias_ref[0]                        # (1, bk) additive mask, shared by heads

    # 1/sqrt(Dh) is already folded into the Q projection weights -> no per-tile scaling.
    for h in range(hb):                       # static unroll over packed heads
        q = q_ref[0, :, 0, h, :]              # (bq, Dh) bf16
        k = k_ref[0, :, 0, h, :]              # (bk, Dh) bf16
        v = v_ref[0, :, 0, h, :]              # (bk, Dh) bf16

        # contraction over Dh of both operands: no k transpose is materialized
        s = lax.dot_general(q, k, (((1,), (1,)), ((), ())),
                            preferred_element_type=jnp.float32)    # (bq, bk)
        s = s + bias

        m_prev = m_sc[h]                                            # (bq, 1)
        m_new = jnp.maximum(m_prev, s.max(-1, keepdims=True))
        alpha = jnp.exp(m_prev - m_new)
        if exp_bf16:
            p = jnp.exp((s - m_new).astype(jnp.bfloat16))           # bf16 EUP (v6e+)
            p_sum = jnp.sum(p.astype(jnp.float32), -1, keepdims=True)
        else:
            p32 = jnp.exp(s - m_new)                                # f32 EUP (v5e)
            p_sum = jnp.sum(p32, -1, keepdims=True)
            p = p32.astype(jnp.bfloat16)
        l_sc[h] = alpha * l_sc[h] + p_sum
        acc_sc[h] = alpha * acc_sc[h] + jnp.dot(p, v, preferred_element_type=jnp.float32)
        m_sc[h] = m_new

    @pl.when(ki == pl.num_programs(3) - 1)
    def _():
        # NOTE: a fully-masked query row normalizes uniform weights over masked V,
        # matching naive softmax with a -1e9 additive mask (same as the reference).
        inv = pl.reciprocal(l_sc[...], approx=True)                 # (hb, bq, 1)
        for h in range(hb):
            o_ref[0, :, pl.ds(h * dh, dh)] = (acc_sc[h] * inv[h]).astype(o_ref.dtype)


def multi_head_attention(qkv, mask_bias, *, tq=256, tk=256):
    """qkv: (B, S, 3, H, Dh) bf16 (scale folded into Q projection);
    mask_bias: (B, 1, S) additive f32.  Returns (B, S, H*Dh)."""
    B, S, _, H, Dh = qkv.shape
    D = H * Dh
    bq = _pick_block(S, tq, aligns=(256, 128, 8))
    bk = _pick_block(S, tk, aligns=(256, 128))
    hb = _pick_head_block(H, Dh, bq, bk)
    grid = (B, H // hb, S // bq, S // bk)

    kernel = functools.partial(_flash_attention_kernel, exp_bf16=_bf16_exp_ok())
    return pl.pallas_call(
        kernel,
        out_shape=jax.ShapeDtypeStruct((B, S, D), qkv.dtype),
        grid=grid,
        in_specs=[
            pl.BlockSpec((1, bq, 1, hb, Dh), lambda b, h, qi, ki: (b, qi, 0, h, 0)),
            pl.BlockSpec((1, bk, 1, hb, Dh), lambda b, h, qi, ki: (b, ki, 1, h, 0)),
            pl.BlockSpec((1, bk, 1, hb, Dh), lambda b, h, qi, ki: (b, ki, 2, h, 0)),
            pl.BlockSpec((1, 1, bk), lambda b, h, qi, ki: (b, 0, ki)),
        ],
        out_specs=pl.BlockSpec((1, bq, hb * Dh), lambda b, h, qi, ki: (b, qi, h)),
        scratch_shapes=[
            pltpu.VMEM((hb, bq, 1), jnp.float32),    # running max
            pltpu.VMEM((hb, bq, 1), jnp.float32),    # running denominator
            pltpu.VMEM((hb, bq, Dh), jnp.float32),   # output accumulator
        ],
        compiler_params=pltpu.CompilerParams(
            dimension_semantics=("parallel", "parallel", "parallel", "arbitrary"),
            vmem_limit_bytes=_vmem_limit_bytes(),
        ),
        cost_estimate=pl.CostEstimate(
            flops=4 * B * H * S * S * Dh,
            transcendentals=B * H * S * S,
            bytes_accessed=2 * (3 * B * S * D + B * S * D) + 4 * B * S,
        ),
    )(qkv, qkv, qkv, mask_bias)


# --------------------------------- Model setup ---------------------------------

def sinusoidal_pos_encoding(max_seq_length, d_model):
    position = jnp.arange(max_seq_length, dtype=jnp.float32)[:, None]
    div_term = jnp.exp(
        jnp.arange(0, d_model, 2, dtype=jnp.float32) * (-math.log(10000.0) / d_model)
    )
    pe = jnp.zeros((max_seq_length, d_model), dtype=jnp.float32)
    pe = pe.at[:, 0::2].set(jnp.sin(position * div_term))
    pe = pe.at[:, 1::2].set(jnp.cos(position * div_term))
    return pe[None]  # (1, max_seq, d_model)


def init_params(key, vocab_size, d_model, num_layers, num_heads, d_ff, max_seq_length,
                dtype=jnp.bfloat16):
    def nrm(k, shape, scale=0.02):
        return scale * jax.random.normal(k, shape, dtype=jnp.float32)

    dh = d_model // num_heads
    attn_scale = 1.0 / math.sqrt(dh)

    keys = jax.random.split(key, 4 + num_layers)
    params = {
        "token_embed": nrm(keys[0], (vocab_size, d_model)).astype(dtype),
        "segment_embed": nrm(keys[1], (2, d_model)).astype(dtype),
        "pos_encoding": sinusoidal_pos_encoding(max_seq_length, d_model),   # f32
        "pooler_w": nrm(keys[2], (d_model, d_model)).astype(dtype),
        "pooler_b": jnp.zeros((d_model,), jnp.float32),
        "layers": [],
    }
    for l in range(num_layers):
        lk = jax.random.split(keys[4 + l], 8)
        wq, wk, wv = (nrm(lk[i], (d_model, d_model)) for i in range(3))
        zeros_d = jnp.zeros((d_model,), jnp.float32)
        # Pre-fuse Q/K/V projections and fold the 1/sqrt(Dh) attention scale into Q.
        w_qkv = jnp.concatenate([wq * attn_scale, wk, wv], axis=1).astype(dtype)
        b_qkv = jnp.concatenate([zeros_d * attn_scale, zeros_d, zeros_d], axis=0)
        params["layers"].append({
            "w_qkv": w_qkv, "b_qkv": b_qkv,
            "wo": nrm(lk[3], (d_model, d_model)).astype(dtype),
            "bo": jnp.zeros((d_model,), jnp.float32),
            "ln1_g": jnp.ones((d_model,), jnp.float32),
            "ln1_b": jnp.zeros((d_model,), jnp.float32),
            "w1": nrm(lk[4], (d_model, d_ff)).astype(dtype),
            "b1": jnp.zeros((d_ff,), jnp.float32),
            "w2": nrm(lk[5], (d_ff, d_model)).astype(dtype),
            "b2": jnp.zeros((d_model,), jnp.float32),
            "ln2_g": jnp.ones((d_model,), jnp.float32),
            "ln2_b": jnp.zeros((d_model,), jnp.float32),
        })
    return params


def bert_forward(params, input_ids, segment_ids, attention_mask, num_heads):
    B, S = input_ids.shape
    D = params["token_embed"].shape[1]
    H = num_heads
    Dh = D // H

    # --- BERTEmbedding: token + segment embedding (dropout = identity at inference) ---
    # TODO(synk): BERTEmbedding internals not shown; assumed token+segment embedding + dropout.
    tok = jnp.take(params["token_embed"], input_ids.astype(jnp.int32), axis=0)
    seg = jnp.take(params["segment_embed"], segment_ids.astype(jnp.int32), axis=0)
    x = (tok.astype(jnp.float32) + seg.astype(jnp.float32)
         + params["pos_encoding"][:, :S, :]).astype(jnp.bfloat16)

    # additive attention-mask bias: 0 where mask==1, -1e9 where mask==0
    mask_bias = (attention_mask.astype(jnp.float32)[:, None, :] - 1.0) * 1e9   # (B, 1, S)

    x2 = x.reshape(B * S, D)
    for layer in params["layers"]:
        # fused (pre-concatenated, Q pre-scaled) QKV projection: one GEMM, x read once
        qkv = linear(x2, layer["w_qkv"], layer["b_qkv"])            # (B*S, 3D) bf16
        qkv = qkv.reshape(B, S, 3, H, Dh)                           # free view; no transposes
        ctx = multi_head_attention(qkv, mask_bias)                  # (B, S, D) lane-dense

        # output projection with residual-add + LayerNorm fused into the epilogue
        x2 = linear_add_layernorm(ctx.reshape(B * S, D), layer["wo"], layer["bo"],
                                  x2, layer["ln1_g"], layer["ln1_b"])

        # position-wise feed-forward (ReLU); second GEMM fused with add + LayerNorm
        h = linear(x2, layer["w1"], layer["b1"], activation="relu")
        x2 = linear_add_layernorm(h, layer["w2"], layer["b2"],
                                  x2, layer["ln2_g"], layer["ln2_b"])

    sequence_output = x2.reshape(B, S, D)
    cls = sequence_output[:, 0, :]                                   # (B, D)
    pooled_output = linear(cls, params["pooler_w"], params["pooler_b"], activation="tanh")
    return sequence_output, pooled_output


# ------------------------------------ main --------------------------------------

if __name__ == "__main__":
    vocab_size = 50
    d_model = 32
    num_layers = 2
    num_heads = 4
    d_ff = 64
    max_seq_length = 16

    batch, seq = 2, 8

    root = jax.random.PRNGKey(0)
    k_param, k_ids = jax.random.split(root)
    params = init_params(k_param, vocab_size, d_model, num_layers, num_heads,
                         d_ff, max_seq_length)

    input_ids = jax.random.randint(k_ids, (batch, seq), 0, vocab_size, dtype=jnp.int32)
    segment_ids = jnp.concatenate(
        [jnp.zeros((batch, seq // 2), jnp.int32), jnp.ones((batch, seq // 2), jnp.int32)],
        axis=1)
    attention_mask = jnp.ones((batch, seq), jnp.int32).at[:, -2:].set(0)  # last 2 tokens padded

    fwd = jax.jit(functools.partial(bert_forward, num_heads=num_heads))
    sequence_output, pooled_output = fwd(params, input_ids, segment_ids, attention_mask)
    jax.block_until_ready((sequence_output, pooled_output))

    assert sequence_output.shape == (batch, seq, d_model)
    assert pooled_output.shape == (batch, d_model)
    assert bool(jnp.all(jnp.isfinite(sequence_output.astype(jnp.float32))))
    assert bool(jnp.all(jnp.isfinite(pooled_output.astype(jnp.float32))))
    print("KERNEL_OK")
</pallas_src>

<mosaic_0001>
module attributes {stable_mosaic.version = 11 : i64} {
  func.func @_linear_kernel(%arg0: i32, %arg1: i32, %arg2: i32, %arg3: memref<16x32xbf16, #tpu.memory_space<vmem>>, %arg4: memref<32x96xbf16, #tpu.memory_space<vmem>>, %arg5: memref<1x96xf32, #tpu.memory_space<vmem>>, %arg6: memref<16x96xbf16, #tpu.memory_space<vmem>>, %arg7: memref<16x96xf32, #tpu.memory_space<vmem>>) attributes {dimension_semantics = [#tpu.dimension_semantics<parallel>, #tpu.dimension_semantics<parallel>, #tpu.dimension_semantics<arbitrary>], iteration_bounds = array<i64: 1, 1, 1>, scalar_prefetch = 0 : i64, scratch_operands = 1 : i64, tpu.core_type = #tpu.core_type<tc>, window_params = [{transform_indices = @transform_0, window_bounds = array<i64: 16, 32>}, {transform_indices = @transform_1, window_bounds = array<i64: 32, 96>}, {transform_indices = @transform_2, window_bounds = array<i64: 1, 96>}, {transform_indices = @transform_3, window_bounds = array<i64: 16, 96>}]} {
    %c0_i32 = arith.constant 0 : i32
    %0 = arith.cmpi eq, %arg2, %c0_i32 : i32
    %1 = arith.extui %0 : i1 to i32
    %c0_i32_0 = arith.constant 0 : i32
    %2 = arith.cmpi ne, %1, %c0_i32_0 : i32
    scf.if %2 {
      %cst_10 = arith.constant 0.000000e+00 : f32
      %12 = vector.broadcast %cst_10 : f32 to vector<16x96xf32>
      %c0_11 = arith.constant 0 : index
      %c0_12 = arith.constant 0 : index
      %13 = vector.load %arg7[%c0_11, %c0_12] : memref<16x96xf32, #tpu.memory_space<vmem>>, vector<16x96xf32>
      tpu.vector_store %arg7[%c0_11, %c0_12], %12 {strides = array<i32>} : memref<16x96xf32, #tpu.memory_space<vmem>>, vector<16x96xf32>,
    } else {
    }
    %c0 = arith.constant 0 : index
    %c0_1 = arith.constant 0 : index
    %3 = vector.load %arg7[%c0, %c0_1] : memref<16x96xf32, #tpu.memory_space<vmem>>, vector<16x96xf32>
    %c0_2 = arith.constant 0 : index
    %c0_3 = arith.constant 0 : index
    %4 = vector.load %arg3[%c0_2, %c0_3] : memref<16x32xbf16, #tpu.memory_space<vmem>>, vector<16x32xbf16>
    %c0_4 = arith.constant 0 : index
    %c0_5 = arith.constant 0 : index
    %5 = vector.load %arg4[%c0_4, %c0_5] : memref<32x96xbf16, #tpu.memory_space<vmem>>, vector<32x96xbf16>
    %cst = arith.constant dense<0.000000e+00> : vector<16x96xf32>
    %6 = tpu.matmul %4, %5, %cst {dimension_numbers = #tpu.dot_dimension_numbers<[1], [0], [0], [1], [0, 0, 1, 1], [], []>} : vector<16x32xbf16>, vector<32x96xbf16>, vector<16x96xf32> -> vector<16x96xf32>
    %7 = arith.addf %3, %6 : vector<16x96xf32>
    %c0_6 = arith.constant 0 : index
    %c0_7 = arith.constant 0 : index
    %8 = vector.load %arg7[%c0_6, %c0_7] : memref<16x96xf32, #tpu.memory_space<vmem>>, vector<16x96xf32>
    tpu.vector_store %arg7[%c0_6, %c0_7], %7 {strides = array<i32>} : memref<16x96xf32, #tpu.memory_space<vmem>>, vector<16x96xf32>,
    %c0_i32_8 = arith.constant 0 : i32
    %9 = arith.cmpi eq, %arg2, %c0_i32_8 : i32
    %10 = arith.extui %9 : i1 to i32
    %c0_i32_9 = arith.constant 0 : i32
    %11 = arith.cmpi ne, %10, %c0_i32_9 : i32
    scf.if %11 {
      %c0_10 = arith.constant 0 : index
      %c0_11 = arith.constant 0 : index
      %12 = vector.load %arg7[%c0_10, %c0_11] : memref<16x96xf32, #tpu.memory_space<vmem>>, vector<16x96xf32>
      %c0_12 = arith.constant 0 : index
      %c0_13 = arith.constant 0 : index
      %13 = vector.load %arg5[%c0_12, %c0_13] : memref<1x96xf32, #tpu.memory_space<vmem>>, vector<1x96xf32>
      %14 = vector.broadcast %13 : vector<1x96xf32> to vector<16x96xf32>
      %15 = arith.addf %12, %14 : vector<16x96xf32>
      %16 = arith.truncf %15 : vector<16x96xf32> to vector<16x96xbf16>
      %c0_14 = arith.constant 0 : index
      %c0_15 = arith.constant 0 : index
      %17 = vector.load %arg6[%c0_14, %c0_15] : memref<16x96xbf16, #tpu.memory_space<vmem>>, vector<16x96xbf16>
      tpu.vector_store %arg6[%c0_14, %c0_15], %16 {strides = array<i32>} : memref<16x96xbf16, #tpu.memory_space<vmem>>, vector<16x96xbf16>,
    } else {
    }
    return
  }
  func.func @transform_0(%arg0: i32, %arg1: i32, %arg2: i32) -> (i32, i32) {
    %c0_i32 = arith.constant 0 : i32
    return %arg0, %arg2 : i32, i32
  }
  func.func @transform_1(%arg0: i32, %arg1: i32, %arg2: i32) -> (i32, i32) {
    %c0_i32 = arith.constant 0 : i32
    return %arg2, %arg1 : i32, i32
  }
  func.func @transform_2(%arg0: i32, %arg1: i32, %arg2: i32) -> (i32, i32) {
    %c0_i32 = arith.constant 0 : i32
    %c0_i32_0 = arith.constant 0 : i32
    return %c0_i32, %arg1 : i32, i32
  }
  func.func @transform_3(%arg0: i32, %arg1: i32, %arg2: i32) -> (i32, i32) {
    %c0_i32 = arith.constant 0 : i32
    return %arg0, %arg1 : i32, i32
  }
}

module attributes {stable_mosaic.version = 11 : i64} {
  func.func @_linear_add_ln_kernel(%arg0: i32, %arg1: i32, %arg2: memref<16x32xbf16, #tpu.memory_space<vmem>>, %arg3: memref<32x32xbf16, #tpu.memory_space<vmem>>, %arg4: memref<1x32xf32, #tpu.memory_space<vmem>>, %arg5: memref<16x32xbf16, #tpu.memory_space<vmem>>, %arg6: memref<1x32xf32, #tpu.memory_space<vmem>>, %arg7: memref<1x32xf32, #tpu.memory_space<vmem>>, %arg8: memref<16x32xbf16, #tpu.memory_space<vmem>>, %arg9: memref<16x32xf32, #tpu.memory_space<vmem>>) attributes {dimension_semantics = [#tpu.dimension_semantics<parallel>, #tpu.dimension_semantics<arbitrary>], iteration_bounds = array<i64: 1, 1>, scalar_prefetch = 0 : i64, scratch_operands = 1 : i64, tpu.core_type = #tpu.core_type<tc>, window_params = [{transform_indices = @transform_0, window_bounds = array<i64: 16, 32>}, {transform_indices = @transform_1, window_bounds = array<i64: 32, 32>}, {pipeline_mode = #tpu.pipeline_mode<synchronous>, transform_indices = @transform_2, window_bounds = array<i64: 1, 32>}, {transform_indices = @transform_3, window_bounds = array<i64: 16, 32>}, {pipeline_mode = #tpu.pipeline_mode<synchronous>, transform_indices = @transform_4, window_bounds = array<i64: 1, 32>}, {pipeline_mode = #tpu.pipeline_mode<synchronous>, transform_indices = @transform_5, window_bounds = array<i64: 1, 32>}, {transform_indices = @transform_6, window_bounds = array<i64: 16, 32>}]} {
    %c0_i32 = arith.constant 0 : i32
    %0 = arith.cmpi eq, %arg1, %c0_i32 : i32
    %1 = arith.extui %0 : i1 to i32
    %c0_i32_0 = arith.constant 0 : i32
    %2 = arith.cmpi ne, %1, %c0_i32_0 : i32
    scf.if %2 {
      %cst_10 = arith.constant 0.000000e+00 : f32
      %12 = vector.broadcast %cst_10 : f32 to vector<16x32xf32>
      %c0_11 = arith.constant 0 : index
      %c0_12 = arith.constant 0 : index
      %13 = vector.load %arg9[%c0_11, %c0_12] : memref<16x32xf32, #tpu.memory_space<vmem>>, vector<16x32xf32>
      tpu.vector_store %arg9[%c0_11, %c0_12], %12 {strides = array<i32>} : memref<16x32xf32, #tpu.memory_space<vmem>>, vector<16x32xf32>,
    } else {
    }
    %c0 = arith.constant 0 : index
    %c0_1 = arith.constant 0 : index
    %3 = vector.load %arg9[%c0, %c0_1] : memref<16x32xf32, #tpu.memory_space<vmem>>, vector<16x32xf32>
    %c0_2 = arith.constant 0 : index
    %c0_3 = arith.constant 0 : index
    %4 = vector.load %arg2[%c0_2, %c0_3] : memref<16x32xbf16, #tpu.memory_space<vmem>>, vector<16x32xbf16>
    %c0_4 = arith.constant 0 : index
    %c0_5 = arith.constant 0 : index
    %5 = vector.load %arg3[%c0_4, %c0_5] : memref<32x32xbf16, #tpu.memory_space<vmem>>, vector<32x32xbf16>
    %cst = arith.constant dense<0.000000e+00> : vector<16x32xf32>
    %6 = tpu.matmul %4, %5, %cst {dimension_numbers = #tpu.dot_dimension_numbers<[1], [0], [0], [1], [0, 0, 1, 1], [], []>} : vector<16x32xbf16>, vector<32x32xbf16>, vector<16x32xf32> -> vector<16x32xf32>
    %7 = arith.addf %3, %6 : vector<16x32xf32>
    %c0_6 = arith.constant 0 : index
    %c0_7 = arith.constant 0 : index
    %8 = vector.load %arg9[%c0_6, %c0_7] : memref<16x32xf32, #tpu.memory_space<vmem>>, vector<16x32xf32>
    tpu.vector_store %arg9[%c0_6, %c0_7], %7 {strides = array<i32>} : memref<16x32xf32, #tpu.memory_space<vmem>>, vector<16x32xf32>,
    %c0_i32_8 = arith.constant 0 : i32
    %9 = arith.cmpi eq, %arg1, %c0_i32_8 : i32
    %10 = arith.extui %9 : i1 to i32
    %c0_i32_9 = arith.constant 0 : i32
    %11 = arith.cmpi ne, %10, %c0_i32_9 : i32
    scf.if %11 {
      %c0_10 = arith.constant 0 : index
      %c0_11 = arith.constant 0 : index
      %12 = vector.load %arg9[%c0_10, %c0_11] : memref<16x32xf32, #tpu.memory_space<vmem>>, vector<16x32xf32>
      %c0_12 = arith.constant 0 : index
      %c0_13 = arith.constant 0 : index
      %13 = vector.load %arg4[%c0_12, %c0_13] : memref<1x32xf32, #tpu.memory_space<vmem>>, vector<1x32xf32>
      %14 = vector.broadcast %13 : vector<1x32xf32> to vector<16x32xf32>
      %15 = arith.addf %12, %14 : vector<16x32xf32>
      %c0_14 = arith.constant 0 : index
      %c0_15 = arith.constant 0 : index
      %16 = vector.load %arg5[%c0_14, %c0_15] : memref<16x32xbf16, #tpu.memory_space<vmem>>, vector<16x32xbf16>
      %17 = arith.extf %16 : vector<16x32xbf16> to vector<16x32xf32>
      %18 = arith.addf %15, %17 : vector<16x32xf32>
      %cst_16 = arith.constant dense<0.000000e+00> : vector<16xf32>
      %19 = vector.multi_reduction <add>, %18, %cst_16 [1] : vector<16x32xf32> to vector<16xf32>
      %20 = vector.shape_cast %19 : vector<16xf32> to vector<16x1xf32>
      %cst_17 = arith.constant 3.200000e+01 : f32
      %21 = vector.broadcast %cst_17 : f32 to vector<16x1xf32>
      %22 = arith.divf %20, %21 : vector<16x1xf32>
      %23 = vector.broadcast %22 : vector<16x1xf32> to vector<16x32xf32>
      %24 = arith.subf %18, %23 : vector<16x32xf32>
      %25 = arith.mulf %24, %24 : vector<16x32xf32>
      %cst_18 = arith.constant dense<0.000000e+00> : vector<16xf32>
      %26 = vector.multi_reduction <add>, %25, %cst_18 [1] : vector<16x32xf32> to vector<16xf32>
      %27 = vector.shape_cast %26 : vector<16xf32> to vector<16x1xf32>
      %cst_19 = arith.constant 3.200000e+01 : f32
      %28 = vector.broadcast %cst_19 : f32 to vector<16x1xf32>
      %29 = arith.divf %27, %28 : vector<16x1xf32>
      %cst_20 = arith.constant 9.99999974E-6 : f32
      %30 = vector.broadcast %cst_20 : f32 to vector<16x1xf32>
      %31 = arith.addf %29, %30 : vector<16x1xf32>
      %32 = math.rsqrt %31 : vector<16x1xf32>
      %33 = vector.broadcast %22 : vector<16x1xf32> to vector<16x32xf32>
      %34 = arith.subf %18, %33 : vector<16x32xf32>
      %35 = vector.broadcast %32 : vector<16x1xf32> to vector<16x32xf32>
      %36 = arith.mulf %34, %35 : vector<16x32xf32>
      %c0_21 = arith.constant 0 : index
      %c0_22 = arith.constant 0 : index
      %37 = vector.load %arg6[%c0_21, %c0_22] : memref<1x32xf32, #tpu.memory_space<vmem>>, vector<1x32xf32>
      %38 = vector.broadcast %37 : vector<1x32xf32> to vector<16x32xf32>
      %39 = arith.mulf %36, %38 : vector<16x32xf32>
      %c0_23 = arith.constant 0 : index
      %c0_24 = arith.constant 0 : index
      %40 = vector.load %arg7[%c0_23, %c0_24] : memref<1x32xf32, #tpu.memory_space<vmem>>, vector<1x32xf32>
      %41 = vector.broadcast %40 : vector<1x32xf32> to vector<16x32xf32>
      %42 = arith.addf %39, %41 : vector<16x32xf32>
      %43 = arith.truncf %42 : vector<16x32xf32> to vector<16x32xbf16>
      %c0_25 = arith.constant 0 : index
      %c0_26 = arith.constant 0 : index
      %44 = vector.load %arg8[%c0_25, %c0_26] : memref<16x32xbf16, #tpu.memory_space<vmem>>, vector<16x32xbf16>
      tpu.vector_store %arg8[%c0_25, %c0_26], %43 {strides = array<i32>} : memref<16x32xbf16, #tpu.memory_space<vmem>>, vector<16x32xbf16>,
    } else {
    }
    return
  }
  func.func @transform_0(%arg0: i32, %arg1: i32) -> (i32, i32) {
    %c0_i32 = arith.constant 0 : i32
    return %arg0, %arg1 : i32, i32
  }
  func.func @transform_1(%arg0: i32, %arg1: i32) -> (i32, i32) {
    %c0_i32 = arith.constant 0 : i32
    %c0_i32_0 = arith.constant 0 : i32
    return %arg1, %c0_i32 : i32, i32
  }
  func.func @transform_2(%arg0: i32, %arg1: i32) -> (i32, i32) {
    %c0_i32 = arith.constant 0 : i32
    %c0_i32_0 = arith.constant 0 : i32
    %c0_i32_1 = arith.constant 0 : i32
    return %c0_i32, %c0_i32_0 : i32, i32
  }
  func.func @transform_3(%arg0: i32, %arg1: i32) -> (i32, i32) {
    %c0_i32 = arith.constant 0 : i32
    %c0_i32_0 = arith.constant 0 : i32
    return %arg0, %c0_i32 : i32, i32
  }
  func.func @transform_4(%arg0: i32, %arg1: i32) -> (i32, i32) {
    %c0_i32 = arith.constant 0 : i32
    %c0_i32_0 = arith.constant 0 : i32
    %c0_i32_1 = arith.constant 0 : i32
    return %c0_i32, %c0_i32_0 : i32, i32
  }
  func.func @transform_5(%arg0: i32, %arg1: i32) -> (i32, i32) {
    %c0_i32 = arith.constant 0 : i32
    %c0_i32_0 = arith.constant 0 : i32
    %c0_i32_1 = arith.constant 0 : i32
    return %c0_i32, %c0_i32_0 : i32, i32
  }
  func.func @transform_6(%arg0: i32, %arg1: i32) -> (i32, i32) {
    %c0_i32 = arith.constant 0 : i32
    %c0_i32_0 = arith.constant 0 : i32
    return %arg0, %c0_i32 : i32, i32
  }
}

module attributes {stable_mosaic.version = 11 : i64} {
  func.func @_flash_attention_kernel(%arg0: i32, %arg1: i32, %arg2: i32, %arg3: i32, %arg4: memref<1x8x1x4x8xbf16, #tpu.memory_space<vmem>>, %arg5: memref<1x8x1x4x8xbf16, #tpu.memory_space<vmem>>, %arg6: memref<1x8x1x4x8xbf16, #tpu.memory_space<vmem>>, %arg7: memref<1x1x8xf32, #tpu.memory_space<vmem>>, %arg8: memref<1x8x32xbf16, #tpu.memory_space<vmem>>, %arg9: memref<4x8x1xf32, #tpu.memory_space<vmem>>, %arg10: memref<4x8x1xf32, #tpu.memory_space<vmem>>, %arg11: memref<4x8x8xf32, #tpu.memory_space<vmem>>) attributes {dimension_semantics = [#tpu.dimension_semantics<parallel>, #tpu.dimension_semantics<parallel>, #tpu.dimension_semantics<parallel>, #tpu.dimension_semantics<arbitrary>], iteration_bounds = array<i64: 2, 1, 1, 1>, scalar_prefetch = 0 : i64, scratch_operands = 3 : i64, tpu.core_type = #tpu.core_type<tc>, window_params = [{transform_indices = @transform_0, window_bounds = array<i64: 1, 8, 1, 4, 8>}, {transform_indices = @transform_1, window_bounds = array<i64: 1, 8, 1, 4, 8>}, {transform_indices = @transform_2, window_bounds = array<i64: 1, 8, 1, 4, 8>}, {transform_indices = @transform_3, window_bounds = array<i64: 1, 1, 8>}, {transform_indices = @transform_4, window_bounds = array<i64: 1, 8, 32>}]} {
    %c0_i32 = arith.constant 0 : i32
    %0 = arith.cmpi eq, %arg3, %c0_i32 : i32
    %1 = arith.extui %0 : i1 to i32
    %c0_i32_0 = arith.constant 0 : i32
    %2 = arith.cmpi ne, %1, %c0_i32_0 : i32
    scf.if %2 {
      %cst_149 = arith.constant 0xFF800000 : f32
      %176 = vector.broadcast %cst_149 : f32 to vector<4x8x1xf32>
      %c0_150 = arith.constant 0 : index
      %c0_151 = arith.constant 0 : index
      %c0_152 = arith.constant 0 : index
      %177 = vector.load %arg9[%c0_150, %c0_151, %c0_152] : memref<4x8x1xf32, #tpu.memory_space<vmem>>, vector<4x8x1xf32>
      tpu.vector_store %arg9[%c0_150, %c0_151, %c0_152], %176 {strides = array<i32>} : memref<4x8x1xf32, #tpu.memory_space<vmem>>, vector<4x8x1xf32>,
      %cst_153 = arith.constant 0.000000e+00 : f32
      %178 = vector.broadcast %cst_153 : f32 to vector<4x8x1xf32>
      %c0_154 = arith.constant 0 : index
      %c0_155 = arith.constant 0 : index
      %c0_156 = arith.constant 0 : index
      %179 = vector.load %arg10[%c0_154, %c0_155, %c0_156] : memref<4x8x1xf32, #tpu.memory_space<vmem>>, vector<4x8x1xf32>
      tpu.vector_store %arg10[%c0_154, %c0_155, %c0_156], %178 {strides = array<i32>} : memref<4x8x1xf32, #tpu.memory_space<vmem>>, vector<4x8x1xf32>,
      %cst_157 = arith.constant 0.000000e+00 : f32
      %180 = vector.broadcast %cst_157 : f32 to vector<4x8x8xf32>
      %c0_158 = arith.constant 0 : index
      %c0_159 = arith.constant 0 : index
      %c0_160 = arith.constant 0 : index
      %181 = vector.load %arg11[%c0_158, %c0_159, %c0_160] : memref<4x8x8xf32, #tpu.memory_space<vmem>>, vector<4x8x8xf32>
      tpu.vector_store %arg11[%c0_158, %c0_159, %c0_160], %180 {strides = array<i32>} : memref<4x8x8xf32, #tpu.memory_space<vmem>>, vector<4x8x8xf32>,
    } else {
    }
    %c0 = arith.constant 0 : index
    %c0_1 = arith.constant 0 : index
    %c0_2 = arith.constant 0 : index
    %3 = vector.load %arg7[%c0, %c0_1, %c0_2] : memref<1x1x8xf32, #tpu.memory_space<vmem>>, vector<1x1x8xf32>
    %4 = vector.shape_cast %3 : vector<1x1x8xf32> to vector<1x8xf32>
    %c0_3 = arith.constant 0 : index
    %c0_4 = arith.constant 0 : index
    %c0_5 = arith.constant 0 : index
    %c0_6 = arith.constant 0 : index
    %c0_7 = arith.constant 0 : index
    %5 = vector.load %arg4[%c0_3, %c0_4, %c0_5, %c0_6, %c0_7] : memref<1x8x1x4x8xbf16, #tpu.memory_space<vmem>>, vector<1x8x1x1x8xbf16>
    %6 = vector.shape_cast %5 : vector<1x8x1x1x8xbf16> to vector<8x8xbf16>
    %c0_8 = arith.constant 0 : index
    %c0_9 = arith.constant 0 : index
    %c0_10 = arith.constant 0 : index
    %c0_11 = arith.constant 0 : index
    %c0_12 = arith.constant 0 : index
    %7 = vector.load %arg5[%c0_8, %c0_9, %c0_10, %c0_11, %c0_12] : memref<1x8x1x4x8xbf16, #tpu.memory_space<vmem>>, vector<1x8x1x1x8xbf16>
    %8 = vector.shape_cast %7 : vector<1x8x1x1x8xbf16> to vector<8x8xbf16>
    %c0_13 = arith.constant 0 : index
    %c0_14 = arith.constant 0 : index
    %c0_15 = arith.constant 0 : index
    %c0_16 = arith.constant 0 : index
    %c0_17 = arith.constant 0 : index
    %9 = vector.load %arg6[%c0_13, %c0_14, %c0_15, %c0_16, %c0_17] : memref<1x8x1x4x8xbf16, #tpu.memory_space<vmem>>, vector<1x8x1x1x8xbf16>
    %10 = vector.shape_cast %9 : vector<1x8x1x1x8xbf16> to vector<8x8xbf16>
    %cst = arith.constant dense<0.000000e+00> : vector<8x8xf32>
    %11 = tpu.matmul %6, %8, %cst {dimension_numbers = #tpu.dot_dimension_numbers<[1], [1], [0], [0], [0, 0, 1, 0], [], []>} : vector<8x8xbf16>, vector<8x8xbf16>, vector<8x8xf32> -> vector<8x8xf32>
    %12 = vector.broadcast %4 : vector<1x8xf32> to vector<8x8xf32>
    %13 = arith.addf %11, %12 : vector<8x8xf32>
    %c0_18 = arith.constant 0 : index
    %c0_19 = arith.constant 0 : index
    %c0_20 = arith.constant 0 : index
    %14 = vector.load %arg9[%c0_18, %c0_19, %c0_20] : memref<4x8x1xf32, #tpu.memory_space<vmem>>, vector<1x8x1xf32>
    %15 = vector.shape_cast %14 : vector<1x8x1xf32> to vector<8x1xf32>
    %cst_21 = arith.constant dense<0xFF800000> : vector<8xf32>
    %16 = vector.multi_reduction <maximumf>, %13, %cst_21 [1] : vector<8x8xf32> to vector<8xf32>
    %17 = vector.shape_cast %16 : vector<8xf32> to vector<8x1xf32>
    %18 = arith.maximumf %15, %17 : vector<8x1xf32>
    %19 = arith.subf %15, %18 : vector<8x1xf32>
    %20 = math.exp %19 : vector<8x1xf32>
    %21 = vector.broadcast %18 : vector<8x1xf32> to vector<8x8xf32>
    %22 = arith.subf %13, %21 : vector<8x8xf32>
    %23 = arith.truncf %22 : vector<8x8xf32> to vector<8x8xbf16>
    %24 = math.exp %23 : vector<8x8xbf16>
    %25 = arith.extf %24 : vector<8x8xbf16> to vector<8x8xf32>
    %cst_22 = arith.constant dense<0.000000e+00> : vector<8xf32>
    %26 = vector.multi_reduction <add>, %25, %cst_22 [1] : vector<8x8xf32> to vector<8xf32>
    %27 = vector.shape_cast %26 : vector<8xf32> to vector<8x1xf32>
    %c0_23 = arith.constant 0 : index
    %c0_24 = arith.constant 0 : index
    %c0_25 = arith.constant 0 : index
    %28 = vector.load %arg10[%c0_23, %c0_24, %c0_25] : memref<4x8x1xf32, #tpu.memory_space<vmem>>, vector<1x8x1xf32>
    %29 = vector.shape_cast %28 : vector<1x8x1xf32> to vector<8x1xf32>
    %30 = arith.mulf %20, %29 : vector<8x1xf32>
    %31 = arith.addf %30, %27 : vector<8x1xf32>
    %c0_26 = arith.constant 0 : index
    %c0_27 = arith.constant 0 : index
    %c0_28 = arith.constant 0 : index
    %32 = vector.load %arg10[%c0_26, %c0_27, %c0_28] : memref<4x8x1xf32, #tpu.memory_space<vmem>>, vector<1x8x1xf32>
    %33 = vector.shape_cast %32 : vector<1x8x1xf32> to vector<8x1xf32>
    %34 = vector.shape_cast %31 : vector<8x1xf32> to vector<1x8x1xf32>
    tpu.vector_store %arg10[%c0_26, %c0_27, %c0_28], %34 {strides = array<i32>} : memref<4x8x1xf32, #tpu.memory_space<vmem>>, vector<1x8x1xf32>,
    %c0_29 = arith.constant 0 : index
    %c0_30 = arith.constant 0 : index
    %c0_31 = arith.constant 0 : index
    %35 = vector.load %arg11[%c0_29, %c0_30, %c0_31] : memref<4x8x8xf32, #tpu.memory_space<vmem>>, vector<1x8x8xf32>
    %36 = vector.shape_cast %35 : vector<1x8x8xf32> to vector<8x8xf32>
    %37 = vector.broadcast %20 : vector<8x1xf32> to vector<8x8xf32>
    %38 = arith.mulf %37, %36 : vector<8x8xf32>
    %cst_32 = arith.constant dense<0.000000e+00> : vector<8x8xf32>
    %39 = tpu.matmul %24, %10, %cst_32 {dimension_numbers = #tpu.dot_dimension_numbers<[1], [0], [0], [1], [0, 0, 1, 1], [], []>} : vector<8x8xbf16>, vector<8x8xbf16>, vector<8x8xf32> -> vector<8x8xf32>
    %40 = arith.addf %38, %39 : vector<8x8xf32>
    %c0_33 = arith.constant 0 : index
    %c0_34 = arith.constant 0 : index
    %c0_35 = arith.constant 0 : index
    %41 = vector.load %arg11[%c0_33, %c0_34, %c0_35] : memref<4x8x8xf32, #tpu.memory_space<vmem>>, vector<1x8x8xf32>
    %42 = vector.shape_cast %41 : vector<1x8x8xf32> to vector<8x8xf32>
    %43 = vector.shape_cast %40 : vector<8x8xf32> to vector<1x8x8xf32>
    tpu.vector_store %arg11[%c0_33, %c0_34, %c0_35], %43 {strides = array<i32>} : memref<4x8x8xf32, #tpu.memory_space<vmem>>, vector<1x8x8xf32>,
    %c0_36 = arith.constant 0 : index
    %c0_37 = arith.constant 0 : index
    %c0_38 = arith.constant 0 : index
    %44 = vector.load %arg9[%c0_36, %c0_37, %c0_38] : memref<4x8x1xf32, #tpu.memory_space<vmem>>, vector<1x8x1xf32>
    %45 = vector.shape_cast %44 : vector<1x8x1xf32> to vector<8x1xf32>
    %46 = vector.shape_cast %18 : vector<8x1xf32> to vector<1x8x1xf32>
    tpu.vector_store %arg9[%c0_36, %c0_37, %c0_38], %46 {strides = array<i32>} : memref<4x8x1xf32, #tpu.memory_space<vmem>>, vector<1x8x1xf32>,
    %c0_39 = arith.constant 0 : index
    %c0_40 = arith.constant 0 : index
    %c0_41 = arith.constant 0 : index
    %c1 = arith.constant 1 : index
    %c0_42 = arith.constant 0 : index
    %47 = vector.load %arg4[%c0_39, %c0_40, %c0_41, %c1, %c0_42] : memref<1x8x1x4x8xbf16, #tpu.memory_space<vmem>>, vector<1x8x1x1x8xbf16>
    %48 = vector.shape_cast %47 : vector<1x8x1x1x8xbf16> to vector<8x8xbf16>
    %c0_43 = arith.constant 0 : index
    %c0_44 = arith.constant 0 : index
    %c0_45 = arith.constant 0 : index
    %c1_46 = arith.constant 1 : index
    %c0_47 = arith.constant 0 : index
    %49 = vector.load %arg5[%c0_43, %c0_44, %c0_45, %c1_46, %c0_47] : memref<1x8x1x4x8xbf16, #tpu.memory_space<vmem>>, vector<1x8x1x1x8xbf16>
    %50 = vector.shape_cast %49 : vector<1x8x1x1x8xbf16> to vector<8x8xbf16>
    %c0_48 = arith.constant 0 : index
    %c0_49 = arith.constant 0 : index
    %c0_50 = arith.constant 0 : index
    %c1_51 = arith.constant 1 : index
    %c0_52 = arith.constant 0 : index
    %51 = vector.load %arg6[%c0_48, %c0_49, %c0_50, %c1_51, %c0_52] : memref<1x8x1x4x8xbf16, #tpu.memory_space<vmem>>, vector<1x8x1x1x8xbf16>
    %52 = vector.shape_cast %51 : vector<1x8x1x1x8xbf16> to vector<8x8xbf16>
    %cst_53 = arith.constant dense<0.000000e+00> : vector<8x8xf32>
    %53 = tpu.matmul %48, %50, %cst_53 {dimension_numbers = #tpu.dot_dimension_numbers<[1], [1], [0], [0], [0, 0, 1, 0], [], []>} : vector<8x8xbf16>, vector<8x8xbf16>, vector<8x8xf32> -> vector<8x8xf32>
    %54 = vector.broadcast %4 : vector<1x8xf32> to vector<8x8xf32>
    %55 = arith.addf %53, %54 : vector<8x8xf32>
    %c1_54 = arith.constant 1 : index
    %c0_55 = arith.constant 0 : index
    %c0_56 = arith.constant 0 : index
    %56 = vector.load %arg9[%c1_54, %c0_55, %c0_56] : memref<4x8x1xf32, #tpu.memory_space<vmem>>, vector<1x8x1xf32>
    %57 = vector.shape_cast %56 : vector<1x8x1xf32> to vector<8x1xf32>
    %cst_57 = arith.constant dense<0xFF800000> : vector<8xf32>
    %58 = vector.multi_reduction <maximumf>, %55, %cst_57 [1] : vector<8x8xf32> to vector<8xf32>
    %59 = vector.shape_cast %58 : vector<8xf32> to vector<8x1xf32>
    %60 = arith.maximumf %57, %59 : vector<8x1xf32>
    %61 = arith.subf %57, %60 : vector<8x1xf32>
    %62 = math.exp %61 : vector<8x1xf32>
    %63 = vector.broadcast %60 : vector<8x1xf32> to vector<8x8xf32>
    %64 = arith.subf %55, %63 : vector<8x8xf32>
    %65 = arith.truncf %64 : vector<8x8xf32> to vector<8x8xbf16>
    %66 = math.exp %65 : vector<8x8xbf16>
    %67 = arith.extf %66 : vector<8x8xbf16> to vector<8x8xf32>
    %cst_58 = arith.constant dense<0.000000e+00> : vector<8xf32>
    %68 = vector.multi_reduction <add>, %67, %cst_58 [1] : vector<8x8xf32> to vector<8xf32>
    %69 = vector.shape_cast %68 : vector<8xf32> to vector<8x1xf32>
    %c1_59 = arith.constant 1 : index
    %c0_60 = arith.constant 0 : index
    %c0_61 = arith.constant 0 : index
    %70 = vector.load %arg10[%c1_59, %c0_60, %c0_61] : memref<4x8x1xf32, #tpu.memory_space<vmem>>, vector<1x8x1xf32>
    %71 = vector.shape_cast %70 : vector<1x8x1xf32> to vector<8x1xf32>
    %72 = arith.mulf %62, %71 : vector<8x1xf32>
    %73 = arith.addf %72, %69 : vector<8x1xf32>
    %c1_62 = arith.constant 1 : index
    %c0_63 = arith.constant 0 : index
    %c0_64 = arith.constant 0 : index
    %74 = vector.load %arg10[%c1_62, %c0_63, %c0_64] : memref<4x8x1xf32, #tpu.memory_space<vmem>>, vector<1x8x1xf32>
    %75 = vector.shape_cast %74 : vector<1x8x1xf32> to vector<8x1xf32>
    %76 = vector.shape_cast %73 : vector<8x1xf32> to vector<1x8x1xf32>
    tpu.vector_store %arg10[%c1_62, %c0_63, %c0_64], %76 {strides = array<i32>} : memref<4x8x1xf32, #tpu.memory_space<vmem>>, vector<1x8x1xf32>,
    %c1_65 = arith.constant 1 : index
    %c0_66 = arith.constant 0 : index
    %c0_67 = arith.constant 0 : index
    %77 = vector.load %arg11[%c1_65, %c0_66, %c0_67] : memref<4x8x8xf32, #tpu.memory_space<vmem>>, vector<1x8x8xf32>
    %78 = vector.shape_cast %77 : vector<1x8x8xf32> to vector<8x8xf32>
    %79 = vector.broadcast %62 : vector<8x1xf32> to vector<8x8xf32>
    %80 = arith.mulf %79, %78 : vector<8x8xf32>
    %cst_68 = arith.constant dense<0.000000e+00> : vector<8x8xf32>
    %81 = tpu.matmul %66, %52, %cst_68 {dimension_numbers = #tpu.dot_dimension_numbers<[1], [0], [0], [1], [0, 0, 1, 1], [], []>} : vector<8x8xbf16>, vector<8x8xbf16>, vector<8x8xf32> -> vector<8x8xf32>
    %82 = arith.addf %80, %81 : vector<8x8xf32>
    %c1_69 = arith.constant 1 : index
    %c0_70 = arith.constant 0 : index
    %c0_71 = arith.constant 0 : index
    %83 = vector.load %arg11[%c1_69, %c0_70, %c0_71] : memref<4x8x8xf32, #tpu.memory_space<vmem>>, vector<1x8x8xf32>
    %84 = vector.shape_cast %83 : vector<1x8x8xf32> to vector<8x8xf32>
    %85 = vector.shape_cast %82 : vector<8x8xf32> to vector<1x8x8xf32>
    tpu.vector_store %arg11[%c1_69, %c0_70, %c0_71], %85 {strides = array<i32>} : memref<4x8x8xf32, #tpu.memory_space<vmem>>, vector<1x8x8xf32>,
    %c1_72 = arith.constant 1 : index
    %c0_73 = arith.constant 0 : index
    %c0_74 = arith.constant 0 : index
    %86 = vector.load %arg9[%c1_72, %c0_73, %c0_74] : memref<4x8x1xf32, #tpu.memory_space<vmem>>, vector<1x8x1xf32>
    %87 = vector.shape_cast %86 : vector<1x8x1xf32> to vector<8x1xf32>
    %88 = vector.shape_cast %60 : vector<8x1xf32> to vector<1x8x1xf32>
    tpu.vector_store %arg9[%c1_72, %c0_73, %c0_74], %88 {strides = array<i32>} : memref<4x8x1xf32, #tpu.memory_space<vmem>>, vector<1x8x1xf32>,
    %c0_75 = arith.constant 0 : index
    %c0_76 = arith.constant 0 : index
    %c0_77 = arith.constant 0 : index
    %c2 = arith.constant 2 : index
    %c0_78 = arith.constant 0 : index
    %89 = vector.load %arg4[%c0_75, %c0_76, %c0_77, %c2, %c0_78] : memref<1x8x1x4x8xbf16, #tpu.memory_space<vmem>>, vector<1x8x1x1x8xbf16>
    %90 = vector.shape_cast %89 : vector<1x8x1x1x8xbf16> to vector<8x8xbf16>
    %c0_79 = arith.constant 0 : index
    %c0_80 = arith.constant 0 : index
    %c0_81 = arith.constant 0 : index
    %c2_82 = arith.constant 2 : index
    %c0_83 = arith.constant 0 : index
    %91 = vector.load %arg5[%c0_79, %c0_80, %c0_81, %c2_82, %c0_83] : memref<1x8x1x4x8xbf16, #tpu.memory_space<vmem>>, vector<1x8x1x1x8xbf16>
    %92 = vector.shape_cast %91 : vector<1x8x1x1x8xbf16> to vector<8x8xbf16>
    %c0_84 = arith.constant 0 : index
    %c0_85 = arith.constant 0 : index
    %c0_86 = arith.constant 0 : index
    %c2_87 = arith.constant 2 : index
    %c0_88 = arith.constant 0 : index
    %93 = vector.load %arg6[%c0_84, %c0_85, %c0_86, %c2_87, %c0_88] : memref<1x8x1x4x8xbf16, #tpu.memory_space<vmem>>, vector<1x8x1x1x8xbf16>
    %94 = vector.shape_cast %93 : vector<1x8x1x1x8xbf16> to vector<8x8xbf16>
    %cst_89 = arith.constant dense<0.000000e+00> : vector<8x8xf32>
    %95 = tpu.matmul %90, %92, %cst_89 {dimension_numbers = #tpu.dot_dimension_numbers<[1], [1], [0], [0], [0, 0, 1, 0], [], []>} : vector<8x8xbf16>, vector<8x8xbf16>, vector<8x8xf32> -> vector<8x8xf32>
    %96 = vector.broadcast %4 : vector<1x8xf32> to vector<8x8xf32>
    %97 = arith.addf %95, %96 : vector<8x8xf32>
    %c2_90 = arith.constant 2 : index
    %c0_91 = arith.constant 0 : index
    %c0_92 = arith.constant 0 : index
    %98 = vector.load %arg9[%c2_90, %c0_91, %c0_92] : memref<4x8x1xf32, #tpu.memory_space<vmem>>, vector<1x8x1xf32>
    %99 = vector.shape_cast %98 : vector<1x8x1xf32> to vector<8x1xf32>
    %cst_93 = arith.constant dense<0xFF800000> : vector<8xf32>
    %100 = vector.multi_reduction <maximumf>, %97, %cst_93 [1] : vector<8x8xf32> to vector<8xf32>
    %101 = vector.shape_cast %100 : vector<8xf32> to vector<8x1xf32>
    %102 = arith.maximumf %99, %101 : vector<8x1xf32>
    %103 = arith.subf %99, %102 : vector<8x1xf32>
    %104 = math.exp %103 : vector<8x1xf32>
    %105 = vector.broadcast %102 : vector<8x1xf32> to vector<8x8xf32>
    %106 = arith.subf %97, %105 : vector<8x8xf32>
    %107 = arith.truncf %106 : vector<8x8xf32> to vector<8x8xbf16>
    %108 = math.exp %107 : vector<8x8xbf16>
    %109 = arith.extf %108 : vector<8x8xbf16> to vector<8x8xf32>
    %cst_94 = arith.constant dense<0.000000e+00> : vector<8xf32>
    %110 = vector.multi_reduction <add>, %109, %cst_94 [1] : vector<8x8xf32> to vector<8xf32>
    %111 = vector.shape_cast %110 : vector<8xf32> to vector<8x1xf32>
    %c2_95 = arith.constant 2 : index
    %c0_96 = arith.constant 0 : index
    %c0_97 = arith.constant 0 : index
    %112 = vector.load %arg10[%c2_95, %c0_96, %c0_97] : memref<4x8x1xf32, #tpu.memory_space<vmem>>, vector<1x8x1xf32>
    %113 = vector.shape_cast %112 : vector<1x8x1xf32> to vector<8x1xf32>
    %114 = arith.mulf %104, %113 : vector<8x1xf32>
    %115 = arith.addf %114, %111 : vector<8x1xf32>
    %c2_98 = arith.constant 2 : index
    %c0_99 = arith.constant 0 : index
    %c0_100 = arith.constant 0 : index
    %116 = vector.load %arg10[%c2_98, %c0_99, %c0_100] : memref<4x8x1xf32, #tpu.memory_space<vmem>>, vector<1x8x1xf32>
    %117 = vector.shape_cast %116 : vector<1x8x1xf32> to vector<8x1xf32>
    %118 = vector.shape_cast %115 : vector<8x1xf32> to vector<1x8x1xf32>
    tpu.vector_store %arg10[%c2_98, %c0_99, %c0_100], %118 {strides = array<i32>} : memref<4x8x1xf32, #tpu.memory_space<vmem>>, vector<1x8x1xf32>,
    %c2_101 = arith.constant 2 : index
    %c0_102 = arith.constant 0 : index
    %c0_103 = arith.constant 0 : index
    %119 = vector.load %arg11[%c2_101, %c0_102, %c0_103] : memref<4x8x8xf32, #tpu.memory_space<vmem>>, vector<1x8x8xf32>
    %120 = vector.shape_cast %119 : vector<1x8x8xf32> to vector<8x8xf32>
    %121 = vector.broadcast %104 : vector<8x1xf32> to vector<8x8xf32>
    %122 = arith.mulf %121, %120 : vector<8x8xf32>
    %cst_104 = arith.constant dense<0.000000e+00> : vector<8x8xf32>
    %123 = tpu.matmul %108, %94, %cst_104 {dimension_numbers = #tpu.dot_dimension_numbers<[1], [0], [0], [1], [0, 0, 1, 1], [], []>} : vector<8x8xbf16>, vector<8x8xbf16>, vector<8x8xf32> -> vector<8x8xf32>
    %124 = arith.addf %122, %123 : vector<8x8xf32>
    %c2_105 = arith.constant 2 : index
    %c0_106 = arith.constant 0 : index
    %c0_107 = arith.constant 0 : index
    %125 = vector.load %arg11[%c2_105, %c0_106, %c0_107] : memref<4x8x8xf32, #tpu.memory_space<vmem>>, vector<1x8x8xf32>
    %126 = vector.shape_cast %125 : vector<1x8x8xf32> to vector<8x8xf32>
    %127 = vector.shape_cast %124 : vector<8x8xf32> to vector<1x8x8xf32>
    tpu.vector_store %arg11[%c2_105, %c0_106, %c0_107], %127 {strides = array<i32>} : memref<4x8x8xf32, #tpu.memory_space<vmem>>, vector<1x8x8xf32>,
    %c2_108 = arith.constant 2 : index
    %c0_109 = arith.constant 0 : index
    %c0_110 = arith.constant 0 : index
    %128 = vector.load %arg9[%c2_108, %c0_109, %c0_110] : memref<4x8x1xf32, #tpu.memory_space<vmem>>, vector<1x8x1xf32>
    %129 = vector.shape_cast %128 : vector<1x8x1xf32> to vector<8x1xf32>
    %130 = vector.shape_cast %102 : vector<8x1xf32> to vector<1x8x1xf32>
    tpu.vector_store %arg9[%c2_108, %c0_109, %c0_110], %130 {strides = array<i32>} : memref<4x8x1xf32, #tpu.memory_space<vmem>>, vector<1x8x1xf32>,
    %c0_111 = arith.constant 0 : index
    %c0_112 = arith.constant 0 : index
    %c0_113 = arith.constant 0 : index
    %c3 = arith.constant 3 : index
    %c0_114 = arith.constant 0 : index
    %131 = vector.load %arg4[%c0_111, %c0_112, %c0_113, %c3, %c0_114] : memref<1x8x1x4x8xbf16, #tpu.memory_space<vmem>>, vector<1x8x1x1x8xbf16>
    %132 = vector.shape_cast %131 : vector<1x8x1x1x8xbf16> to vector<8x8xbf16>
    %c0_115 = arith.constant 0 : index
    %c0_116 = arith.constant 0 : index
    %c0_117 = arith.constant 0 : index
    %c3_118 = arith.constant 3 : index
    %c0_119 = arith.constant 0 : index
    %133 = vector.load %arg5[%c0_115, %c0_116, %c0_117, %c3_118, %c0_119] : memref<1x8x1x4x8xbf16, #tpu.memory_space<vmem>>, vector<1x8x1x1x8xbf16>
    %134 = vector.shape_cast %133 : vector<1x8x1x1x8xbf16> to vector<8x8xbf16>
    %c0_120 = arith.constant 0 : index
    %c0_121 = arith.constant 0 : index
    %c0_122 = arith.constant 0 : index
    %c3_123 = arith.constant 3 : index
    %c0_124 = arith.constant 0 : index
    %135 = vector.load %arg6[%c0_120, %c0_121, %c0_122, %c3_123, %c0_124] : memref<1x8x1x4x8xbf16, #tpu.memory_space<vmem>>, vector<1x8x1x1x8xbf16>
    %136 = vector.shape_cast %135 : vector<1x8x1x1x8xbf16> to vector<8x8xbf16>
    %cst_125 = arith.constant dense<0.000000e+00> : vector<8x8xf32>
    %137 = tpu.matmul %132, %134, %cst_125 {dimension_numbers = #tpu.dot_dimension_numbers<[1], [1], [0], [0], [0, 0, 1, 0], [], []>} : vector<8x8xbf16>, vector<8x8xbf16>, vector<8x8xf32> -> vector<8x8xf32>
    %138 = vector.broadcast %4 : vector<1x8xf32> to vector<8x8xf32>
    %139 = arith.addf %137, %138 : vector<8x8xf32>
    %c3_126 = arith.constant 3 : index
    %c0_127 = arith.constant 0 : index
    %c0_128 = arith.constant 0 : index
    %140 = vector.load %arg9[%c3_126, %c0_127, %c0_128] : memref<4x8x1xf32, #tpu.memory_space<vmem>>, vector<1x8x1xf32>
    %141 = vector.shape_cast %140 : vector<1x8x1xf32> to vector<8x1xf32>
    %cst_129 = arith.constant dense<0xFF800000> : vector<8xf32>
    %142 = vector.multi_reduction <maximumf>, %139, %cst_129 [1] : vector<8x8xf32> to vector<8xf32>
    %143 = vector.shape_cast %142 : vector<8xf32> to vector<8x1xf32>
    %144 = arith.maximumf %141, %143 : vector<8x1xf32>
    %145 = arith.subf %141, %144 : vector<8x1xf32>
    %146 = math.exp %145 : vector<8x1xf32>
    %147 = vector.broadcast %144 : vector<8x1xf32> to vector<8x8xf32>
    %148 = arith.subf %139, %147 : vector<8x8xf32>
    %149 = arith.truncf %148 : vector<8x8xf32> to vector<8x8xbf16>
    %150 = math.exp %149 : vector<8x8xbf16>
    %151 = arith.extf %150 : vector<8x8xbf16> to vector<8x8xf32>
    %cst_130 = arith.constant dense<0.000000e+00> : vector<8xf32>
    %152 = vector.multi_reduction <add>, %151, %cst_130 [1] : vector<8x8xf32> to vector<8xf32>
    %153 = vector.shape_cast %152 : vector<8xf32> to vector<8x1xf32>
    %c3_131 = arith.constant 3 : index
    %c0_132 = arith.constant 0 : index
    %c0_133 = arith.constant 0 : index
    %154 = vector.load %arg10[%c3_131, %c0_132, %c0_133] : memref<4x8x1xf32, #tpu.memory_space<vmem>>, vector<1x8x1xf32>
    %155 = vector.shape_cast %154 : vector<1x8x1xf32> to vector<8x1xf32>
    %156 = arith.mulf %146, %155 : vector<8x1xf32>
    %157 = arith.addf %156, %153 : vector<8x1xf32>
    %c3_134 = arith.constant 3 : index
    %c0_135 = arith.constant 0 : index
    %c0_136 = arith.constant 0 : index
    %158 = vector.load %arg10[%c3_134, %c0_135, %c0_136] : memref<4x8x1xf32, #tpu.memory_space<vmem>>, vector<1x8x1xf32>
    %159 = vector.shape_cast %158 : vector<1x8x1xf32> to vector<8x1xf32>
    %160 = vector.shape_cast %157 : vector<8x1xf32> to vector<1x8x1xf32>
    tpu.vector_store %arg10[%c3_134, %c0_135, %c0_136], %160 {strides = array<i32>} : memref<4x8x1xf32, #tpu.memory_space<vmem>>, vector<1x8x1xf32>,
    %c3_137 = arith.constant 3 : index
    %c0_138 = arith.constant 0 : index
    %c0_139 = arith.constant 0 : index
    %161 = vector.load %arg11[%c3_137, %c0_138, %c0_139] : memref<4x8x8xf32, #tpu.memory_space<vmem>>, vector<1x8x8xf32>
    %162 = vector.shape_cast %161 : vector<1x8x8xf32> to vector<8x8xf32>
    %163 = vector.broadcast %146 : vector<8x1xf32> to vector<8x8xf32>
    %164 = arith.mulf %163, %162 : vector<8x8xf32>
    %cst_140 = arith.constant dense<0.000000e+00> : vector<8x8xf32>
    %165 = tpu.matmul %150, %136, %cst_140 {dimension_numbers = #tpu.dot_dimension_numbers<[1], [0], [0], [1], [0, 0, 1, 1], [], []>} : vector<8x8xbf16>, vector<8x8xbf16>, vector<8x8xf32> -> vector<8x8xf32>
    %166 = arith.addf %164, %165 : vector<8x8xf32>
    %c3_141 = arith.constant 3 : index
    %c0_142 = arith.constant 0 : index
    %c0_143 = arith.constant 0 : index
    %167 = vector.load %arg11[%c3_141, %c0_142, %c0_143] : memref<4x8x8xf32, #tpu.memory_space<vmem>>, vector<1x8x8xf32>
    %168 = vector.shape_cast %167 : vector<1x8x8xf32> to vector<8x8xf32>
    %169 = vector.shape_cast %166 : vector<8x8xf32> to vector<1x8x8xf32>
    tpu.vector_store %arg11[%c3_141, %c0_142, %c0_143], %169 {strides = array<i32>} : memref<4x8x8xf32, #tpu.memory_space<vmem>>, vector<1x8x8xf32>,
    %c3_144 = arith.constant 3 : index
    %c0_145 = arith.constant 0 : index
    %c0_146 = arith.constant 0 : index
    %170 = vector.load %arg9[%c3_144, %c0_145, %c0_146] : memref<4x8x1xf32, #tpu.memory_space<vmem>>, vector<1x8x1xf32>
    %171 = vector.shape_cast %170 : vector<1x8x1xf32> to vector<8x1xf32>
    %172 = vector.shape_cast %144 : vector<8x1xf32> to vector<1x8x1xf32>
    tpu.vector_store %arg9[%c3_144, %c0_145, %c0_146], %172 {strides = array<i32>} : memref<4x8x1xf32, #tpu.memory_space<vmem>>, vector<1x8x1xf32>,
    %c0_i32_147 = arith.constant 0 : i32
    %173 = arith.cmpi eq, %arg3, %c0_i32_147 : i32
    %174 = arith.extui %173 : i1 to i32
    %c0_i32_148 = arith.constant 0 : i32
    %175 = arith.cmpi ne, %174, %c0_i32_148 : i32
    scf.if %175 {
      %c0_149 = arith.constant 0 : index
      %c0_150 = arith.constant 0 : index
      %c0_151 = arith.constant 0 : index
      %176 = vector.load %arg10[%c0_149, %c0_150, %c0_151] : memref<4x8x1xf32, #tpu.memory_space<vmem>>, vector<4x8x1xf32>
      %177 = tpu.reciprocal %176 {approx = true} : vector<4x8x1xf32> -> vector<4x8x1xf32>
      %c0_152 = arith.constant 0 : index
      %c0_153 = arith.constant 0 : index
      %c0_154 = arith.constant 0 : index
      %178 = vector.load %arg11[%c0_152, %c0_153, %c0_154] : memref<4x8x8xf32, #tpu.memory_space<vmem>>, vector<1x8x8xf32>
      %179 = vector.shape_cast %178 : vector<1x8x8xf32> to vector<8x8xf32>
      %180 = vector.extract_strided_slice %177 {offsets = [0, 0, 0], sizes = [1, 8, 1], strides = [1, 1, 1]} : vector<4x8x1xf32> to vector<1x8x1xf32>
      %181 = vector.shape_cast %180 : vector<1x8x1xf32> to vector<8x1xf32>
      %182 = vector.broadcast %181 : vector<8x1xf32> to vector<8x8xf32>
      %183 = arith.mulf %179, %182 : vector<8x8xf32>
      %184 = arith.truncf %183 : vector<8x8xf32> to vector<8x8xbf16>
      %c0_155 = arith.constant 0 : index
      %c0_156 = arith.constant 0 : index
      %c0_157 = arith.constant 0 : index
      %185 = vector.load %arg8[%c0_155, %c0_156, %c0_157] : memref<1x8x32xbf16, #tpu.memory_space<vmem>>, vector<1x8x8xbf16>
      %186 = vector.shape_cast %185 : vector<1x8x8xbf16> to vector<8x8xbf16>
      %187 = vector.shape_cast %184 : vector<8x8xbf16> to vector<1x8x8xbf16>
      tpu.vector_store %arg8[%c0_155, %c0_156, %c0_157], %187 {strides = array<i32>} : memref<1x8x32xbf16, #tpu.memory_space<vmem>>, vector<1x8x8xbf16>,
      %c1_158 = arith.constant 1 : index
      %c0_159 = arith.constant 0 : index
      %c0_160 = arith.constant 0 : index
      %188 = vector.load %arg11[%c1_158, %c0_159, %c0_160] : memref<4x8x8xf32, #tpu.memory_space<vmem>>, vector<1x8x8xf32>
      %189 = vector.shape_cast %188 : vector<1x8x8xf32> to vector<8x8xf32>
      %190 = vector.extract_strided_slice %177 {offsets = [1, 0, 0], sizes = [1, 8, 1], strides = [1, 1, 1]} : vector<4x8x1xf32> to vector<1x8x1xf32>
      %191 = vector.shape_cast %190 : vector<1x8x1xf32> to vector<8x1xf32>
      %192 = vector.broadcast %191 : vector<8x1xf32> to vector<8x8xf32>
      %193 = arith.mulf %189, %192 : vector<8x8xf32>
      %194 = arith.truncf %193 : vector<8x8xf32> to vector<8x8xbf16>
      %c0_161 = arith.constant 0 : index
      %c0_162 = arith.constant 0 : index
      %c8 = arith.constant 8 : index
      %195 = vector.load %arg8[%c0_161, %c0_162, %c8] : memref<1x8x32xbf16, #tpu.memory_space<vmem>>, vector<1x8x8xbf16>
      %196 = vector.shape_cast %195 : vector<1x8x8xbf16> to vector<8x8xbf16>
      %197 = vector.shape_cast %194 : vector<8x8xbf16> to vector<1x8x8xbf16>
      tpu.vector_store %arg8[%c0_161, %c0_162, %c8], %197 {strides = array<i32>} : memref<1x8x32xbf16, #tpu.memory_space<vmem>>, vector<1x8x8xbf16>,
      %c2_163 = arith.constant 2 : index
      %c0_164 = arith.constant 0 : index
      %c0_165 = arith.constant 0 : index
      %198 = vector.load %arg11[%c2_163, %c0_164, %c0_165] : memref<4x8x8xf32, #tpu.memory_space<vmem>>, vector<1x8x8xf32>
      %199 = vector.shape_cast %198 : vector<1x8x8xf32> to vector<8x8xf32>
      %200 = vector.extract_strided_slice %177 {offsets = [2, 0, 0], sizes = [1, 8, 1], strides = [1, 1, 1]} : vector<4x8x1xf32> to vector<1x8x1xf32>
      %201 = vector.shape_cast %200 : vector<1x8x1xf32> to vector<8x1xf32>
      %202 = vector.broadcast %201 : vector<8x1xf32> to vector<8x8xf32>
      %203 = arith.mulf %199, %202 : vector<8x8xf32>
      %204 = arith.truncf %203 : vector<8x8xf32> to vector<8x8xbf16>
      %c0_166 = arith.constant 0 : index
      %c0_167 = arith.constant 0 : index
      %c16 = arith.constant 16 : index
      %205 = vector.load %arg8[%c0_166, %c0_167, %c16] : memref<1x8x32xbf16, #tpu.memory_space<vmem>>, vector<1x8x8xbf16>
      %206 = vector.shape_cast %205 : vector<1x8x8xbf16> to vector<8x8xbf16>
      %207 = vector.shape_cast %204 : vector<8x8xbf16> to vector<1x8x8xbf16>
      tpu.vector_store %arg8[%c0_166, %c0_167, %c16], %207 {strides = array<i32>} : memref<1x8x32xbf16, #tpu.memory_space<vmem>>, vector<1x8x8xbf16>,
      %c3_168 = arith.constant 3 : index
      %c0_169 = arith.constant 0 : index
      %c0_170 = arith.constant 0 : index
      %208 = vector.load %arg11[%c3_168, %c0_169, %c0_170] : memref<4x8x8xf32, #tpu.memory_space<vmem>>, vector<1x8x8xf32>
      %209 = vector.shape_cast %208 : vector<1x8x8xf32> to vector<8x8xf32>
      %210 = vector.extract_strided_slice %177 {offsets = [3, 0, 0], sizes = [1, 8, 1], strides = [1, 1, 1]} : vector<4x8x1xf32> to vector<1x8x1xf32>
      %211 = vector.shape_cast %210 : vector<1x8x1xf32> to vector<8x1xf32>
      %212 = vector.broadcast %211 : vector<8x1xf32> to vector<8x8xf32>
      %213 = arith.mulf %209, %212 : vector<8x8xf32>
      %214 = arith.truncf %213 : vector<8x8xf32> to vector<8x8xbf16>
      %c0_171 = arith.constant 0 : index
      %c0_172 = arith.constant 0 : index
      %c24 = arith.constant 24 : index
      %215 = vector.load %arg8[%c0_171, %c0_172, %c24] : memref<1x8x32xbf16, #tpu.memory_space<vmem>>, vector<1x8x8xbf16>
      %216 = vector.shape_cast %215 : vector<1x8x8xbf16> to vector<8x8xbf16>
      %217 = vector.shape_cast %214 : vector<8x8xbf16> to vector<1x8x8xbf16>
      tpu.vector_store %arg8[%c0_171, %c0_172, %c24], %217 {strides = array<i32>} : memref<1x8x32xbf16, #tpu.memory_space<vmem>>, vector<1x8x8xbf16>,
    } else {
    }
    return
  }
  func.func @transform_0(%arg0: i32, %arg1: i32, %arg2: i32, %arg3: i32) -> (i32, i32, i32, i32, i32) {
    %c0_i32 = arith.constant 0 : i32
    %c0_i32_0 = arith.constant 0 : i32
    %c0_i32_1 = arith.constant 0 : i32
    return %arg0, %arg2, %c0_i32, %arg1, %c0_i32_0 : i32, i32, i32, i32, i32
  }
  func.func @transform_1(%arg0: i32, %arg1: i32, %arg2: i32, %arg3: i32) -> (i32, i32, i32, i32, i32) {
    %c1_i32 = arith.constant 1 : i32
    %c0_i32 = arith.constant 0 : i32
    %c0_i32_0 = arith.constant 0 : i32
    return %arg0, %arg3, %c1_i32, %arg1, %c0_i32 : i32, i32, i32, i32, i32
  }
  func.func @transform_2(%arg0: i32, %arg1: i32, %arg2: i32, %arg3: i32) -> (i32, i32, i32, i32, i32) {
    %c2_i32 = arith.constant 2 : i32
    %c0_i32 = arith.constant 0 : i32
    %c0_i32_0 = arith.constant 0 : i32
    return %arg0, %arg3, %c2_i32, %arg1, %c0_i32 : i32, i32, i32, i32, i32
  }
  func.func @transform_3(%arg0: i32, %arg1: i32, %arg2: i32, %arg3: i32) -> (i32, i32, i32) {
    %c0_i32 = arith.constant 0 : i32
    %c0_i32_0 = arith.constant 0 : i32
    return %arg0, %c0_i32, %arg3 : i32, i32, i32
  }
  func.func @transform_4(%arg0: i32, %arg1: i32, %arg2: i32, %arg3: i32) -> (i32, i32, i32) {
    %c0_i32 = arith.constant 0 : i32
    return %arg0, %arg2, %arg1 : i32, i32, i32
  }
}

module attributes {stable_mosaic.version = 11 : i64} {
  func.func @_linear_kernel(%arg0: i32, %arg1: i32, %arg2: i32, %arg3: memref<16x32xbf16, #tpu.memory_space<vmem>>, %arg4: memref<32x64xbf16, #tpu.memory_space<vmem>>, %arg5: memref<1x64xf32, #tpu.memory_space<vmem>>, %arg6: memref<16x64xbf16, #tpu.memory_space<vmem>>, %arg7: memref<16x64xf32, #tpu.memory_space<vmem>>) attributes {dimension_semantics = [#tpu.dimension_semantics<parallel>, #tpu.dimension_semantics<parallel>, #tpu.dimension_semantics<arbitrary>], iteration_bounds = array<i64: 1, 1, 1>, scalar_prefetch = 0 : i64, scratch_operands = 1 : i64, tpu.core_type = #tpu.core_type<tc>, window_params = [{transform_indices = @transform_0, window_bounds = array<i64: 16, 32>}, {transform_indices = @transform_1, window_bounds = array<i64: 32, 64>}, {transform_indices = @transform_2, window_bounds = array<i64: 1, 64>}, {transform_indices = @transform_3, window_bounds = array<i64: 16, 64>}]} {
    %c0_i32 = arith.constant 0 : i32
    %0 = arith.cmpi eq, %arg2, %c0_i32 : i32
    %1 = arith.extui %0 : i1 to i32
    %c0_i32_0 = arith.constant 0 : i32
    %2 = arith.cmpi ne, %1, %c0_i32_0 : i32
    scf.if %2 {
      %cst_10 = arith.constant 0.000000e+00 : f32
      %12 = vector.broadcast %cst_10 : f32 to vector<16x64xf32>
      %c0_11 = arith.constant 0 : index
      %c0_12 = arith.constant 0 : index
      %13 = vector.load %arg7[%c0_11, %c0_12] : memref<16x64xf32, #tpu.memory_space<vmem>>, vector<16x64xf32>
      tpu.vector_store %arg7[%c0_11, %c0_12], %12 {strides = array<i32>} : memref<16x64xf32, #tpu.memory_space<vmem>>, vector<16x64xf32>,
    } else {
    }
    %c0 = arith.constant 0 : index
    %c0_1 = arith.constant 0 : index
    %3 = vector.load %arg7[%c0, %c0_1] : memref<16x64xf32, #tpu.memory_space<vmem>>, vector<16x64xf32>
    %c0_2 = arith.constant 0 : index
    %c0_3 = arith.constant 0 : index
    %4 = vector.load %arg3[%c0_2, %c0_3] : memref<16x32xbf16, #tpu.memory_space<vmem>>, vector<16x32xbf16>
    %c0_4 = arith.constant 0 : index
    %c0_5 = arith.constant 0 : index
    %5 = vector.load %arg4[%c0_4, %c0_5] : memref<32x64xbf16, #tpu.memory_space<vmem>>, vector<32x64xbf16>
    %cst = arith.constant dense<0.000000e+00> : vector<16x64xf32>
    %6 = tpu.matmul %4, %5, %cst {dimension_numbers = #tpu.dot_dimension_numbers<[1], [0], [0], [1], [0, 0, 1, 1], [], []>} : vector<16x32xbf16>, vector<32x64xbf16>, vector<16x64xf32> -> vector<16x64xf32>
    %7 = arith.addf %3, %6 : vector<16x64xf32>
    %c0_6 = arith.constant 0 : index
    %c0_7 = arith.constant 0 : index
    %8 = vector.load %arg7[%c0_6, %c0_7] : memref<16x64xf32, #tpu.memory_space<vmem>>, vector<16x64xf32>
    tpu.vector_store %arg7[%c0_6, %c0_7], %7 {strides = array<i32>} : memref<16x64xf32, #tpu.memory_space<vmem>>, vector<16x64xf32>,
    %c0_i32_8 = arith.constant 0 : i32
    %9 = arith.cmpi eq, %arg2, %c0_i32_8 : i32
    %10 = arith.extui %9 : i1 to i32
    %c0_i32_9 = arith.constant 0 : i32
    %11 = arith.cmpi ne, %10, %c0_i32_9 : i32
    scf.if %11 {
      %c0_10 = arith.constant 0 : index
      %c0_11 = arith.constant 0 : index
      %12 = vector.load %arg7[%c0_10, %c0_11] : memref<16x64xf32, #tpu.memory_space<vmem>>, vector<16x64xf32>
      %c0_12 = arith.constant 0 : index
      %c0_13 = arith.constant 0 : index
      %13 = vector.load %arg5[%c0_12, %c0_13] : memref<1x64xf32, #tpu.memory_space<vmem>>, vector<1x64xf32>
      %14 = vector.broadcast %13 : vector<1x64xf32> to vector<16x64xf32>
      %15 = arith.addf %12, %14 : vector<16x64xf32>
      %cst_14 = arith.constant 0.000000e+00 : f32
      %16 = vector.broadcast %cst_14 : f32 to vector<16x64xf32>
      %17 = arith.maximumf %15, %16 : vector<16x64xf32>
      %18 = arith.truncf %17 : vector<16x64xf32> to vector<16x64xbf16>
      %c0_15 = arith.constant 0 : index
      %c0_16 = arith.constant 0 : index
      %19 = vector.load %arg6[%c0_15, %c0_16] : memref<16x64xbf16, #tpu.memory_space<vmem>>, vector<16x64xbf16>
      tpu.vector_store %arg6[%c0_15, %c0_16], %18 {strides = array<i32>} : memref<16x64xbf16, #tpu.memory_space<vmem>>, vector<16x64xbf16>,
    } else {
    }
    return
  }
  func.func @transform_0(%arg0: i32, %arg1: i32, %arg2: i32) -> (i32, i32) {
    %c0_i32 = arith.constant 0 : i32
    return %arg0, %arg2 : i32, i32
  }
  func.func @transform_1(%arg0: i32, %arg1: i32, %arg2: i32) -> (i32, i32) {
    %c0_i32 = arith.constant 0 : i32
    return %arg2, %arg1 : i32, i32
  }
  func.func @transform_2(%arg0: i32, %arg1: i32, %arg2: i32) -> (i32, i32) {
    %c0_i32 = arith.constant 0 : i32
    %c0_i32_0 = arith.constant 0 : i32
    return %c0_i32, %arg1 : i32, i32
  }
  func.func @transform_3(%arg0: i32, %arg1: i32, %arg2: i32) -> (i32, i32) {
    %c0_i32 = arith.constant 0 : i32
    return %arg0, %arg1 : i32, i32
  }
}

module attributes {stable_mosaic.version = 11 : i64} {
  func.func @_linear_add_ln_kernel(%arg0: i32, %arg1: i32, %arg2: memref<16x64xbf16, #tpu.memory_space<vmem>>, %arg3: memref<64x32xbf16, #tpu.memory_space<vmem>>, %arg4: memref<1x32xf32, #tpu.memory_space<vmem>>, %arg5: memref<16x32xbf16, #tpu.memory_space<vmem>>, %arg6: memref<1x32xf32, #tpu.memory_space<vmem>>, %arg7: memref<1x32xf32, #tpu.memory_space<vmem>>, %arg8: memref<16x32xbf16, #tpu.memory_space<vmem>>, %arg9: memref<16x32xf32, #tpu.memory_space<vmem>>) attributes {dimension_semantics = [#tpu.dimension_semantics<parallel>, #tpu.dimension_semantics<arbitrary>], iteration_bounds = array<i64: 1, 1>, scalar_prefetch = 0 : i64, scratch_operands = 1 : i64, tpu.core_type = #tpu.core_type<tc>, window_params = [{transform_indices = @transform_0, window_bounds = array<i64: 16, 64>}, {transform_indices = @transform_1, window_bounds = array<i64: 64, 32>}, {pipeline_mode = #tpu.pipeline_mode<synchronous>, transform_indices = @transform_2, window_bounds = array<i64: 1, 32>}, {transform_indices = @transform_3, window_bounds = array<i64: 16, 32>}, {pipeline_mode = #tpu.pipeline_mode<synchronous>, transform_indices = @transform_4, window_bounds = array<i64: 1, 32>}, {pipeline_mode = #tpu.pipeline_mode<synchronous>, transform_indices = @transform_5, window_bounds = array<i64: 1, 32>}, {transform_indices = @transform_6, window_bounds = array<i64: 16, 32>}]} {
    %c0_i32 = arith.constant 0 : i32
    %0 = arith.cmpi eq, %arg1, %c0_i32 : i32
    %1 = arith.extui %0 : i1 to i32
    %c0_i32_0 = arith.constant 0 : i32
    %2 = arith.cmpi ne, %1, %c0_i32_0 : i32
    scf.if %2 {
      %cst_10 = arith.constant 0.000000e+00 : f32
      %12 = vector.broadcast %cst_10 : f32 to vector<16x32xf32>
      %c0_11 = arith.constant 0 : index
      %c0_12 = arith.constant 0 : index
      %13 = vector.load %arg9[%c0_11, %c0_12] : memref<16x32xf32, #tpu.memory_space<vmem>>, vector<16x32xf32>
      tpu.vector_store %arg9[%c0_11, %c0_12], %12 {strides = array<i32>} : memref<16x32xf32, #tpu.memory_space<vmem>>, vector<16x32xf32>,
    } else {
    }
    %c0 = arith.constant 0 : index
    %c0_1 = arith.constant 0 : index
    %3 = vector.load %arg9[%c0, %c0_1] : memref<16x32xf32, #tpu.memory_space<vmem>>, vector<16x32xf32>
    %c0_2 = arith.constant 0 : index
    %c0_3 = arith.constant 0 : index
    %4 = vector.load %arg2[%c0_2, %c0_3] : memref<16x64xbf16, #tpu.memory_space<vmem>>, vector<16x64xbf16>
    %c0_4 = arith.constant 0 : index
    %c0_5 = arith.constant 0 : index
    %5 = vector.load %arg3[%c0_4, %c0_5] : memref<64x32xbf16, #tpu.memory_space<vmem>>, vector<64x32xbf16>
    %cst = arith.constant dense<0.000000e+00> : vector<16x32xf32>
    %6 = tpu.matmul %4, %5, %cst {dimension_numbers = #tpu.dot_dimension_numbers<[1], [0], [0], [1], [0, 0, 1, 1], [], []>} : vector<16x64xbf16>, vector<64x32xbf16>, vector<16x32xf32> -> vector<16x32xf32>
    %7 = arith.addf %3, %6 : vector<16x32xf32>
    %c0_6 = arith.constant 0 : index
    %c0_7 = arith.constant 0 : index
    %8 = vector.load %arg9[%c0_6, %c0_7] : memref<16x32xf32, #tpu.memory_space<vmem>>, vector<16x32xf32>
    tpu.vector_store %arg9[%c0_6, %c0_7], %7 {strides = array<i32>} : memref<16x32xf32, #tpu.memory_space<vmem>>, vector<16x32xf32>,
    %c0_i32_8 = arith.constant 0 : i32
    %9 = arith.cmpi eq, %arg1, %c0_i32_8 : i32
    %10 = arith.extui %9 : i1 to i32
    %c0_i32_9 = arith.constant 0 : i32
    %11 = arith.cmpi ne, %10, %c0_i32_9 : i32
    scf.if %11 {
      %c0_10 = arith.constant 0 : index
      %c0_11 = arith.constant 0 : index
      %12 = vector.load %arg9[%c0_10, %c0_11] : memref<16x32xf32, #tpu.memory_space<vmem>>, vector<16x32xf32>
      %c0_12 = arith.constant 0 : index
      %c0_13 = arith.constant 0 : index
      %13 = vector.load %arg4[%c0_12, %c0_13] : memref<1x32xf32, #tpu.memory_space<vmem>>, vector<1x32xf32>
      %14 = vector.broadcast %13 : vector<1x32xf32> to vector<16x32xf32>
      %15 = arith.addf %12, %14 : vector<16x32xf32>
      %c0_14 = arith.constant 0 : index
      %c0_15 = arith.constant 0 : index
      %16 = vector.load %arg5[%c0_14, %c0_15] : memref<16x32xbf16, #tpu.memory_space<vmem>>, vector<16x32xbf16>
      %17 = arith.extf %16 : vector<16x32xbf16> to vector<16x32xf32>
      %18 = arith.addf %15, %17 : vector<16x32xf32>
      %cst_16 = arith.constant dense<0.000000e+00> : vector<16xf32>
      %19 = vector.multi_reduction <add>, %18, %cst_16 [1] : vector<16x32xf32> to vector<16xf32>
      %20 = vector.shape_cast %19 : vector<16xf32> to vector<16x1xf32>
      %cst_17 = arith.constant 3.200000e+01 : f32
      %21 = vector.broadcast %cst_17 : f32 to vector<16x1xf32>
      %22 = arith.divf %20, %21 : vector<16x1xf32>
      %23 = vector.broadcast %22 : vector<16x1xf32> to vector<16x32xf32>
      %24 = arith.subf %18, %23 : vector<16x32xf32>
      %25 = arith.mulf %24, %24 : vector<16x32xf32>
      %cst_18 = arith.constant dense<0.000000e+00> : vector<16xf32>
      %26 = vector.multi_reduction <add>, %25, %cst_18 [1] : vector<16x32xf32> to vector<16xf32>
      %27 = vector.shape_cast %26 : vector<16xf32> to vector<16x1xf32>
      %cst_19 = arith.constant 3.200000e+01 : f32
      %28 = vector.broadcast %cst_19 : f32 to vector<16x1xf32>
      %29 = arith.divf %27, %28 : vector<16x1xf32>
      %cst_20 = arith.constant 9.99999974E-6 : f32
      %30 = vector.broadcast %cst_20 : f32 to vector<16x1xf32>
      %31 = arith.addf %29, %30 : vector<16x1xf32>
      %32 = math.rsqrt %31 : vector<16x1xf32>
      %33 = vector.broadcast %22 : vector<16x1xf32> to vector<16x32xf32>
      %34 = arith.subf %18, %33 : vector<16x32xf32>
      %35 = vector.broadcast %32 : vector<16x1xf32> to vector<16x32xf32>
      %36 = arith.mulf %34, %35 : vector<16x32xf32>
      %c0_21 = arith.constant 0 : index
      %c0_22 = arith.constant 0 : index
      %37 = vector.load %arg6[%c0_21, %c0_22] : memref<1x32xf32, #tpu.memory_space<vmem>>, vector<1x32xf32>
      %38 = vector.broadcast %37 : vector<1x32xf32> to vector<16x32xf32>
      %39 = arith.mulf %36, %38 : vector<16x32xf32>
      %c0_23 = arith.constant 0 : index
      %c0_24 = arith.constant 0 : index
      %40 = vector.load %arg7[%c0_23, %c0_24] : memref<1x32xf32, #tpu.memory_space<vmem>>, vector<1x32xf32>
      %41 = vector.broadcast %40 : vector<1x32xf32> to vector<16x32xf32>
      %42 = arith.addf %39, %41 : vector<16x32xf32>
      %43 = arith.truncf %42 : vector<16x32xf32> to vector<16x32xbf16>
      %c0_25 = arith.constant 0 : index
      %c0_26 = arith.constant 0 : index
      %44 = vector.load %arg8[%c0_25, %c0_26] : memref<16x32xbf16, #tpu.memory_space<vmem>>, vector<16x32xbf16>
      tpu.vector_store %arg8[%c0_25, %c0_26], %43 {strides = array<i32>} : memref<16x32xbf16, #tpu.memory_space<vmem>>, vector<16x32xbf16>,
    } else {
    }
    return
  }
  func.func @transform_0(%arg0: i32, %arg1: i32) -> (i32, i32) {
    %c0_i32 = arith.constant 0 : i32
    return %arg0, %arg1 : i32, i32
  }
  func.func @transform_1(%arg0: i32, %arg1: i32) -> (i32, i32) {
    %c0_i32 = arith.constant 0 : i32
    %c0_i32_0 = arith.constant 0 : i32
    return %arg1, %c0_i32 : i32, i32
  }
  func.func @transform_2(%arg0: i32, %arg1: i32) -> (i32, i32) {
    %c0_i32 = arith.constant 0 : i32
    %c0_i32_0 = arith.constant 0 : i32
    %c0_i32_1 = arith.constant 0 : i32
    return %c0_i32, %c0_i32_0 : i32, i32
  }
  func.func @transform_3(%arg0: i32, %arg1: i32) -> (i32, i32) {
    %c0_i32 = arith.constant 0 : i32
    %c0_i32_0 = arith.constant 0 : i32
    return %arg0, %c0_i32 : i32, i32
  }
  func.func @transform_4(%arg0: i32, %arg1: i32) -> (i32, i32) {
    %c0_i32 = arith.constant 0 : i32
    %c0_i32_0 = arith.constant 0 : i32
    %c0_i32_1 = arith.constant 0 : i32
    return %c0_i32, %c0_i32_0 : i32, i32
  }
  func.func @transform_5(%arg0: i32, %arg1: i32) -> (i32, i32) {
    %c0_i32 = arith.constant 0 : i32
    %c0_i32_0 = arith.constant 0 : i32
    %c0_i32_1 = arith.constant 0 : i32
    return %c0_i32, %c0_i32_0 : i32, i32
  }
  func.func @transform_6(%arg0: i32, %arg1: i32) -> (i32, i32) {
    %c0_i32 = arith.constant 0 : i32
    %c0_i32_0 = arith.constant 0 : i32
    return %arg0, %c0_i32 : i32, i32
  }
}

module attributes {stable_mosaic.version = 11 : i64} {
  func.func @_linear_kernel(%arg0: i32, %arg1: i32, %arg2: i32, %arg3: memref<2x32xbf16, #tpu.memory_space<vmem>>, %arg4: memref<32x32xbf16, #tpu.memory_space<vmem>>, %arg5: memref<1x32xf32, #tpu.memory_space<vmem>>, %arg6: memref<2x32xbf16, #tpu.memory_space<vmem>>, %arg7: memref<2x32xf32, #tpu.memory_space<vmem>>) attributes {dimension_semantics = [#tpu.dimension_semantics<parallel>, #tpu.dimension_semantics<parallel>, #tpu.dimension_semantics<arbitrary>], iteration_bounds = array<i64: 1, 1, 1>, scalar_prefetch = 0 : i64, scratch_operands = 1 : i64, tpu.core_type = #tpu.core_type<tc>, window_params = [{transform_indices = @transform_0, window_bounds = array<i64: 2, 32>}, {transform_indices = @transform_1, window_bounds = array<i64: 32, 32>}, {transform_indices = @transform_2, window_bounds = array<i64: 1, 32>}, {transform_indices = @transform_3, window_bounds = array<i64: 2, 32>}]} {
    %c0_i32 = arith.constant 0 : i32
    %0 = arith.cmpi eq, %arg2, %c0_i32 : i32
    %1 = arith.extui %0 : i1 to i32
    %c0_i32_0 = arith.constant 0 : i32
    %2 = arith.cmpi ne, %1, %c0_i32_0 : i32
    scf.if %2 {
      %cst_10 = arith.constant 0.000000e+00 : f32
      %12 = vector.broadcast %cst_10 : f32 to vector<2x32xf32>
      %c0_11 = arith.constant 0 : index
      %c0_12 = arith.constant 0 : index
      %13 = vector.load %arg7[%c0_11, %c0_12] : memref<2x32xf32, #tpu.memory_space<vmem>>, vector<2x32xf32>
      tpu.vector_store %arg7[%c0_11, %c0_12], %12 {strides = array<i32>} : memref<2x32xf32, #tpu.memory_space<vmem>>, vector<2x32xf32>,
    } else {
    }
    %c0 = arith.constant 0 : index
    %c0_1 = arith.constant 0 : index
    %3 = vector.load %arg7[%c0, %c0_1] : memref<2x32xf32, #tpu.memory_space<vmem>>, vector<2x32xf32>
    %c0_2 = arith.constant 0 : index
    %c0_3 = arith.constant 0 : index
    %4 = vector.load %arg3[%c0_2, %c0_3] : memref<2x32xbf16, #tpu.memory_space<vmem>>, vector<2x32xbf16>
    %c0_4 = arith.constant 0 : index
    %c0_5 = arith.constant 0 : index
    %5 = vector.load %arg4[%c0_4, %c0_5] : memref<32x32xbf16, #tpu.memory_space<vmem>>, vector<32x32xbf16>
    %cst = arith.constant dense<0.000000e+00> : vector<2x32xf32>
    %6 = tpu.matmul %4, %5, %cst {dimension_numbers = #tpu.dot_dimension_numbers<[1], [0], [0], [1], [0, 0, 1, 1], [], []>} : vector<2x32xbf16>, vector<32x32xbf16>, vector<2x32xf32> -> vector<2x32xf32>
    %7 = arith.addf %3, %6 : vector<2x32xf32>
    %c0_6 = arith.constant 0 : index
    %c0_7 = arith.constant 0 : index
    %8 = vector.load %arg7[%c0_6, %c0_7] : memref<2x32xf32, #tpu.memory_space<vmem>>, vector<2x32xf32>
    tpu.vector_store %arg7[%c0_6, %c0_7], %7 {strides = array<i32>} : memref<2x32xf32, #tpu.memory_space<vmem>>, vector<2x32xf32>,
    %c0_i32_8 = arith.constant 0 : i32
    %9 = arith.cmpi eq, %arg2, %c0_i32_8 : i32
    %10 = arith.extui %9 : i1 to i32
    %c0_i32_9 = arith.constant 0 : i32
    %11 = arith.cmpi ne, %10, %c0_i32_9 : i32
    scf.if %11 {
      %c0_10 = arith.constant 0 : index
      %c0_11 = arith.constant 0 : index
      %12 = vector.load %arg7[%c0_10, %c0_11] : memref<2x32xf32, #tpu.memory_space<vmem>>, vector<2x32xf32>
      %c0_12 = arith.constant 0 : index
      %c0_13 = arith.constant 0 : index
      %13 = vector.load %arg5[%c0_12, %c0_13] : memref<1x32xf32, #tpu.memory_space<vmem>>, vector<1x32xf32>
      %14 = vector.broadcast %13 : vector<1x32xf32> to vector<2x32xf32>
      %15 = arith.addf %12, %14 : vector<2x32xf32>
      %16 = math.tanh %15 : vector<2x32xf32>
      %17 = arith.truncf %16 : vector<2x32xf32> to vector<2x32xbf16>
      %c0_14 = arith.constant 0 : index
      %c0_15 = arith.constant 0 : index
      %18 = vector.load %arg6[%c0_14, %c0_15] : memref<2x32xbf16, #tpu.memory_space<vmem>>, vector<2x32xbf16>
      tpu.vector_store %arg6[%c0_14, %c0_15], %17 {strides = array<i32>} : memref<2x32xbf16, #tpu.memory_space<vmem>>, vector<2x32xbf16>,
    } else {
    }
    return
  }
  func.func @transform_0(%arg0: i32, %arg1: i32, %arg2: i32) -> (i32, i32) {
    %c0_i32 = arith.constant 0 : i32
    return %arg0, %arg2 : i32, i32
  }
  func.func @transform_1(%arg0: i32, %arg1: i32, %arg2: i32) -> (i32, i32) {
    %c0_i32 = arith.constant 0 : i32
    return %arg2, %arg1 : i32, i32
  }
  func.func @transform_2(%arg0: i32, %arg1: i32, %arg2: i32) -> (i32, i32) {
    %c0_i32 = arith.constant 0 : i32
    %c0_i32_0 = arith.constant 0 : i32
    return %c0_i32, %arg1 : i32, i32
  }
  func.func @transform_3(%arg0: i32, %arg1: i32, %arg2: i32) -> (i32, i32) {
    %c0_i32 = arith.constant 0 : i32
    return %arg0, %arg1 : i32, i32
  }
}

</mosaic_0001>

<llo_original>
// kernel: bert_forward.11
$region0: #{bert_forward.11}
  #allocation0 [shape = 'u32[]', space=smem, size = 0x4, offset = 0x4, fixed_abs, tag = 'smem constant byte address 0x4 - core index']
  #allocation1 [shape = 'u32[144,128]{1,0:T(1,128)}', space=vmem, size = 0x12000, scoped, tag = 'internal scratch']
  #allocation2 [shape = 'f32[16,96]{1,0:T(8,128)}', space=vmem, size = 0x2000, scoped, tag = 'scratch operand']
  %s0 = inlined_call_operand.vmem [shape: bf16[16,32], index: 0, kind: input, shape index: {}]
  %s1 = inlined_call_operand.vmem [shape: bf16[32,96], index: 1, kind: input, shape index: {}]
  %s2 = inlined_call_operand.vmem [shape: f32[1,96], index: 2, kind: input, shape index: {}]
  %s3 = inlined_call_operand.vmem [shape: bf16[16,96], index: 3, kind: output, shape index: {}]
  %s4 = sld [smem:[#allocation0]]
  $region30: #{bert_forward.11} parent=0
    _
  %s6 = ssub.s32 1, %s4
  %s7 = scalar_select 0, %s6, %s4
  // Predicated region
  $region2: #{bert_forward.11} parent=0 // pred_check
    _
  $region3: #{bert_forward.11} parent=0 // pred_check_branch
    %9 = sbr.rel (0) target = $region5
  $region4: #{bert_forward.11} parent=0 // pred_region
    _
  $region5: #{bert_forward.11} parent=0 // pred_fallthru
    _
  // Predicated region
  $region6: #{bert_forward.11} parent=0 // pred_check
    _
  $region7: #{bert_forward.11} parent=0 // pred_check_branch
    %11 = sbr.rel (0) target = $region9
  $region8: #{bert_forward.11} parent=0 // pred_region
    _
  $region9: #{bert_forward.11} parent=0 // pred_fallthru
    _
  // Predicated region
  $region10: #{bert_forward.11} parent=0 // pred_check
    _
  $region11: #{bert_forward.11} parent=0 // pred_check_branch
    %13 = sbr.rel (0) target = $region13
  $region12: #{bert_forward.11} parent=0 // pred_region
    _
  $region13: #{bert_forward.11} parent=0 // pred_fallthru
    _
  %p15 = scmp.eq.s32.totalorder 0, 0
  // Predicated region
  $region14: #{bert_forward.11} parent=0 // pred_check
    %p16 = pneg %p15
  $region15: #{bert_forward.11} parent=0 // pred_check_branch
    %18 = sbr.rel (%p16) target = $region17
  $region16: #{bert_forward.11} parent=0 // pred_region
    %vm19 = vcmask 785408
    %20 = vst.msk [vmem:[#allocation2] sm:$0xff] %vm19, 0.0
    %21 = vst.msk [vmem:[#allocation2 + $0x8] sm:$0xff] %vm19, 0.0
  $region17: #{bert_forward.11} parent=0 // pred_fallthru
    _
  %v22 = vld [vmem:[#allocation2] sm:$0xff]
  %v23 = vld [vmem:[#allocation2 + $0x8] sm:$0xff]
  %v24 = vld [vmem:[%s0] sm:$0xf]
  %v25 = vld [vmem:[%s0 + $0x4] sm:$0xf]
  %v26 = vld [vmem:[%s1] sm:$0xf]
  %v27 = vld [vmem:[%s1 + $0x4] sm:$0xf]
  %v28 = vld [vmem:[%s1 + $0x8] sm:$0xf]
  %v29 = vld [vmem:[%s1 + $0xc] sm:$0xf]
  %v32 = vunpack.c.l.b16 %v24
  %v33 = vunpack.c.l.b16 %v25
  %v34 = vpack.c.b16 %v33, %v32
  %v39 = vunpack.c.l.b16 %v26
  %v40 = vunpack.c.l.b16 %v27
  %v41 = vunpack.c.l.b16 %v28
  %v42 = vunpack.c.l.b16 %v29
  %v43 = vpack.c.b16 %v40, %v39
  %v44 = vpack.c.b16 %v42, %v41
  %vm47 = vcmask 261120
  %v49 = vsel %vm47, %v34, 0
  %51 = vmatprep.subr.bf16.mxu0 0
  %52 = vmatpush1.bf16.msra.mxu0 %v43
  %53 = vmatprep.subr.bf16.mxu0 0
  %54 = vmatpush1.bf16.msra.mxu0 %v44
  %55 = vmatprep.subr.bf16.mxu0 0
  %56 = vmatpush1.bf16.msra.mxu0 0
  %57 = vmatprep.subr.bf16.mxu0 0
  %58 = vmatpush1.bf16.msra.mxu0 0
  %59 = vmatprep.subr.bf16.mxu0 0
  %60 = vmatpush1.bf16.msra.mxu0 0
  %61 = vmatprep.subr.bf16.mxu0 0
  %62 = vmatpush1.bf16.msra.mxu0 0
  %63 = vmatprep.subr.bf16.mxu0 0
  %64 = vmatpush1.bf16.msra.mxu0 0
  %65 = vmatprep.subr.bf16.mxu0 0
  %66 = vmatpush1.bf16.msra.mxu0 0
  %67 = vmatprep.subr.bf16.mxu0 0
  %68 = vmatpush1.bf16.msra.mxu0 0
  %69 = vmatprep.subr.bf16.mxu0 0
  %70 = vmatpush1.bf16.msra.mxu0 0
  %71 = vmatprep.subr.bf16.mxu0 0
  %72 = vmatpush1.bf16.msra.mxu0 0
  %73 = vmatprep.subr.bf16.mxu0 0
  %74 = vmatpush1.bf16.msra.mxu0 0
  %75 = vmatprep.subr.bf16.mxu0 0
  %76 = vmatpush1.bf16.msra.mxu0 0
  %77 = vmatprep.subr.bf16.mxu0 0
  %78 = vmatpush1.bf16.msra.mxu0 0
  %79 = vmatprep.subr.bf16.mxu0 0
  %80 = vmatpush1.bf16.msra.mxu0 0
  %81 = vmatprep.subr.bf16.mxu0 0
  %82 = vmatpush1.bf16.msra.mxu0 0
  %83 = vmatprep.mubr.bf16.mxu0 0
  %84 = vmatmul.mubr.bf16.gmra.mrb[0].mxu0 %v49
  %v85 = vpop.f32.mrb[0].mxu0
  %v86 = vadd.f32 0.0, %v85
  %v87 = vpop.f32.mrb[0].mxu0
  %v88 = vpop.f32.mrb[0].mxu0
  %v89 = vadd.f32 0.0, %v88
  %v90 = vpop.f32.mrb[0].mxu0
  %91 = vdwg.mxu0
  %v92 = vadd.f32 %v22, %v86
  %v93 = vadd.f32 %v23, %v89
  %vm94 = vcmask 785408
  %95 = vst.msk [vmem:[#allocation2] sm:$0xff] %vm94, %v92
  %96 = vst.msk [vmem:[#allocation2 + $0x8] sm:$0xff] %vm94, %v93
  // Predicated region
  $region18: #{bert_forward.11} parent=0 // pred_check
    %p97 = pneg %p15
  $region19: #{bert_forward.11} parent=0 // pred_check_branch
    %99 = sbr.rel (%p97) target = $region21
  $region20: #{bert_forward.11} parent=0 // pred_region
    %v100 = vld [vmem:[#allocation2] sm:$0xff]
    %v101 = vld [vmem:[#allocation2 + $0x8] sm:$0xff]
    %v102 = vld [vmem:[%s2] sm:$0x1]
    %v104 = vlaneseq
    %v105 = vshrl.u32 %v104, 7
    %v106 = vsub.s32 0, %v105
    %v107 = vrot.slane %v102, %v106
    %v109 = vadd.f32 %v100, %v107
    %v110 = vadd.f32 %v101, %v107
    %v111 = vpack.c.bf16 %v110, %v109
    %v113 = vunpack.c.l.b16 %v111
    %v114 = vunpack.c.h.b16 %v111
    %v115 = vpack.c.b16 %v113, %v113
    %v116 = vpack.c.b16 %v114, %v114
    %vm119 = vcmask 781312
    %120 = vst.msk [vmem:[%s3] sm:$0xf] %vm119, %v115
    %121 = vst.msk [vmem:[%s3 + $0x4] sm:$0xf] %vm119, %v116
  $region21: #{bert_forward.11} parent=0 // pred_fallthru
    _
  // Predicated region
  $region22: #{bert_forward.11} parent=0 // pred_check
    _
  $region23: #{bert_forward.11} parent=0 // pred_check_branch
    %123 = sbr.rel (0) target = $region25
  $region24: #{bert_forward.11} parent=0 // pred_region
    _
  $region25: #{bert_forward.11} parent=0 // pred_fallthru
    _
  // Predicated region
  $region26: #{bert_forward.11} parent=0 // pred_check
    _
  $region27: #{bert_forward.11} parent=0 // pred_check_branch
    %125 = sbr.rel (0) target = $region29
  $region28: #{bert_forward.11} parent=0 // pred_region
    _
  $region29: #{bert_forward.11} parent=0 // pred_fallthru
    _

// kernel: bert_forward.14
$region0: #{bert_forward.14}
  #allocation0 [shape = 'u32[]', space=smem, size = 0x4, offset = 0x4, fixed_abs, tag = 'smem constant byte address 0x4 - core index']
  #allocation1 [shape = 'u32[144,128]{1,0:T(1,128)}', space=vmem, size = 0x12000, scoped, tag = 'internal scratch']
  #allocation2 [shape = 'f32[16,64]{1,0:T(8,128)}', space=vmem, size = 0x2000, scoped, tag = 'scratch operand']
  %s0 = inlined_call_operand.vmem [shape: bf16[16,32], index: 0, kind: input, shape index: {}]
  %s1 = inlined_call_operand.vmem [shape: bf16[32,64], index: 1, kind: input, shape index: {}]
  %s2 = inlined_call_operand.vmem [shape: f32[1,64], index: 2, kind: input, shape index: {}]
  %s3 = inlined_call_operand.vmem [shape: bf16[16,64], index: 3, kind: output, shape index: {}]
  %s4 = sld [smem:[#allocation0]]
  $region30: #{bert_forward.14} parent=0
    _
  %s6 = ssub.s32 1, %s4
  %s7 = scalar_select 0, %s6, %s4
  // Predicated region
  $region2: #{bert_forward.14} parent=0 // pred_check
    _
  $region3: #{bert_forward.14} parent=0 // pred_check_branch
    %9 = sbr.rel (0) target = $region5
  $region4: #{bert_forward.14} parent=0 // pred_region
    _
  $region5: #{bert_forward.14} parent=0 // pred_fallthru
    _
  // Predicated region
  $region6: #{bert_forward.14} parent=0 // pred_check
    _
  $region7: #{bert_forward.14} parent=0 // pred_check_branch
    %11 = sbr.rel (0) target = $region9
  $region8: #{bert_forward.14} parent=0 // pred_region
    _
  $region9: #{bert_forward.14} parent=0 // pred_fallthru
    _
  // Predicated region
  $region10: #{bert_forward.14} parent=0 // pred_check
    _
  $region11: #{bert_forward.14} parent=0 // pred_check_branch
    %13 = sbr.rel (0) target = $region13
  $region12: #{bert_forward.14} parent=0 // pred_region
    _
  $region13: #{bert_forward.14} parent=0 // pred_fallthru
    _
  %p15 = scmp.eq.s32.totalorder 0, 0
  // Predicated region
  $region14: #{bert_forward.14} parent=0 // pred_check
    %p16 = pneg %p15
  $region15: #{bert_forward.14} parent=0 // pred_check_branch
    %18 = sbr.rel (%p16) target = $region17
  $region16: #{bert_forward.14} parent=0 // pred_region
    %vm19 = vcmask 523264
    %20 = vst.msk [vmem:[#allocation2] sm:$0xff] %vm19, 0.0
    %21 = vst.msk [vmem:[#allocation2 + $0x8] sm:$0xff] %vm19, 0.0
  $region17: #{bert_forward.14} parent=0 // pred_fallthru
    _
  %v22 = vld [vmem:[#allocation2] sm:$0xff]
  %v23 = vld [vmem:[#allocation2 + $0x8] sm:$0xff]
  %v24 = vld [vmem:[%s0] sm:$0xf]
  %v25 = vld [vmem:[%s0 + $0x4] sm:$0xf]
  %v26 = vld [vmem:[%s1] sm:$0xf]
  %v27 = vld [vmem:[%s1 + $0x4] sm:$0xf]
  %v28 = vld [vmem:[%s1 + $0x8] sm:$0xf]
  %v29 = vld [vmem:[%s1 + $0xc] sm:$0xf]
  %v32 = vunpack.c.l.b16 %v24
  %v33 = vunpack.c.l.b16 %v25
  %v34 = vpack.c.b16 %v33, %v32
  %v39 = vunpack.c.l.b16 %v26
  %v40 = vunpack.c.l.b16 %v27
  %v41 = vunpack.c.l.b16 %v28
  %v42 = vunpack.c.l.b16 %v29
  %v43 = vpack.c.b16 %v40, %v39
  %v44 = vpack.c.b16 %v42, %v41
  %vm47 = vcmask 261120
  %v49 = vsel %vm47, %v34, 0
  %51 = vmatprep.subr.bf16.mxu0 0
  %52 = vmatpush1.bf16.msra.mxu0 %v43
  %53 = vmatprep.subr.bf16.mxu0 0
  %54 = vmatpush1.bf16.msra.mxu0 %v44
  %55 = vmatprep.subr.bf16.mxu0 0
  %56 = vmatpush1.bf16.msra.mxu0 0
  %57 = vmatprep.subr.bf16.mxu0 0
  %58 = vmatpush1.bf16.msra.mxu0 0
  %59 = vmatprep.subr.bf16.mxu0 0
  %60 = vmatpush1.bf16.msra.mxu0 0
  %61 = vmatprep.subr.bf16.mxu0 0
  %62 = vmatpush1.bf16.msra.mxu0 0
  %63 = vmatprep.subr.bf16.mxu0 0
  %64 = vmatpush1.bf16.msra.mxu0 0
  %65 = vmatprep.subr.bf16.mxu0 0
  %66 = vmatpush1.bf16.msra.mxu0 0
  %67 = vmatprep.subr.bf16.mxu0 0
  %68 = vmatpush1.bf16.msra.mxu0 0
  %69 = vmatprep.subr.bf16.mxu0 0
  %70 = vmatpush1.bf16.msra.mxu0 0
  %71 = vmatprep.subr.bf16.mxu0 0
  %72 = vmatpush1.bf16.msra.mxu0 0
  %73 = vmatprep.subr.bf16.mxu0 0
  %74 = vmatpush1.bf16.msra.mxu0 0
  %75 = vmatprep.subr.bf16.mxu0 0
  %76 = vmatpush1.bf16.msra.mxu0 0
  %77 = vmatprep.subr.bf16.mxu0 0
  %78 = vmatpush1.bf16.msra.mxu0 0
  %79 = vmatprep.subr.bf16.mxu0 0
  %80 = vmatpush1.bf16.msra.mxu0 0
  %81 = vmatprep.subr.bf16.mxu0 0
  %82 = vmatpush1.bf16.msra.mxu0 0
  %83 = vmatprep.mubr.bf16.mxu0 0
  %84 = vmatmul.mubr.bf16.gmra.mrb[0].mxu0 %v49
  %v85 = vpop.f32.mrb[0].mxu0
  %v86 = vadd.f32 0.0, %v85
  %v87 = vpop.f32.mrb[0].mxu0
  %v88 = vpop.f32.mrb[0].mxu0
  %v89 = vadd.f32 0.0, %v88
  %v90 = vpop.f32.mrb[0].mxu0
  %91 = vdwg.mxu0
  %v92 = vadd.f32 %v22, %v86
  %v93 = vadd.f32 %v23, %v89
  %vm94 = vcmask 523264
  %95 = vst.msk [vmem:[#allocation2] sm:$0xff] %vm94, %v92
  %96 = vst.msk [vmem:[#allocation2 + $0x8] sm:$0xff] %vm94, %v93
  // Predicated region
  $region18: #{bert_forward.14} parent=0 // pred_check
    %p97 = pneg %p15
  $region19: #{bert_forward.14} parent=0 // pred_check_branch
    %99 = sbr.rel (%p97) target = $region21
  $region20: #{bert_forward.14} parent=0 // pred_region
    %v100 = vld [vmem:[#allocation2] sm:$0xff]
    %v101 = vld [vmem:[#allocation2 + $0x8] sm:$0xff]
    %v102 = vld [vmem:[%s2] sm:$0x1]
    %v104 = vlaneseq
    %v105 = vshrl.u32 %v104, 7
    %v106 = vsub.s32 0, %v105
    %v107 = vrot.slane %v102, %v106
    %v109 = vadd.f32 %v100, %v107
    %v110 = vadd.f32 %v101, %v107
    %v111 = vmax.f32 %v109, 0.0
    %v112 = vmax.f32 %v110, 0.0
    %v113 = vpack.c.bf16 %v112, %v111
    %v115 = vunpack.c.l.b16 %v113
    %v116 = vunpack.c.h.b16 %v113
    %v117 = vpack.c.b16 %v115, %v115
    %v118 = vpack.c.b16 %v116, %v116
    %vm121 = vcmask 519168
    %122 = vst.msk [vmem:[%s3] sm:$0xf] %vm121, %v117
    %123 = vst.msk [vmem:[%s3 + $0x4] sm:$0xf] %vm121, %v118
  $region21: #{bert_forward.14} parent=0 // pred_fallthru
    _
  // Predicated region
  $region22: #{bert_forward.14} parent=0 // pred_check
    _
  $region23: #{bert_forward.14} parent=0 // pred_check_branch
    %125 = sbr.rel (0) target = $region25
  $region24: #{bert_forward.14} parent=0 // pred_region
    _
  $region25: #{bert_forward.14} parent=0 // pred_fallthru
    _
  // Predicated region
  $region26: #{bert_forward.14} parent=0 // pred_check
    _
  $region27: #{bert_forward.14} parent=0 // pred_check_branch
    %127 = sbr.rel (0) target = $region29
  $region28: #{bert_forward.14} parent=0 // pred_region
    _
  $region29: #{bert_forward.14} parent=0 // pred_fallthru
    _

// kernel: bert_forward.13
$region0: #{bert_forward.13}
  #allocation0 [shape = 'u32[]', space=smem, size = 0x4, offset = 0x4, fixed_abs, tag = 'smem constant byte address 0x4 - core index']
  #allocation1 [shape = 'u32[144,128]{1,0:T(1,128)}', space=vmem, size = 0x12000, scoped, tag = 'internal scratch']
  #allocation2 [shape = 'f32[16,32]{1,0:T(8,128)}', space=vmem, size = 0x2000, scoped, tag = 'scratch operand']
  %s0 = inlined_call_operand.vmem [shape: bf16[16,32], index: 0, kind: input, shape index: {}]
  %s1 = inlined_call_operand.vmem [shape: bf16[32,32], index: 1, kind: input, shape index: {}]
  %s2 = inlined_call_operand.vmem [shape: f32[1,32], index: 2, kind: input, shape index: {}]
  %s3 = inlined_call_operand.vmem [shape: bf16[16,32], index: 3, kind: input, shape index: {}]
  %s4 = inlined_call_operand.vmem [shape: f32[1,32], index: 4, kind: input, shape index: {}]
  %s5 = inlined_call_operand.vmem [shape: f32[1,32], index: 5, kind: input, shape index: {}]
  %s6 = inlined_call_operand.vmem [shape: bf16[16,32], index: 6, kind: output, shape index: {}]
  %s7 = sld [smem:[#allocation0]]
  $region42: #{bert_forward.13} parent=0
    _
  %s9 = ssub.s32 1, %s7
  %s10 = scalar_select 0, %s9, %s7
  // Predicated region
  $region2: #{bert_forward.13} parent=0 // pred_check
    _
  $region3: #{bert_forward.13} parent=0 // pred_check_branch
    %12 = sbr.rel (0) target = $region5
  $region4: #{bert_forward.13} parent=0 // pred_region
    _
  $region5: #{bert_forward.13} parent=0 // pred_fallthru
    _
  // Predicated region
  $region6: #{bert_forward.13} parent=0 // pred_check
    _
  $region7: #{bert_forward.13} parent=0 // pred_check_branch
    %14 = sbr.rel (0) target = $region9
  $region8: #{bert_forward.13} parent=0 // pred_region
    _
  $region9: #{bert_forward.13} parent=0 // pred_fallthru
    _
  // Predicated region
  $region10: #{bert_forward.13} parent=0 // pred_check
    _
  $region11: #{bert_forward.13} parent=0 // pred_check_branch
    %16 = sbr.rel (0) target = $region13
  $region12: #{bert_forward.13} parent=0 // pred_region
    _
  $region13: #{bert_forward.13} parent=0 // pred_fallthru
    _
  // Predicated region
  $region14: #{bert_forward.13} parent=0 // pred_check
    _
  $region15: #{bert_forward.13} parent=0 // pred_check_branch
    %18 = sbr.rel (0) target = $region17
  $region16: #{bert_forward.13} parent=0 // pred_region
    _
  $region17: #{bert_forward.13} parent=0 // pred_fallthru
    _
  // Predicated region
  $region18: #{bert_forward.13} parent=0 // pred_check
    _
  $region19: #{bert_forward.13} parent=0 // pred_check_branch
    %20 = sbr.rel (0) target = $region21
  $region20: #{bert_forward.13} parent=0 // pred_region
    _
  $region21: #{bert_forward.13} parent=0 // pred_fallthru
    _
  // Predicated region
  $region22: #{bert_forward.13} parent=0 // pred_check
    _
  $region23: #{bert_forward.13} parent=0 // pred_check_branch
    %22 = sbr.rel (0) target = $region25
  $region24: #{bert_forward.13} parent=0 // pred_region
    _
  $region25: #{bert_forward.13} parent=0 // pred_fallthru
    _
  %p24 = scmp.eq.s32.totalorder 0, 0
  // Predicated region
  $region26: #{bert_forward.13} parent=0 // pred_check
    %p25 = pneg %p24
  $region27: #{bert_forward.13} parent=0 // pred_check_branch
    %27 = sbr.rel (%p25) target = $region29
  $region28: #{bert_forward.13} parent=0 // pred_region
    %vm28 = vcmask 261120
    %29 = vst.msk [vmem:[#allocation2] sm:$0xff] %vm28, 0.0
    %30 = vst.msk [vmem:[#allocation2 + $0x8] sm:$0xff] %vm28, 0.0
  $region29: #{bert_forward.13} parent=0 // pred_fallthru
    _
  %v31 = vld [vmem:[#allocation2] sm:$0xff]
  %v32 = vld [vmem:[#allocation2 + $0x8] sm:$0xff]
  %v33 = vld [vmem:[%s0] sm:$0xf]
  %v34 = vld [vmem:[%s0 + $0x4] sm:$0xf]
  %v35 = vld [vmem:[%s1] sm:$0xf]
  %v36 = vld [vmem:[%s1 + $0x4] sm:$0xf]
  %v37 = vld [vmem:[%s1 + $0x8] sm:$0xf]
  %v38 = vld [vmem:[%s1 + $0xc] sm:$0xf]
  %v41 = vunpack.c.l.b16 %v33
  %v42 = vunpack.c.l.b16 %v34
  %v43 = vpack.c.b16 %v42, %v41
  %v48 = vunpack.c.l.b16 %v35
  %v49 = vunpack.c.l.b16 %v36
  %v50 = vunpack.c.l.b16 %v37
  %v51 = vunpack.c.l.b16 %v38
  %v52 = vpack.c.b16 %v49, %v48
  %v53 = vpack.c.b16 %v51, %v50
  %vm56 = vcmask 261120
  %v58 = vsel %vm56, %v43, 0
  %60 = vmatprep.subr.bf16.mxu0 0
  %61 = vmatpush1.bf16.msra.mxu0 %v52
  %62 = vmatprep.subr.bf16.mxu0 0
  %63 = vmatpush1.bf16.msra.mxu0 %v53
  %64 = vmatprep.subr.bf16.mxu0 0
  %65 = vmatpush1.bf16.msra.mxu0 0
  %66 = vmatprep.subr.bf16.mxu0 0
  %67 = vmatpush1.bf16.msra.mxu0 0
  %68 = vmatprep.subr.bf16.mxu0 0
  %69 = vmatpush1.bf16.msra.mxu0 0
  %70 = vmatprep.subr.bf16.mxu0 0
  %71 = vmatpush1.bf16.msra.mxu0 0
  %72 = vmatprep.subr.bf16.mxu0 0
  %73 = vmatpush1.bf16.msra.mxu0 0
  %74 = vmatprep.subr.bf16.mxu0 0
  %75 = vmatpush1.bf16.msra.mxu0 0
  %76 = vmatprep.subr.bf16.mxu0 0
  %77 = vmatpush1.bf16.msra.mxu0 0
  %78 = vmatprep.subr.bf16.mxu0 0
  %79 = vmatpush1.bf16.msra.mxu0 0
  %80 = vmatprep.subr.bf16.mxu0 0
  %81 = vmatpush1.bf16.msra.mxu0 0
  %82 = vmatprep.subr.bf16.mxu0 0
  %83 = vmatpush1.bf16.msra.mxu0 0
  %84 = vmatprep.subr.bf16.mxu0 0
  %85 = vmatpush1.bf16.msra.mxu0 0
  %86 = vmatprep.subr.bf16.mxu0 0
  %87 = vmatpush1.bf16.msra.mxu0 0
  %88 = vmatprep.subr.bf16.mxu0 0
  %89 = vmatpush1.bf16.msra.mxu0 0
  %90 = vmatprep.subr.bf16.mxu0 0
  %91 = vmatpush1.bf16.msra.mxu0 0
  %92 = vmatprep.mubr.bf16.mxu0 0
  %93 = vmatmul.mubr.bf16.gmra.mrb[0].mxu0 %v58
  %v94 = vpop.f32.mrb[0].mxu0
  %v95 = vadd.f32 0.0, %v94
  %v96 = vpop.f32.mrb[0].mxu0
  %v97 = vpop.f32.mrb[0].mxu0
  %v98 = vadd.f32 0.0, %v97
  %v99 = vpop.f32.mrb[0].mxu0
  %100 = vdwg.mxu0
  %v101 = vadd.f32 %v31, %v95
  %v102 = vadd.f32 %v32, %v98
  %103 = vst.msk [vmem:[#allocation2] sm:$0xff] %vm56, %v101
  %104 = vst.msk [vmem:[#allocation2 + $0x8] sm:$0xff] %vm56, %v102
  // Predicated region
  $region30: #{bert_forward.13} parent=0 // pred_check
    %p105 = pneg %p24
  $region31: #{bert_forward.13} parent=0 // pred_check_branch
    %107 = sbr.rel (%p105) target = $region33
  $region32: #{bert_forward.13} parent=0 // pred_region
    %v108 = vld [vmem:[#allocation2] sm:$0xff]
    %v109 = vld [vmem:[#allocation2 + $0x8] sm:$0xff]
    %v110 = vld [vmem:[%s2] sm:$0x1]
    %v112 = vlaneseq
    %v113 = vshrl.u32 %v112, 7
    %v114 = vsub.s32 0, %v113
    %v115 = vrot.slane %v110, %v114
    %v117 = vadd.f32 %v108, %v115
    %v118 = vadd.f32 %v109, %v115
    %v119 = vld [vmem:[%s3] sm:$0xf]
    %v120 = vld [vmem:[%s3 + $0x4] sm:$0xf]
    %v121 = vunpack.c.l.bf16 %v119
    %v122 = vunpack.c.l.bf16 %v120
    %v123 = vadd.f32 %v117, %v121
    %v124 = vadd.f32 %v118, %v122
    %v125 = vsel %vm56, %v123, 0.0
    %126 = vadd.xlane.f32.xlu0 %v125
    %v127 = vpop.xlane.xlu0 %126
    %v128 = vsel %vm56, %v124, 0.0
    %129 = vadd.xlane.f32.xlu0 %v128
    %v130 = vpop.xlane.xlu0 %129
    %v131 = vrcp.pop 32.0
    %v132 = vmul.f32 %v127, %v131
    %v133 = vmul.f32 %v130, %v131
    %v134 = vsub.f32 %v123, %v132
    %v135 = vsub.f32 %v124, %v133
    %v136 = vmul.f32 %v134, %v134
    %v137 = vmul.f32 %v135, %v135
    %v138 = vsel %vm56, %v136, 0.0
    %139 = vadd.xlane.f32.xlu0 %v138
    %v140 = vpop.xlane.xlu0 %139
    %v141 = vsel %vm56, %v137, 0.0
    %142 = vadd.xlane.f32.xlu0 %v141
    %v143 = vpop.xlane.xlu0 %142
    %v144 = vmul.f32 %v140, %v131
    %v145 = vmul.f32 %v143, %v131
    %v146 = vadd.f32 %v144, 1e-05
    %v147 = vadd.f32 %v145, 1e-05
    %v148 = vrsqrt.pop %v146
    %v149 = vrsqrt.pop %v147
    %v150 = vmul.f32 %v134, %v148
    %v151 = vmul.f32 %v135, %v149
    %v152 = vld [vmem:[%s4] sm:$0x1]
    %v154 = vlaneseq
    %v155 = vshrl.u32 %v154, 7
    %v156 = vsub.s32 0, %v155
    %v157 = vrot.slane %v152, %v156
    %v159 = vmul.f32 %v150, %v157
    %v160 = vmul.f32 %v151, %v157
    %v161 = vld [vmem:[%s5] sm:$0x1]
    %v163 = vlaneseq
    %v164 = vshrl.u32 %v163, 7
    %v165 = vsub.s32 0, %v164
    %v166 = vrot.slane %v161, %v165
    %v168 = vadd.f32 %v159, %v166
    %v169 = vadd.f32 %v160, %v166
    %v170 = vpack.c.bf16 %v169, %v168
    %v172 = vunpack.c.l.b16 %v170
    %v173 = vunpack.c.h.b16 %v170
    %v174 = vpack.c.b16 %v172, %v172
    %v175 = vpack.c.b16 %v173, %v173
    %vm178 = vcmask 257024
    %179 = vst.msk [vmem:[%s6] sm:$0xf] %vm178, %v174
    %180 = vst.msk [vmem:[%s6 + $0x4] sm:$0xf] %vm178, %v175
  $region33: #{bert_forward.13} parent=0 // pred_fallthru
    _
  // Predicated region
  $region34: #{bert_forward.13} parent=0 // pred_check
    _
  $region35: #{bert_forward.13} parent=0 // pred_check_branch
    %182 = sbr.rel (0) target = $region37
  $region36: #{bert_forward.13} parent=0 // pred_region
    _
  $region37: #{bert_forward.13} parent=0 // pred_fallthru
    _
  // Predicated region
  $region38: #{bert_forward.13} parent=0 // pred_check
    _
  $region39: #{bert_forward.13} parent=0 // pred_check_branch
    %184 = sbr.rel (0) target = $region41
  $region40: #{bert_forward.13} parent=0 // pred_region
    _
  $region41: #{bert_forward.13} parent=0 // pred_fallthru
    _

// kernel: bert_forward.21
$region0: #{bert_forward.21}
  #allocation0 [shape = 'u32[]', space=smem, size = 0x4, offset = 0x4, fixed_abs, tag = 'smem constant byte address 0x4 - core index']
  #allocation1 [shape = 'u32[144,128]{1,0:T(1,128)}', space=vmem, size = 0x12000, scoped, tag = 'internal scratch']
  #allocation2 [shape = 'f32[2,32]{1,0:T(2,128)}', space=vmem, size = 0x400, scoped, tag = 'scratch operand']
  %s0 = inlined_call_operand.vmem [shape: bf16[2,32], index: 0, kind: input, shape index: {}]
  %s1 = inlined_call_operand.vmem [shape: bf16[32,32], index: 1, kind: input, shape index: {}]
  %s2 = inlined_call_operand.vmem [shape: f32[1,32], index: 2, kind: input, shape index: {}]
  %s3 = inlined_call_operand.hbm [shape: bf16[2,32], index: 3, kind: output, shape index: {}]
  %s4 = sld [smem:[#allocation0]]
  $region30: #{bert_forward.21} parent=0
    _
  %s6 = ssub.s32 1, %s4
  %s7 = scalar_select 0, %s6, %s4
  $region1: #{bert_forward.21} parent=0
    #allocation3 [shape = 'u8[512]{0}', space=vmem, size = 0x400, scoped, tag = 'output window, operand 0, single buffered']
    #allocation4 [shape = 's32[1]{0}', space=sflag, size = 0x4, scoped, tag = 'scoped memory for bert_forward.21']
    %8 = vsyncpa [#allocation4], 0
    // Predicated region
    $region2: #{bert_forward.21} parent=1 // pred_check
      _
    $region3: #{bert_forward.21} parent=1 // pred_check_branch
      %10 = sbr.rel (0) target = $region5
    $region4: #{bert_forward.21} parent=1 // pred_region
      _
    $region5: #{bert_forward.21} parent=1 // pred_fallthru
      _
    // Predicated region
    $region6: #{bert_forward.21} parent=1 // pred_check
      _
    $region7: #{bert_forward.21} parent=1 // pred_check_branch
      %12 = sbr.rel (0) target = $region9
    $region8: #{bert_forward.21} parent=1 // pred_region
      _
    $region9: #{bert_forward.21} parent=1 // pred_fallthru
      _
    // Predicated region
    $region10: #{bert_forward.21} parent=1 // pred_check
      _
    $region11: #{bert_forward.21} parent=1 // pred_check_branch
      %14 = sbr.rel (0) target = $region13
    $region12: #{bert_forward.21} parent=1 // pred_region
      _
    $region13: #{bert_forward.21} parent=1 // pred_fallthru
      _
    %p16 = scmp.eq.s32.totalorder 0, 0
    // Predicated region
    $region14: #{bert_forward.21} parent=1 // pred_check
      %p17 = pneg %p16
    $region15: #{bert_forward.21} parent=1 // pred_check_branch
      %19 = sbr.rel (%p17) target = $region17
    $region16: #{bert_forward.21} parent=1 // pred_region
      %vm20 = vcmask 254976
      %21 = vst.msk [vmem:[#allocation2] sm:$0x3] %vm20, 0.0
    $region17: #{bert_forward.21} parent=1 // pred_fallthru
      _
    %v22 = vld [vmem:[#allocation2] sm:$0x3]
    %v23 = vld [vmem:[%s0] sm:$0x1]
    %v24 = vld [vmem:[%s1] sm:$0xf]
    %v25 = vld [vmem:[%s1 + $0x4] sm:$0xf]
    %v26 = vld [vmem:[%s1 + $0x8] sm:$0xf]
    %v27 = vld [vmem:[%s1 + $0xc] sm:$0xf]
    %v32 = vunpack.c.l.b16 %v24
    %v33 = vunpack.c.l.b16 %v25
    %v34 = vunpack.c.l.b16 %v26
    %v35 = vunpack.c.l.b16 %v27
    %v36 = vpack.c.b16 %v33, %v32
    %v37 = vpack.c.b16 %v35, %v34
    %vm40 = vcmask 261120
    %v42 = vsel %vm40, %v23, 0
    %44 = vmatprep.subr.bf16.mxu0 0
    %45 = vmatpush1.bf16.msra.mxu0 %v36
    %46 = vmatprep.subr.bf16.mxu0 0
    %47 = vmatpush1.bf16.msra.mxu0 %v37
    %48 = vmatprep.subr.bf16.mxu0 0
    %49 = vmatpush1.bf16.msra.mxu0 0
    %50 = vmatprep.subr.bf16.mxu0 0
    %51 = vmatpush1.bf16.msra.mxu0 0
    %52 = vmatprep.subr.bf16.mxu0 0
    %53 = vmatpush1.bf16.msra.mxu0 0
    %54 = vmatprep.subr.bf16.mxu0 0
    %55 = vmatpush1.bf16.msra.mxu0 0
    %56 = vmatprep.subr.bf16.mxu0 0
    %57 = vmatpush1.bf16.msra.mxu0 0
    %58 = vmatprep.subr.bf16.mxu0 0
    %59 = vmatpush1.bf16.msra.mxu0 0
    %60 = vmatprep.subr.bf16.mxu0 0
    %61 = vmatpush1.bf16.msra.mxu0 0
    %62 = vmatprep.subr.bf16.mxu0 0
    %63 = vmatpush1.bf16.msra.mxu0 0
    %64 = vmatprep.subr.bf16.mxu0 0
    %65 = vmatpush1.bf16.msra.mxu0 0
    %66 = vmatprep.subr.bf16.mxu0 0
    %67 = vmatpush1.bf16.msra.mxu0 0
    %68 = vmatprep.subr.bf16.mxu0 0
    %69 = vmatpush1.bf16.msra.mxu0 0
    %70 = vmatprep.subr.bf16.mxu0 0
    %71 = vmatpush1.bf16.msra.mxu0 0
    %72 = vmatprep.subr.bf16.mxu0 0
    %73 = vmatpush1.bf16.msra.mxu0 0
    %74 = vmatprep.subr.bf16.mxu0 0
    %75 = vmatpush1.bf16.msra.mxu0 0
    %76 = vmatprep.mubr.bf16.mxu0 0
    %77 = vmatmul.mubr.bf16.gmra.mrb[0].mxu0 %v42
    %v78 = vpop.f32.mrb[0].mxu0
    %v79 = vadd.f32 0.0, %v78
    %v80 = vpop.f32.mrb[0].mxu0
    %v81 = vpop.f32.mrb[0].mxu0
    %v82 = vpop.f32.mrb[0].mxu0
    %83 = vdwg.mxu0
    %v84 = vadd.f32 %v22, %v79
    %vm85 = vcmask 254976
    %86 = vst.msk [vmem:[#allocation2] sm:$0x3] %vm85, %v84
    // Predicated region
    $region18: #{bert_forward.21} parent=1 // pred_check
      %p87 = pneg %p16
    $region19: #{bert_forward.21} parent=1 // pred_check_branch
      %89 = sbr.rel (%p87) target = $region21
    $region20: #{bert_forward.21} parent=1 // pred_region
      %v90 = vld [vmem:[#allocation2] sm:$0x3]
      %v91 = vld [vmem:[%s2] sm:$0x1]
      %v93 = vlaneseq
      %v94 = vshrl.u32 %v93, 7
      %v95 = vsub.s32 0, %v94
      %v96 = vrot.slane %v91, %v95
      %v98 = vadd.f32 %v90, %v96
      %v99 = vtanh.pop %v98
      %v100 = vpack.c.bf16 %v99, %v99
      %vm101 = vcmask 253952
      %102 = vst.msk [vmem:[#allocation3] sm:$0x1] %vm101, %v100
    $region21: #{bert_forward.21} parent=1 // pred_fallthru
      _
    // Predicated region
    $region22: #{bert_forward.21} parent=1 // pred_check
      _
    $region23: #{bert_forward.21} parent=1 // pred_check_branch
      %104 = sbr.rel (0) target = $region25
    $region24: #{bert_forward.21} parent=1 // pred_region
      %s106 = ssub.s32 16, 16
      %107 = vsyncadd [#allocation4], %s106
      %s109 = sshll.u32 [#allocation3], 4
      %s110 = int_to_ptr.vmem [resolvable:$true] %s109
      %112 = dma.vmem_to_hbm [thread:$0]  %s110, 16, %s3, [#allocation4]
    $region25: #{bert_forward.21} parent=1 // pred_fallthru
      _
    // Predicated region
    $region26: #{bert_forward.21} parent=1 // pred_check
      _
    $region27: #{bert_forward.21} parent=1 // pred_check_branch
      %114 = sbr.rel (0) target = $region29
    $region28: #{bert_forward.21} parent=1 // pred_region
      %115 = dma.done [#allocation4], 16
    $region29: #{bert_forward.21} parent=1 // pred_fallthru
      _
    %116 = vsyncpa [#allocation4], 1

// kernel: bert_forward.15
$region0: #{bert_forward.15}
  #allocation0 [shape = 'u32[]', space=smem, size = 0x4, offset = 0x4, fixed_abs, tag = 'smem constant byte address 0x4 - core index']
  #allocation1 [shape = 'u32[144,128]{1,0:T(1,128)}', space=vmem, size = 0x12000, scoped, tag = 'internal scratch']
  #allocation2 [shape = 'f32[16,32]{1,0:T(8,128)}', space=vmem, size = 0x2000, scoped, tag = 'scratch operand']
  %s0 = inlined_call_operand.vmem [shape: bf16[16,64], index: 0, kind: input, shape index: {}]
  %s1 = inlined_call_operand.vmem [shape: bf16[64,32], index: 1, kind: input, shape index: {}]
  %s2 = inlined_call_operand.vmem [shape: f32[1,32], index: 2, kind: input, shape index: {}]
  %s3 = inlined_call_operand.vmem [shape: bf16[16,32], index: 3, kind: input, shape index: {}]
  %s4 = inlined_call_operand.vmem [shape: f32[1,32], index: 4, kind: input, shape index: {}]
  %s5 = inlined_call_operand.vmem [shape: f32[1,32], index: 5, kind: input, shape index: {}]
  %s6 = inlined_call_operand.vmem [shape: bf16[16,32], index: 6, kind: output, shape index: {}]
  %s7 = sld [smem:[#allocation0]]
  $region42: #{bert_forward.15} parent=0
    _
  %s9 = ssub.s32 1, %s7
  %s10 = scalar_select 0, %s9, %s7
  // Predicated region
  $region2: #{bert_forward.15} parent=0 // pred_check
    _
  $region3: #{bert_forward.15} parent=0 // pred_check_branch
    %12 = sbr.rel (0) target = $region5
  $region4: #{bert_forward.15} parent=0 // pred_region
    _
  $region5: #{bert_forward.15} parent=0 // pred_fallthru
    _
  // Predicated region
  $region6: #{bert_forward.15} parent=0 // pred_check
    _
  $region7: #{bert_forward.15} parent=0 // pred_check_branch
    %14 = sbr.rel (0) target = $region9
  $region8: #{bert_forward.15} parent=0 // pred_region
    _
  $region9: #{bert_forward.15} parent=0 // pred_fallthru
    _
  // Predicated region
  $region10: #{bert_forward.15} parent=0 // pred_check
    _
  $region11: #{bert_forward.15} parent=0 // pred_check_branch
    %16 = sbr.rel (0) target = $region13
  $region12: #{bert_forward.15} parent=0 // pred_region
    _
  $region13: #{bert_forward.15} parent=0 // pred_fallthru
    _
  // Predicated region
  $region14: #{bert_forward.15} parent=0 // pred_check
    _
  $region15: #{bert_forward.15} parent=0 // pred_check_branch
    %18 = sbr.rel (0) target = $region17
  $region16: #{bert_forward.15} parent=0 // pred_region
    _
  $region17: #{bert_forward.15} parent=0 // pred_fallthru
    _
  // Predicated region
  $region18: #{bert_forward.15} parent=0 // pred_check
    _
  $region19: #{bert_forward.15} parent=0 // pred_check_branch
    %20 = sbr.rel (0) target = $region21
  $region20: #{bert_forward.15} parent=0 // pred_region
    _
  $region21: #{bert_forward.15} parent=0 // pred_fallthru
    _
  // Predicated region
  $region22: #{bert_forward.15} parent=0 // pred_check
    _
  $region23: #{bert_forward.15} parent=0 // pred_check_branch
    %22 = sbr.rel (0) target = $region25
  $region24: #{bert_forward.15} parent=0 // pred_region
    _
  $region25: #{bert_forward.15} parent=0 // pred_fallthru
    _
  %p24 = scmp.eq.s32.totalorder 0, 0
  // Predicated region
  $region26: #{bert_forward.15} parent=0 // pred_check
    %p25 = pneg %p24
  $region27: #{bert_forward.15} parent=0 // pred_check_branch
    %27 = sbr.rel (%p25) target = $region29
  $region28: #{bert_forward.15} parent=0 // pred_region
    %vm28 = vcmask 261120
    %29 = vst.msk [vmem:[#allocation2] sm:$0xff] %vm28, 0.0
    %30 = vst.msk [vmem:[#allocation2 + $0x8] sm:$0xff] %vm28, 0.0
  $region29: #{bert_forward.15} parent=0 // pred_fallthru
    _
  %v31 = vld [vmem:[#allocation2] sm:$0xff]
  %v32 = vld [vmem:[#allocation2 + $0x8] sm:$0xff]
  %v33 = vld [vmem:[%s0] sm:$0xf]
  %v34 = vld [vmem:[%s0 + $0x4] sm:$0xf]
  %v35 = vld [vmem:[%s1] sm:$0xf]
  %v36 = vld [vmem:[%s1 + $0x4] sm:$0xf]
  %v37 = vld [vmem:[%s1 + $0x8] sm:$0xf]
  %v38 = vld [vmem:[%s1 + $0xc] sm:$0xf]
  %v39 = vld [vmem:[%s1 + $0x10] sm:$0xf]
  %v40 = vld [vmem:[%s1 + $0x14] sm:$0xf]
  %v41 = vld [vmem:[%s1 + $0x18] sm:$0xf]
  %v42 = vld [vmem:[%s1 + $0x1c] sm:$0xf]
  %v45 = vunpack.c.l.b16 %v33
  %v46 = vunpack.c.l.b16 %v34
  %v47 = vpack.c.b16 %v46, %v45
  %v56 = vunpack.c.l.b16 %v35
  %v57 = vunpack.c.l.b16 %v36
  %v58 = vunpack.c.l.b16 %v37
  %v59 = vunpack.c.l.b16 %v38
  %v60 = vunpack.c.l.b16 %v39
  %v61 = vunpack.c.l.b16 %v40
  %v62 = vunpack.c.l.b16 %v41
  %v63 = vunpack.c.l.b16 %v42
  %v64 = vpack.c.b16 %v57, %v56
  %v65 = vpack.c.b16 %v59, %v58
  %v66 = vpack.c.b16 %v61, %v60
  %v67 = vpack.c.b16 %v63, %v62
  %vm72 = vcmask 523264
  %v74 = vsel %vm72, %v47, 0
  %76 = vmatprep.subr.bf16.mxu0 0
  %77 = vmatpush1.bf16.msra.mxu0 %v64
  %78 = vmatprep.subr.bf16.mxu0 0
  %79 = vmatpush1.bf16.msra.mxu0 %v65
  %80 = vmatprep.subr.bf16.mxu0 0
  %81 = vmatpush1.bf16.msra.mxu0 %v66
  %82 = vmatprep.subr.bf16.mxu0 0
  %83 = vmatpush1.bf16.msra.mxu0 %v67
  %84 = vmatprep.subr.bf16.mxu0 0
  %85 = vmatpush1.bf16.msra.mxu0 0
  %86 = vmatprep.subr.bf16.mxu0 0
  %87 = vmatpush1.bf16.msra.mxu0 0
  %88 = vmatprep.subr.bf16.mxu0 0
  %89 = vmatpush1.bf16.msra.mxu0 0
  %90 = vmatprep.subr.bf16.mxu0 0
  %91 = vmatpush1.bf16.msra.mxu0 0
  %92 = vmatprep.subr.bf16.mxu0 0
  %93 = vmatpush1.bf16.msra.mxu0 0
  %94 = vmatprep.subr.bf16.mxu0 0
  %95 = vmatpush1.bf16.msra.mxu0 0
  %96 = vmatprep.subr.bf16.mxu0 0
  %97 = vmatpush1.bf16.msra.mxu0 0
  %98 = vmatprep.subr.bf16.mxu0 0
  %99 = vmatpush1.bf16.msra.mxu0 0
  %100 = vmatprep.subr.bf16.mxu0 0
  %101 = vmatpush1.bf16.msra.mxu0 0
  %102 = vmatprep.subr.bf16.mxu0 0
  %103 = vmatpush1.bf16.msra.mxu0 0
  %104 = vmatprep.subr.bf16.mxu0 0
  %105 = vmatpush1.bf16.msra.mxu0 0
  %106 = vmatprep.subr.bf16.mxu0 0
  %107 = vmatpush1.bf16.msra.mxu0 0
  %108 = vmatprep.mubr.bf16.mxu0 0
  %109 = vmatmul.mubr.bf16.gmra.mrb[0].mxu0 %v74
  %v110 = vpop.f32.mrb[0].mxu0
  %v111 = vadd.f32 0.0, %v110
  %v112 = vpop.f32.mrb[0].mxu0
  %v113 = vpop.f32.mrb[0].mxu0
  %v114 = vadd.f32 0.0, %v113
  %v115 = vpop.f32.mrb[0].mxu0
  %116 = vdwg.mxu0
  %v117 = vadd.f32 %v31, %v111
  %v118 = vadd.f32 %v32, %v114
  %vm119 = vcmask 261120
  %120 = vst.msk [vmem:[#allocation2] sm:$0xff] %vm119, %v117
  %121 = vst.msk [vmem:[#allocation2 + $0x8] sm:$0xff] %vm119, %v118
  // Predicated region
  $region30: #{bert_forward.15} parent=0 // pred_check
    %p122 = pneg %p24
  $region31: #{bert_forward.15} parent=0 // pred_check_branch
    %124 = sbr.rel (%p122) target = $region33
  $region32: #{bert_forward.15} parent=0 // pred_region
    %v125 = vld [vmem:[#allocation2] sm:$0xff]
    %v126 = vld [vmem:[#allocation2 + $0x8] sm:$0xff]
    %v127 = vld [vmem:[%s2] sm:$0x1]
    %v129 = vlaneseq
    %v130 = vshrl.u32 %v129, 7
    %v131 = vsub.s32 0, %v130
    %v132 = vrot.slane %v127, %v131
    %v134 = vadd.f32 %v125, %v132
    %v135 = vadd.f32 %v126, %v132
    %v136 = vld [vmem:[%s3] sm:$0xf]
    %v137 = vld [vmem:[%s3 + $0x4] sm:$0xf]
    %v138 = vunpack.c.l.bf16 %v136
    %v139 = vunpack.c.l.bf16 %v137
    %v140 = vadd.f32 %v134, %v138
    %v141 = vadd.f32 %v135, %v139
    %v142 = vsel %vm119, %v140, 0.0
    %143 = vadd.xlane.f32.xlu0 %v142
    %v144 = vpop.xlane.xlu0 %143
    %v145 = vsel %vm119, %v141, 0.0
    %146 = vadd.xlane.f32.xlu0 %v145
    %v147 = vpop.xlane.xlu0 %146
    %v148 = vrcp.pop 32.0
    %v149 = vmul.f32 %v144, %v148
    %v150 = vmul.f32 %v147, %v148
    %v151 = vsub.f32 %v140, %v149
    %v152 = vsub.f32 %v141, %v150
    %v153 = vmul.f32 %v151, %v151
    %v154 = vmul.f32 %v152, %v152
    %v155 = vsel %vm119, %v153, 0.0
    %156 = vadd.xlane.f32.xlu0 %v155
    %v157 = vpop.xlane.xlu0 %156
    %v158 = vsel %vm119, %v154, 0.0
    %159 = vadd.xlane.f32.xlu0 %v158
    %v160 = vpop.xlane.xlu0 %159
    %v161 = vmul.f32 %v157, %v148
    %v162 = vmul.f32 %v160, %v148
    %v163 = vadd.f32 %v161, 1e-05
    %v164 = vadd.f32 %v162, 1e-05
    %v165 = vrsqrt.pop %v163
    %v166 = vrsqrt.pop %v164
    %v167 = vmul.f32 %v151, %v165
    %v168 = vmul.f32 %v152, %v166
    %v169 = vld [vmem:[%s4] sm:$0x1]
    %v171 = vlaneseq
    %v172 = vshrl.u32 %v171, 7
    %v173 = vsub.s32 0, %v172
    %v174 = vrot.slane %v169, %v173
    %v176 = vmul.f32 %v167, %v174
    %v177 = vmul.f32 %v168, %v174
    %v178 = vld [vmem:[%s5] sm:$0x1]
    %v180 = vlaneseq
    %v181 = vshrl.u32 %v180, 7
    %v182 = vsub.s32 0, %v181
    %v183 = vrot.slane %v178, %v182
    %v185 = vadd.f32 %v176, %v183
    %v186 = vadd.f32 %v177, %v183
    %v187 = vpack.c.bf16 %v186, %v185
    %v189 = vunpack.c.l.b16 %v187
    %v190 = vunpack.c.h.b16 %v187
    %v191 = vpack.c.b16 %v189, %v189
    %v192 = vpack.c.b16 %v190, %v190
    %vm195 = vcmask 257024
    %196 = vst.msk [vmem:[%s6] sm:$0xf] %vm195, %v191
    %197 = vst.msk [vmem:[%s6 + $0x4] sm:$0xf] %vm195, %v192
  $region33: #{bert_forward.15} parent=0 // pred_fallthru
    _
  // Predicated region
  $region34: #{bert_forward.15} parent=0 // pred_check
    _
  $region35: #{bert_forward.15} parent=0 // pred_check_branch
    %199 = sbr.rel (0) target = $region37
  $region36: #{bert_forward.15} parent=0 // pred_region
    _
  $region37: #{bert_forward.15} parent=0 // pred_fallthru
    _
  // Predicated region
  $region38: #{bert_forward.15} parent=0 // pred_check
    _
  $region39: #{bert_forward.15} parent=0 // pred_check_branch
    %201 = sbr.rel (0) target = $region41
  $region40: #{bert_forward.15} parent=0 // pred_region
    _
  $region41: #{bert_forward.15} parent=0 // pred_fallthru
    _

// kernel: bert_forward.12
$region0: #{bert_forward.12}
  #allocation0 [shape = 'u32[]', space=smem, size = 0x4, offset = 0x4, fixed_abs, tag = 'smem constant byte address 0x4 - core index']
  #allocation1 [shape = 'u32[144,128]{1,0:T(1,128)}', space=vmem, size = 0x12000, scoped, tag = 'internal scratch']
  #allocation2 [shape = 'f32[4,8,1]{2,1,0:T(8,128)}', space=vmem, size = 0x4000, scoped, tag = 'scratch operand']
  #allocation3 [shape = 'f32[4,8,1]{2,1,0:T(8,128)}', space=vmem, size = 0x4000, scoped, tag = 'scratch operand']
  #allocation4 [shape = 'f32[4,8,8]{2,1,0:T(8,128)}', space=vmem, size = 0x4000, scoped, tag = 'scratch operand']
  %s0 = inlined_call_operand.vmem [shape: bf16[2,8,3,4,8], index: 0, kind: input, shape index: {}, may-alias: {0,1,2}]
  %s1 = inlined_call_operand.vmem [shape: bf16[2,8,3,4,8], index: 1, kind: input, shape index: {}, may-alias: {0,1,2}]
  %s2 = inlined_call_operand.vmem [shape: bf16[2,8,3,4,8], index: 2, kind: input, shape index: {}, may-alias: {0,1,2}]
  %s3 = inlined_call_operand.vmem [shape: f32[2,1,8], index: 3, kind: input, shape index: {}]
  %s4 = inlined_call_operand.vmem [shape: bf16[2,8,32], index: 4, kind: output, shape index: {}]
  %s5 = sld [smem:[#allocation0]]
  $region180: #{bert_forward.12} parent=0
    _
  %s7 = ssub.s32 1, %s5
  %s8 = scalar_select 0, %s7, %s5
  $region1: #{bert_forward.12} parent=0
    #allocation5 [shape = 'u8[16384]{0}', space=vmem, size = 0x4000, scoped, tag = 'input window, operand 0']
    #allocation6 [shape = 'u8[16384]{0}', space=vmem, size = 0x4000, scoped, tag = 'input window, operand 1']
    #allocation7 [shape = 'u8[16384]{0}', space=vmem, size = 0x4000, scoped, tag = 'input window, operand 2']
    loop: start=0, step=1, limit=4
    $region2: #{bert_forward.12} parent=1 // loop_pre_header
      _
    $region3: #{bert_forward.12} parent=1 // loop_header
      %s10 = sphi 0, %s14
      %p11 = scmp.ge.s32.totalorder %s10, 4
      %s17 = sphi 0, %s43
      %s18 = sphi 0, %s39
      %s19 = sphi 0, %s35
      %s20 = sphi 0, %s31
      %s21 = sphi 0, %s17
      %s22 = sphi 0, %s18
      %s23 = sphi 0, %s19
      %s24 = sphi 0, %s20
      %s25 = sphi 0, %s21
      %s26 = sphi 0, %s22
      %s27 = sphi 0, %s23
      %s28 = sphi 0, %s24
      %s50 = sphi 0, %s52
      %s53 = sphi 0, %s50
      %s54 = sphi 0, %s53
      %s70 = sphi 0, %s54
      %s80 = sphi 0, %s82
      %s83 = sphi 0, %s80
      %s84 = sphi 0, %s83
      %s100 = sphi 0, %s84
      %s110 = sphi 0, %s112
      %s113 = sphi 0, %s110
      %s114 = sphi 0, %s113
      %s130 = sphi 0, %s114
      %s138 = sphi 0, %s140
      %s141 = sphi 0, %s138
      %s142 = sphi 0, %s141
      %s158 = sphi 0, %s142
      %s168 = sphi 0, %s170
      %s171 = sphi 0, %s168
      %s172 = sphi 0, %s171
      %s188 = sphi 0, %s172
    $region4: #{bert_forward.12} parent=1 // loop_header_branch
      %13 = sbr.rel (%p11) target = $region8
    $region5: #{bert_forward.12} parent=1 // loop_body
      %s15 = ssub.s32 %s10, 1
      %s16 = ssub.s32 %s10, 2
      %s29 = sadd.s32 1, %s20
      %p30 = scmp.ge.s32.totalorder %s29, 1
      %s31 = scalar_select %p30, 0, %s29
      %s32 = sadd.s32 1, %s19
      %s33 = scalar_select %p30, %s32, %s19
      %p34 = scmp.ge.s32.totalorder %s33, 1
      %s35 = scalar_select %p34, 0, %s33
      %s36 = sadd.s32 1, %s18
      %s37 = scalar_select %p34, %s36, %s18
      %p38 = scmp.ge.s32.totalorder %s37, 1
      %s39 = scalar_select %p38, 0, %s37
      %s40 = sadd.s32 1, %s17
      %s41 = scalar_select %p38, %s40, %s17
      %p42 = scmp.ge.s32.totalorder %s41, 2
      %s43 = scalar_select %p42, 0, %s41
      %s44 = ssub.s32 %s17, %s43
      %s45 = ssub.s32 %s19, %s35
      %s46 = sor.u32 %s44, %s45
      %s47 = ssub.s32 %s18, %s39
      %s48 = sor.u32 %s46, %s47
      %p49 = scmp.eq.s32.totalorder %s48, 0
      %s51 = sadd.s32 %s50, 1
      %s52 = scalar_select %p49, %s50, %s51
      %p55 = pneg %p49
      %p56 = scmp.eq.s32.totalorder %s10, 1
      %p57 = por %p55, %p56
      %p58 = scmp.ne.s32.totalorder %s50, %s53
      %p59 = scmp.eq.s32.totalorder %s10, 0
      %p60 = por %p58, %p59
      %p61 = scmp.ne.s32.totalorder %s50, %s53
      %p62 = scmp.eq.s32.totalorder %s15, 1
      %p63 = por %p61, %p62
      %p64 = scmp.ne.s32.totalorder %s53, %s54
      %p65 = scmp.eq.s32.totalorder %s15, 0
      %p66 = por %p64, %p65
      %p67 = scmp.ne.s32.totalorder %s53, %s54
      %p68 = scmp.eq.s32.totalorder %s16, 1
      %p69 = por %p67, %p68
      %p71 = scmp.ne.s32.totalorder %s54, %s70
      %p72 = scmp.eq.s32.totalorder %s16, 0
      %p73 = por %p71, %p72
      %s74 = ssub.s32 %s17, %s43
      %s75 = ssub.s32 %s20, %s31
      %s76 = sor.u32 %s74, %s75
      %s77 = ssub.s32 %s18, %s39
      %s78 = sor.u32 %s76, %s77
      %p79 = scmp.eq.s32.totalorder %s78, 0
      %s81 = sadd.s32 %s80, 1
      %s82 = scalar_select %p79, %s80, %s81
      %p85 = pneg %p79
      %p86 = scmp.eq.s32.totalorder %s10, 1
      %p87 = por %p85, %p86
      %p88 = scmp.ne.s32.totalorder %s80, %s83
      %p89 = scmp.eq.s32.totalorder %s10, 0
      %p90 = por %p88, %p89
      %p91 = scmp.ne.s32.totalorder %s80, %s83
      %p92 = scmp.eq.s32.totalorder %s15, 1
      %p93 = por %p91, %p92
      %p94 = scmp.ne.s32.totalorder %s83, %s84
      %p95 = scmp.eq.s32.totalorder %s15, 0
      %p96 = por %p94, %p95
      %p97 = scmp.ne.s32.totalorder %s83, %s84
      %p98 = scmp.eq.s32.totalorder %s16, 1
      %p99 = por %p97, %p98
      %p101 = scmp.ne.s32.totalorder %s84, %s100
      %p102 = scmp.eq.s32.totalorder %s16, 0
      %p103 = por %p101, %p102
      %s104 = ssub.s32 %s17, %s43
      %s105 = ssub.s32 %s20, %s31
      %s106 = sor.u32 %s104, %s105
      %s107 = ssub.s32 %s18, %s39
      %s108 = sor.u32 %s106, %s107
      %p109 = scmp.eq.s32.totalorder %s108, 0
      %s111 = sadd.s32 %s110, 1
      %s112 = scalar_select %p109, %s110, %s111
      %p115 = pneg %p109
      %p116 = scmp.eq.s32.totalorder %s10, 1
      %p117 = por %p115, %p116
      %p118 = scmp.ne.s32.totalorder %s110, %s113
      %p119 = scmp.eq.s32.totalorder %s10, 0
      %p120 = por %p118, %p119
      %p121 = scmp.ne.s32.totalorder %s110, %s113
      %p122 = scmp.eq.s32.totalorder %s15, 1
      %p123 = por %p121, %p122
      %p124 = scmp.ne.s32.totalorder %s113, %s114
      %p125 = scmp.eq.s32.totalorder %s15, 0
      %p126 = por %p124, %p125
      %p127 = scmp.ne.s32.totalorder %s113, %s114
      %p128 = scmp.eq.s32.totalorder %s16, 1
      %p129 = por %p127, %p128
      %p131 = scmp.ne.s32.totalorder %s114, %s130
      %p132 = scmp.eq.s32.totalorder %s16, 0
      %p133 = por %p131, %p132
      %s134 = ssub.s32 %s17, %s43
      %s135 = ssub.s32 %s20, %s31
      %s136 = sor.u32 %s134, %s135
      %p137 = scmp.eq.s32.totalorder %s136, 0
      %s139 = sadd.s32 %s138, 1
      %s140 = scalar_select %p137, %s138, %s139
      %p143 = pneg %p137
      %p144 = scmp.eq.s32.totalorder %s10, 1
      %p145 = por %p143, %p144
      %p146 = scmp.ne.s32.totalorder %s138, %s141
      %p147 = scmp.eq.s32.totalorder %s10, 0
      %p148 = por %p146, %p147
      %p149 = scmp.ne.s32.totalorder %s138, %s141
      %p150 = scmp.eq.s32.totalorder %s15, 1
      %p151 = por %p149, %p150
      %p152 = scmp.ne.s32.totalorder %s141, %s142
      %p153 = scmp.eq.s32.totalorder %s15, 0
      %p154 = por %p152, %p153
      %p155 = scmp.ne.s32.totalorder %s141, %s142
      %p156 = scmp.eq.s32.totalorder %s16, 1
      %p157 = por %p155, %p156
      %p159 = scmp.ne.s32.totalorder %s142, %s158
      %p160 = scmp.eq.s32.totalorder %s16, 0
      %p161 = por %p159, %p160
      %s162 = ssub.s32 %s17, %s43
      %s163 = ssub.s32 %s19, %s35
      %s164 = sor.u32 %s162, %s163
      %s165 = ssub.s32 %s18, %s39
      %s166 = sor.u32 %s164, %s165
      %p167 = scmp.eq.s32.totalorder %s166, 0
      %s169 = sadd.s32 %s168, 1
      %s170 = scalar_select %p167, %s168, %s169
      %p173 = pneg %p167
      %p174 = scmp.eq.s32.totalorder %s10, 1
      %p175 = por %p173, %p174
      %p176 = scmp.ne.s32.totalorder %s168, %s171
      %p177 = scmp.eq.s32.totalorder %s10, 0
      %p178 = por %p176, %p177
      %p179 = scmp.ne.s32.totalorder %s168, %s171
      %p180 = scmp.eq.s32.totalorder %s15, 1
      %p181 = por %p179, %p180
      %p182 = scmp.ne.s32.totalorder %s171, %s172
      %p183 = scmp.eq.s32.totalorder %s15, 0
      %p184 = por %p182, %p183
      %p185 = scmp.ne.s32.totalorder %s171, %s172
      %p186 = scmp.eq.s32.totalorder %s16, 1
      %p187 = por %p185, %p186
      %p189 = scmp.ne.s32.totalorder %s172, %s188
      %p190 = scmp.eq.s32.totalorder %s16, 0
      %p191 = por %p189, %p190
      %p192 = scmp.le.s32.totalorder 1, %s10
      %p193 = scmp.lt.s32.totalorder %s10, 3
      %p194 = pnand %p192, %p193
      %p195 = pneg %p194
      // Predicated region
      $region9: #{bert_forward.12} parent=5 // pred_check
        _
      $region10: #{bert_forward.12} parent=5 // pred_check_branch
        %197 = sbr.rel (%p194) target = $region12
      $region11: #{bert_forward.12} parent=5 // pred_region
        %s198 = ssub.s32 %s10, 1
      $region12: #{bert_forward.12} parent=5 // pred_fallthru
        _
      %p199 = scmp.lt.s32.totalorder %s10, 2
      // Predicated region
      $region13: #{bert_forward.12} parent=5 // pred_check
        %p200 = pneg %p199
      $region14: #{bert_forward.12} parent=5 // pred_check_branch
        %202 = sbr.rel (%p200) target = $region16
      $region15: #{bert_forward.12} parent=5 // pred_region
        // Predicated region
        $region17: #{bert_forward.12} parent=15 // pred_check
          %p203 = pneg %p60
        $region18: #{bert_forward.12} parent=15 // pred_check_branch
          %205 = sbr.rel (%p203) target = $region20
        $region19: #{bert_forward.12} parent=15 // pred_region
          %s206 = sand.u32 %s50, 1
          %s207 = sand.u32 %s50, 1
          %s208 = smul.addr %s207, 16
          %s209 = scalar_lea.vmem [#allocation5], %s208
          %s210 = smul.u32 8, %s19
          %s211 = smul.addr %s210, 3
          %s212 = sadd.s32 %s18, %s211
          %s213 = smul.addr %s17, 24
          %s214 = sadd.s32 %s212, %s213
          %s215 = smul.addr %s214, 2
          %s216 = scalar_lea.vmem %s0, %s215
          // Predicated region
          $region21: #{bert_forward.12} parent=19 // pred_check
            _
          $region22: #{bert_forward.12} parent=19 // pred_check_branch
            %218 = sbr.rel (0) target = $region24
          $region23: #{bert_forward.12} parent=19 // pred_region
            // Predicated region
            $region25: #{bert_forward.12} parent=23 // pred_check
              _
            $region26: #{bert_forward.12} parent=23 // pred_check_branch
              %220 = sbr.rel target = $region28
            $region27: #{bert_forward.12} parent=23 // pred_region
              // Predicated region
              $region40: #{bert_forward.12} parent=27 // pred_check
                _
              $region41: #{bert_forward.12} parent=27 // pred_check_branch
                %249 = sbr.rel (0) target = $region43
              $region42: #{bert_forward.12} parent=27 // pred_region
                loop: start=0, step=1, limit=1
                $region44: #{bert_forward.12} parent=42 // loop_pre_header
                  _
                $region45: #{bert_forward.12} parent=42 // loop_header
                  %s251 = sphi 0, %s255
                  %p252 = scmp.ge.s32.totalorder %s251, 1
                  %s256 = sphi %s216, %s216
                  %s257 = sphi %s209, %s209
                $region46: #{bert_forward.12} parent=42 // loop_header_branch
                  %254 = sbr.rel (%p252) target = $region50
                $region47: #{bert_forward.12} parent=42 // loop_body
                  _
                $region48: #{bert_forward.12} parent=42 // loop_footer
                  %s255 = sadd.s32 1, %s251
                $region49: #{bert_forward.12} parent=42 // loop_footer_branch
                  %250 = sbr.rel target = $region45
                $region50: #{bert_forward.12} parent=42 // loop_exit
                  _
                loop: start=0, step=1, limit=1
                $region51: #{bert_forward.12} parent=42 // loop_pre_header
                  _
                $region52: #{bert_forward.12} parent=42 // loop_header
                  %s260 = sphi 0, %s264
                  %p261 = scmp.ge.s32.totalorder %s260, 1
                  %s265 = sphi %s216, %s216
                  %s266 = sphi %s209, %s209
                $region53: #{bert_forward.12} parent=42 // loop_header_branch
                  %263 = sbr.rel (%p261) target = $region57
                $region54: #{bert_forward.12} parent=42 // loop_body
                  %v267 = vld [vmem:[%s265] sm:$0x3]
                  %268 = vst [vmem:[%s266] sm:$0x3] %v267
                  %v269 = vld [vmem:[%s265 + $0x6] sm:$0x3]
                  %270 = vst [vmem:[%s266 + $0x2] sm:$0x3] %v269
                  %v271 = vld [vmem:[%s265 + $0xc] sm:$0x3]
                  %272 = vst [vmem:[%s266 + $0x4] sm:$0x3] %v271
                  %v273 = vld [vmem:[%s265 + $0x12] sm:$0x3]
                  %274 = vst [vmem:[%s266 + $0x6] sm:$0x3] %v273
                  %v275 = vld [vmem:[%s265 + $0x18] sm:$0x3]
                  %276 = vst [vmem:[%s266 + $0x8] sm:$0x3] %v275
                  %v277 = vld [vmem:[%s265 + $0x1e] sm:$0x3]
                  %278 = vst [vmem:[%s266 + $0xa] sm:$0x3] %v277
                  %v279 = vld [vmem:[%s265 + $0x24] sm:$0x3]
                  %280 = vst [vmem:[%s266 + $0xc] sm:$0x3] %v279
                  %v281 = vld [vmem:[%s265 + $0x2a] sm:$0x3]
                  %282 = vst [vmem:[%s266 + $0xe] sm:$0x3] %v281
                $region55: #{bert_forward.12} parent=42 // loop_footer
                  %s264 = sadd.s32 1, %s260
                $region56: #{bert_forward.12} parent=42 // loop_footer_branch
                  %259 = sbr.rel target = $region52
                $region57: #{bert_forward.12} parent=42 // loop_exit
                  _
              $region43: #{bert_forward.12} parent=27 // pred_fallthru
                _
            $region28: #{bert_forward.12} parent=23 // pred_fallthru
              _
            // Predicated region
            $region29: #{bert_forward.12} parent=23 // pred_check
              _
            $region30: #{bert_forward.12} parent=23 // pred_check_branch
              %222 = sbr.rel (0) target = $region32
            $region31: #{bert_forward.12} parent=23 // pred_region
              loop: start=0, step=1, limit=1
              $region33: #{bert_forward.12} parent=31 // loop_pre_header
                _
              $region34: #{bert_forward.12} parent=31 // loop_header
                %s225 = sphi 0, %s229
                %p226 = scmp.ge.s32.totalorder %s225, 1
                %s230 = sphi %s216, %s216
                %s231 = sphi %s209, %s209
              $region35: #{bert_forward.12} parent=31 // loop_header_branch
                %228 = sbr.rel (%p226) target = $region39
              $region36: #{bert_forward.12} parent=31 // loop_body
                %v232 = vld [vmem:[%s230] sm:$0x3]
                %233 = vst [vmem:[%s231] sm:$0x3] %v232
                %v234 = vld [vmem:[%s230 + $0x6] sm:$0x3]
                %235 = vst [vmem:[%s231 + $0x2] sm:$0x3] %v234
                %v236 = vld [vmem:[%s230 + $0xc] sm:$0x3]
                %237 = vst [vmem:[%s231 + $0x4] sm:$0x3] %v236
                %v238 = vld [vmem:[%s230 + $0x12] sm:$0x3]
                %239 = vst [vmem:[%s231 + $0x6] sm:$0x3] %v238
                %v240 = vld [vmem:[%s230 + $0x18] sm:$0x3]
                %241 = vst [vmem:[%s231 + $0x8] sm:$0x3] %v240
                %v242 = vld [vmem:[%s230 + $0x1e] sm:$0x3]
                %243 = vst [vmem:[%s231 + $0xa] sm:$0x3] %v242
                %v244 = vld [vmem:[%s230 + $0x24] sm:$0x3]
                %245 = vst [vmem:[%s231 + $0xc] sm:$0x3] %v244
                %v246 = vld [vmem:[%s230 + $0x2a] sm:$0x3]
                %247 = vst [vmem:[%s231 + $0xe] sm:$0x3] %v246
              $region37: #{bert_forward.12} parent=31 // loop_footer
                %s229 = sadd.s32 1, %s225
              $region38: #{bert_forward.12} parent=31 // loop_footer_branch
                %224 = sbr.rel target = $region34
              $region39: #{bert_forward.12} parent=31 // loop_exit
                _
            $region32: #{bert_forward.12} parent=23 // pred_fallthru
              _
          $region24: #{bert_forward.12} parent=19 // pred_fallthru
            _
          %283 = vnop
        $region20: #{bert_forward.12} parent=15 // pred_fallthru
          _
        // Predicated region
        $region58: #{bert_forward.12} parent=15 // pred_check
          %p284 = pneg %p90
        $region59: #{bert_forward.12} parent=15 // pred_check_branch
          %286 = sbr.rel (%p284) target = $region61
        $region60: #{bert_forward.12} parent=15 // pred_region
          %s287 = sand.u32 %s80, 1
          %s288 = sand.u32 %s80, 1
          %s289 = smul.addr %s288, 16
          %s290 = scalar_lea.vmem [#allocation6], %s289
          %s291 = smul.u32 8, %s20
          %s292 = sadd.s32 %s18, 1
          %s293 = smul.addr %s291, 3
          %s294 = sadd.s32 %s292, %s293
          %s295 = smul.addr %s17, 24
          %s296 = sadd.s32 %s294, %s295
          %s297 = smul.addr %s296, 2
          %s298 = scalar_lea.vmem %s1, %s297
          // Predicated region
          $region62: #{bert_forward.12} parent=60 // pred_check
            _
          $region63: #{bert_forward.12} parent=60 // pred_check_branch
            %300 = sbr.rel (0) target = $region65
          $region64: #{bert_forward.12} parent=60 // pred_region
            // Predicated region
            $region66: #{bert_forward.12} parent=64 // pred_check
              _
            $region67: #{bert_forward.12} parent=64 // pred_check_branch
              %302 = sbr.rel target = $region69
            $region68: #{bert_forward.12} parent=64 // pred_region
              // Predicated region
              $region81: #{bert_forward.12} parent=68 // pred_check
                _
              $region82: #{bert_forward.12} parent=68 // pred_check_branch
                %331 = sbr.rel (0) target = $region84
              $region83: #{bert_forward.12} parent=68 // pred_region
                loop: start=0, step=1, limit=1
                $region85: #{bert_forward.12} parent=83 // loop_pre_header
                  _
                $region86: #{bert_forward.12} parent=83 // loop_header
                  %s333 = sphi 0, %s337
                  %p334 = scmp.ge.s32.totalorder %s333, 1
                  %s338 = sphi %s298, %s298
                  %s339 = sphi %s290, %s290
                $region87: #{bert_forward.12} parent=83 // loop_header_branch
                  %336 = sbr.rel (%p334) target = $region91
                $region88: #{bert_forward.12} parent=83 // loop_body
                  _
                $region89: #{bert_forward.12} parent=83 // loop_footer
                  %s337 = sadd.s32 1, %s333
                $region90: #{bert_forward.12} parent=83 // loop_footer_branch
                  %332 = sbr.rel target = $region86
                $region91: #{bert_forward.12} parent=83 // loop_exit
                  _
                loop: start=0, step=1, limit=1
                $region92: #{bert_forward.12} parent=83 // loop_pre_header
                  _
                $region93: #{bert_forward.12} parent=83 // loop_header
                  %s342 = sphi 0, %s346
                  %p343 = scmp.ge.s32.totalorder %s342, 1
                  %s347 = sphi %s298, %s298
                  %s348 = sphi %s290, %s290
                $region94: #{bert_forward.12} parent=83 // loop_header_branch
                  %345 = sbr.rel (%p343) target = $region98
                $region95: #{bert_forward.12} parent=83 // loop_body
                  %v349 = vld [vmem:[%s347] sm:$0x3]
                  %350 = vst [vmem:[%s348] sm:$0x3] %v349
                  %v351 = vld [vmem:[%s347 + $0x6] sm:$0x3]
                  %352 = vst [vmem:[%s348 + $0x2] sm:$0x3] %v351
                  %v353 = vld [vmem:[%s347 + $0xc] sm:$0x3]
                  %354 = vst [vmem:[%s348 + $0x4] sm:$0x3] %v353
                  %v355 = vld [vmem:[%s347 + $0x12] sm:$0x3]
                  %356 = vst [vmem:[%s348 + $0x6] sm:$0x3] %v355
                  %v357 = vld [vmem:[%s347 + $0x18] sm:$0x3]
                  %358 = vst [vmem:[%s348 + $0x8] sm:$0x3] %v357
                  %v359 = vld [vmem:[%s347 + $0x1e] sm:$0x3]
                  %360 = vst [vmem:[%s348 + $0xa] sm:$0x3] %v359
                  %v361 = vld [vmem:[%s347 + $0x24] sm:$0x3]
                  %362 = vst [vmem:[%s348 + $0xc] sm:$0x3] %v361
                  %v363 = vld [vmem:[%s347 + $0x2a] sm:$0x3]
                  %364 = vst [vmem:[%s348 + $0xe] sm:$0x3] %v363
                $region96: #{bert_forward.12} parent=83 // loop_footer
                  %s346 = sadd.s32 1, %s342
                $region97: #{bert_forward.12} parent=83 // loop_footer_branch
                  %341 = sbr.rel target = $region93
                $region98: #{bert_forward.12} parent=83 // loop_exit
                  _
              $region84: #{bert_forward.12} parent=68 // pred_fallthru
                _
            $region69: #{bert_forward.12} parent=64 // pred_fallthru
              _
            // Predicated region
            $region70: #{bert_forward.12} parent=64 // pred_check
              _
            $region71: #{bert_forward.12} parent=64 // pred_check_branch
              %304 = sbr.rel (0) target = $region73
            $region72: #{bert_forward.12} parent=64 // pred_region
              loop: start=0, step=1, limit=1
              $region74: #{bert_forward.12} parent=72 // loop_pre_header
                _
              $region75: #{bert_forward.12} parent=72 // loop_header
                %s307 = sphi 0, %s311
                %p308 = scmp.ge.s32.totalorder %s307, 1
                %s312 = sphi %s298, %s298
                %s313 = sphi %s290, %s290
              $region76: #{bert_forward.12} parent=72 // loop_header_branch
                %310 = sbr.rel (%p308) target = $region80
              $region77: #{bert_forward.12} parent=72 // loop_body
                %v314 = vld [vmem:[%s312] sm:$0x3]
                %315 = vst [vmem:[%s313] sm:$0x3] %v314
                %v316 = vld [vmem:[%s312 + $0x6] sm:$0x3]
                %317 = vst [vmem:[%s313 + $0x2] sm:$0x3] %v316
                %v318 = vld [vmem:[%s312 + $0xc] sm:$0x3]
                %319 = vst [vmem:[%s313 + $0x4] sm:$0x3] %v318
                %v320 = vld [vmem:[%s312 + $0x12] sm:$0x3]
                %321 = vst [vmem:[%s313 + $0x6] sm:$0x3] %v320
                %v322 = vld [vmem:[%s312 + $0x18] sm:$0x3]
                %323 = vst [vmem:[%s313 + $0x8] sm:$0x3] %v322
                %v324 = vld [vmem:[%s312 + $0x1e] sm:$0x3]
                %325 = vst [vmem:[%s313 + $0xa] sm:$0x3] %v324
                %v326 = vld [vmem:[%s312 + $0x24] sm:$0x3]
                %327 = vst [vmem:[%s313 + $0xc] sm:$0x3] %v326
                %v328 = vld [vmem:[%s312 + $0x2a] sm:$0x3]
                %329 = vst [vmem:[%s313 + $0xe] sm:$0x3] %v328
              $region78: #{bert_forward.12} parent=72 // loop_footer
                %s311 = sadd.s32 1, %s307
              $region79: #{bert_forward.12} parent=72 // loop_footer_branch
                %306 = sbr.rel target = $region75
              $region80: #{bert_forward.12} parent=72 // loop_exit
                _
            $region73: #{bert_forward.12} parent=64 // pred_fallthru
              _
          $region65: #{bert_forward.12} parent=60 // pred_fallthru
            _
          %365 = vnop
        $region61: #{bert_forward.12} parent=15 // pred_fallthru
          _
        // Predicated region
        $region99: #{bert_forward.12} parent=15 // pred_check
          %p366 = pneg %p120
        $region100: #{bert_forward.12} parent=15 // pred_check_branch
          %368 = sbr.rel (%p366) target = $region102
        $region101: #{bert_forward.12} parent=15 // pred_region
          %s369 = sand.u32 %s110, 1
          %s370 = sand.u32 %s110, 1
          %s371 = smul.addr %s370, 16
          %s372 = scalar_lea.vmem [#allocation7], %s371
          %s373 = smul.u32 8, %s20
          %s374 = sadd.s32 %s18, 2
          %s375 = smul.addr %s373, 3
          %s376 = sadd.s32 %s374, %s375
          %s377 = smul.addr %s17, 24
          %s378 = sadd.s32 %s376, %s377
          %s379 = smul.addr %s378, 2
          %s380 = scalar_lea.vmem %s2, %s379
          // Predicated region
          $region103: #{bert_forward.12} parent=101 // pred_check
            _
          $region104: #{bert_forward.12} parent=101 // pred_check_branch
            %382 = sbr.rel (0) target = $region106
          $region105: #{bert_forward.12} parent=101 // pred_region
            // Predicated region
            $region107: #{bert_forward.12} parent=105 // pred_check
              _
            $region108: #{bert_forward.12} parent=105 // pred_check_branch
              %384 = sbr.rel target = $region110
            $region109: #{bert_forward.12} parent=105 // pred_region
              // Predicated region
              $region122: #{bert_forward.12} parent=109 // pred_check
                _
              $region123: #{bert_forward.12} parent=109 // pred_check_branch
                %413 = sbr.rel (0) target = $region125
              $region124: #{bert_forward.12} parent=109 // pred_region
                loop: start=0, step=1, limit=1
                $region126: #{bert_forward.12} parent=124 // loop_pre_header
                  _
                $region127: #{bert_forward.12} parent=124 // loop_header
                  %s415 = sphi 0, %s419
                  %p416 = scmp.ge.s32.totalorder %s415, 1
                  %s420 = sphi %s380, %s380
                  %s421 = sphi %s372, %s372
                $region128: #{bert_forward.12} parent=124 // loop_header_branch
                  %418 = sbr.rel (%p416) target = $region132
                $region129: #{bert_forward.12} parent=124 // loop_body
                  _
                $region130: #{bert_forward.12} parent=124 // loop_footer
                  %s419 = sadd.s32 1, %s415
                $region131: #{bert_forward.12} parent=124 // loop_footer_branch
                  %414 = sbr.rel target = $region127
                $region132: #{bert_forward.12} parent=124 // loop_exit
                  _
                loop: start=0, step=1, limit=1
                $region133: #{bert_forward.12} parent=124 // loop_pre_header
                  _
                $region134: #{bert_forward.12} parent=124 // loop_header
                  %s424 = sphi 0, %s428
                  %p425 = scmp.ge.s32.totalorder %s424, 1
                  %s429 = sphi %s380, %s380
                  %s430 = sphi %s372, %s372
                $region135: #{bert_forward.12} parent=124 // loop_header_branch
                  %427 = sbr.rel (%p425) target = $region139
                $region136: #{bert_forward.12} parent=124 // loop_body
                  %v431 = vld [vmem:[%s429] sm:$0x3]
                  %432 = vst [vmem:[%s430] sm:$0x3] %v431
                  %v433 = vld [vmem:[%s429 + $0x6] sm:$0x3]
                  %434 = vst [vmem:[%s430 + $0x2] sm:$0x3] %v433
                  %v435 = vld [vmem:[%s429 + $0xc] sm:$0x3]
                  %436 = vst [vmem:[%s430 + $0x4] sm:$0x3] %v435
                  %v437 = vld [vmem:[%s429 + $0x12] sm:$0x3]
                  %438 = vst [vmem:[%s430 + $0x6] sm:$0x3] %v437
                  %v439 = vld [vmem:[%s429 + $0x18] sm:$0x3]
                  %440 = vst [vmem:[%s430 + $0x8] sm:$0x3] %v439
                  %v441 = vld [vmem:[%s429 + $0x1e] sm:$0x3]
                  %442 = vst [vmem:[%s430 + $0xa] sm:$0x3] %v441
                  %v443 = vld [vmem:[%s429 + $0x24] sm:$0x3]
                  %444 = vst [vmem:[%s430 + $0xc] sm:$0x3] %v443
                  %v445 = vld [vmem:[%s429 + $0x2a] sm:$0x3]
                  %446 = vst [vmem:[%s430 + $0xe] sm:$0x3] %v445
                $region137: #{bert_forward.12} parent=124 // loop_footer
                  %s428 = sadd.s32 1, %s424
                $region138: #{bert_forward.12} parent=124 // loop_footer_branch
                  %423 = sbr.rel target = $region134
                $region139: #{bert_forward.12} parent=124 // loop_exit
                  _
              $region125: #{bert_forward.12} parent=109 // pred_fallthru
                _
            $region110: #{bert_forward.12} parent=105 // pred_fallthru
              _
            // Predicated region
            $region111: #{bert_forward.12} parent=105 // pred_check
              _
            $region112: #{bert_forward.12} parent=105 // pred_check_branch
              %386 = sbr.rel (0) target = $region114
            $region113: #{bert_forward.12} parent=105 // pred_region
              loop: start=0, step=1, limit=1
              $region115: #{bert_forward.12} parent=113 // loop_pre_header
                _
              $region116: #{bert_forward.12} parent=113 // loop_header
                %s389 = sphi 0, %s393
                %p390 = scmp.ge.s32.totalorder %s389, 1
                %s394 = sphi %s380, %s380
                %s395 = sphi %s372, %s372
              $region117: #{bert_forward.12} parent=113 // loop_header_branch
                %392 = sbr.rel (%p390) target = $region121
              $region118: #{bert_forward.12} parent=113 // loop_body
                %v396 = vld [vmem:[%s394] sm:$0x3]
                %397 = vst [vmem:[%s395] sm:$0x3] %v396
                %v398 = vld [vmem:[%s394 + $0x6] sm:$0x3]
                %399 = vst [vmem:[%s395 + $0x2] sm:$0x3] %v398
                %v400 = vld [vmem:[%s394 + $0xc] sm:$0x3]
                %401 = vst [vmem:[%s395 + $0x4] sm:$0x3] %v400
                %v402 = vld [vmem:[%s394 + $0x12] sm:$0x3]
                %403 = vst [vmem:[%s395 + $0x6] sm:$0x3] %v402
                %v404 = vld [vmem:[%s394 + $0x18] sm:$0x3]
                %405 = vst [vmem:[%s395 + $0x8] sm:$0x3] %v404
                %v406 = vld [vmem:[%s394 + $0x1e] sm:$0x3]
                %407 = vst [vmem:[%s395 + $0xa] sm:$0x3] %v406
                %v408 = vld [vmem:[%s394 + $0x24] sm:$0x3]
                %409 = vst [vmem:[%s395 + $0xc] sm:$0x3] %v408
                %v410 = vld [vmem:[%s394 + $0x2a] sm:$0x3]
                %411 = vst [vmem:[%s395 + $0xe] sm:$0x3] %v410
              $region119: #{bert_forward.12} parent=113 // loop_footer
                %s393 = sadd.s32 1, %s389
              $region120: #{bert_forward.12} parent=113 // loop_footer_branch
                %388 = sbr.rel target = $region116
              $region121: #{bert_forward.12} parent=113 // loop_exit
                _
            $region114: #{bert_forward.12} parent=105 // pred_fallthru
              _
          $region106: #{bert_forward.12} parent=101 // pred_fallthru
            _
          %447 = vnop
        $region102: #{bert_forward.12} parent=15 // pred_fallthru
          _
        // Predicated region
        $region140: #{bert_forward.12} parent=15 // pred_check
          %p448 = pneg %p148
        $region141: #{bert_forward.12} parent=15 // pred_check_branch
          %450 = sbr.rel (%p448) target = $region143
        $region142: #{bert_forward.12} parent=15 // pred_region
          %p451 = scmp.lt.s32.totalorder %s17, 1
          %s452 = scalar_select %p451, %s17, 1
          %p453 = scmp.lt.s32.totalorder %s20, 0
          %s454 = scalar_select %p453, %s20, 0
          %s455 = sadd.s32 %s454, %s452
          %s456 = scalar_lea.vmem %s3, %s455
        $region143: #{bert_forward.12} parent=15 // pred_fallthru
          _
      $region16: #{bert_forward.12} parent=5 // pred_fallthru
        _
      %p457 = scmp.le.s32.totalorder 1, %s10
      %p458 = scmp.lt.s32.totalorder %s10, 3
      %p459 = pnand %p457, %p458
      %p460 = pneg %p459
      // Predicated region
      $region144: #{bert_forward.12} parent=5 // pred_check
        _
      $region145: #{bert_forward.12} parent=5 // pred_check_branch
        %462 = sbr.rel (%p459) target = $region147
      $region146: #{bert_forward.12} parent=5 // pred_region
        %s463 = ssub.s32 %s10, 1
        %s464 = sand.u32 %s53, 1
        %s465 = sand.u32 %s53, 1
        %s466 = smul.addr %s465, 16
        %s467 = scalar_lea.vmem [#allocation5], %s466
        // Predicated region
        $region148: #{bert_forward.12} parent=146 // pred_check
          %p468 = pneg %p66
        $region149: #{bert_forward.12} parent=146 // pred_check_branch
          %470 = sbr.rel (%p468) target = $region151
        $region150: #{bert_forward.12} parent=146 // pred_region
          _
        $region151: #{bert_forward.12} parent=146 // pred_fallthru
          _
        %s471 = sand.u32 %s83, 1
        %s472 = sand.u32 %s83, 1
        %s473 = smul.addr %s472, 16
        %s474 = scalar_lea.vmem [#allocation6], %s473
        // Predicated region
        $region152: #{bert_forward.12} parent=146 // pred_check
          %p475 = pneg %p96
        $region153: #{bert_forward.12} parent=146 // pred_check_branch
          %477 = sbr.rel (%p475) target = $region155
        $region154: #{bert_forward.12} parent=146 // pred_region
          _
        $region155: #{bert_forward.12} parent=146 // pred_fallthru
          _
        %s478 = sand.u32 %s113, 1
        %s479 = sand.u32 %s113, 1
        %s480 = smul.addr %s479, 16
        %s481 = scalar_lea.vmem [#allocation7], %s480
        // Predicated region
        $region156: #{bert_forward.12} parent=146 // pred_check
          %p482 = pneg %p126
        $region157: #{bert_forward.12} parent=146 // pred_check_branch
          %484 = sbr.rel (%p482) target = $region159
        $region158: #{bert_forward.12} parent=146 // pred_region
          _
        $region159: #{bert_forward.12} parent=146 // pred_fallthru
          _
        %s485 = sand.u32 %s53, 1
        %s486 = sand.u32 %s53, 1
        %s487 = smul.addr %s486, 16
        %s488 = scalar_lea.vmem [#allocation5], %s487
        %p489 = pneg %p66
        %p490 = pneg %p63
        %s491 = sand.u32 %s83, 1
        %s492 = sand.u32 %s83, 1
        %s493 = smul.addr %s492, 16
        %s494 = scalar_lea.vmem [#allocation6], %s493
        %p495 = pneg %p96
        %p496 = pneg %p93
        %s497 = sand.u32 %s113, 1
        %s498 = sand.u32 %s113, 1
        %s499 = smul.addr %s498, 16
        %s500 = scalar_lea.vmem [#allocation7], %s499
        %p501 = pneg %p126
        %p502 = pneg %p123
        %p503 = scmp.lt.s32.totalorder %s21, 1
        %s504 = scalar_select %p503, %s21, 1
        %p505 = scmp.lt.s32.totalorder %s24, 0
        %s506 = scalar_select %p505, %s24, 0
        %s507 = sadd.s32 %s506, %s504
        %s508 = scalar_lea.vmem %s3, %s507
        %p509 = pneg %p154
        %p510 = pneg %p151
        %p511 = pneg %p184
        %p512 = pneg %p181
        %p513 = scmp.lt.s32.totalorder %s21, 1
        %s514 = scalar_select %p513, %s21, 1
        %p515 = scmp.lt.s32.totalorder %s23, 0
        %s516 = scalar_select %p515, %s23, 0
        %p517 = scmp.lt.s32.totalorder %s22, 0
        %s518 = scalar_select %p517, %s22, 0
        %s519 = sadd.s32 %s518, %s516
        %s520 = sadd.s32 %s519, %s514
        %s521 = smul.addr %s520, 4
        %s522 = scalar_lea.vmem %s4, %s521
        %s523 = smul.u32 8, %s23
        %s524 = smul.u32 8, %s24
        %s525 = smul.u32 8, %s24
        %p526 = scmp.lt.s32.totalorder %s21, 1
        %s527 = scalar_select %p526, %s21, 1
        %p528 = scmp.lt.s32.totalorder %s24, 0
        %s529 = scalar_select %p528, %s24, 0
        %s530 = sadd.s32 %s529, %s527
        %s531 = scalar_lea.vmem %s3, %s530
        %p532 = scmp.lt.s32.totalorder %s21, 1
        %s533 = scalar_select %p532, %s21, 1
        %p534 = scmp.lt.s32.totalorder %s23, 0
        %s535 = scalar_select %p534, %s23, 0
        %p536 = scmp.lt.s32.totalorder %s22, 0
        %s537 = scalar_select %p536, %s22, 0
        %s538 = sadd.s32 %s537, %s535
        %s539 = sadd.s32 %s538, %s533
        %s540 = smul.addr %s539, 4
        %s541 = scalar_lea.vmem %s4, %s540
        %p543 = scmp.eq.s32.totalorder %s24, 0
        // Predicated region
        $region160: #{bert_forward.12} parent=146 // pred_check
          %p544 = pneg %p543
        $region161: #{bert_forward.12} parent=146 // pred_check_branch
          %546 = sbr.rel (%p544) target = $region163
        $region162: #{bert_forward.12} parent=146 // pred_region
          %vm547 = vcmask 7168
          %548 = vst.msk [vmem:[#allocation2] sm:$0xff] %vm547, -inf
          %549 = vst.msk [vmem:[#allocation2 + $0x8] sm:$0xff] %vm547, -inf
          %550 = vst.msk [vmem:[#allocation2 + $0x10] sm:$0xff] %vm547, -inf
          %551 = vst.msk [vmem:[#allocation2 + $0x18] sm:$0xff] %vm547, -inf
          %552 = vst.msk [vmem:[#allocation3] sm:$0xff] %vm547, 0.0
          %553 = vst.msk [vmem:[#allocation3 + $0x8] sm:$0xff] %vm547, 0.0
          %554 = vst.msk [vmem:[#allocation3 + $0x10] sm:$0xff] %vm547, 0.0
          %555 = vst.msk [vmem:[#allocation3 + $0x18] sm:$0xff] %vm547, 0.0
          %vm556 = vcmask 64512
          %557 = vst.msk [vmem:[#allocation4] sm:$0xff] %vm556, 0.0
          %558 = vst.msk [vmem:[#allocation4 + $0x8] sm:$0xff] %vm556, 0.0
          %559 = vst.msk [vmem:[#allocation4 + $0x10] sm:$0xff] %vm556, 0.0
          %560 = vst.msk [vmem:[#allocation4 + $0x18] sm:$0xff] %vm556, 0.0
        $region163: #{bert_forward.12} parent=146 // pred_fallthru
          _
        %v561 = vld [vmem:[%s531] sm:$0x1]
        %v562 = vld [vmem:[%s467] sm:$0x1]
        %v563 = vld [vmem:[%s467 + $0x2] sm:$0x1]
        %v564 = vld [vmem:[%s467 + $0x4] sm:$0x1]
        %v565 = vld [vmem:[%s467 + $0x6] sm:$0x1]
        %v566 = vld [vmem:[%s467 + $0x8] sm:$0x1]
        %v567 = vld [vmem:[%s467 + $0xa] sm:$0x1]
        %v568 = vld [vmem:[%s467 + $0xc] sm:$0x1]
        %v569 = vld [vmem:[%s467 + $0xe] sm:$0x1]
        %v570 = vld [vmem:[%s474] sm:$0x1]
        %v571 = vld [vmem:[%s474 + $0x2] sm:$0x1]
        %v572 = vld [vmem:[%s474 + $0x4] sm:$0x1]
        %v573 = vld [vmem:[%s474 + $0x6] sm:$0x1]
        %v574 = vld [vmem:[%s474 + $0x8] sm:$0x1]
        %v575 = vld [vmem:[%s474 + $0xa] sm:$0x1]
        %v576 = vld [vmem:[%s474 + $0xc] sm:$0x1]
        %v577 = vld [vmem:[%s474 + $0xe] sm:$0x1]
        %v578 = vld [vmem:[%s481] sm:$0x1]
        %v579 = vld [vmem:[%s481 + $0x2] sm:$0x1]
        %v580 = vld [vmem:[%s481 + $0x4] sm:$0x1]
        %v581 = vld [vmem:[%s481 + $0x6] sm:$0x1]
        %v582 = vld [vmem:[%s481 + $0x8] sm:$0x1]
        %v583 = vld [vmem:[%s481 + $0xa] sm:$0x1]
        %v584 = vld [vmem:[%s481 + $0xc] sm:$0x1]
        %v585 = vld [vmem:[%s481 + $0xe] sm:$0x1]
        %v587 = vlaneseq
        %v588 = vshrl.u32 %v587, 7
        %v589 = vsub.s32 0, %v588
        %v590 = vrot.slane %v561, %v589
        %v601 = vunpack.c.l.s4 1983009808
        %v602 = vunpack.c.0.s8 %v601
        %v603 = vlaneseq
        %v604 = vshrl.u32 %v603, 7
        %v605 = vsub.s32 %v602, %v604
        %v606 = vrot.slane %v562, %v605
        %v608 = vunpack.c.l.s4 1983009808
        %v609 = vunpack.c.0.s8 %v608
        %v610 = vlaneseq
        %v611 = vshrl.u32 %v610, 7
        %v612 = vsub.s32 %v609, %v611
        %v613 = vrot.slane %v563, %v612
        %v615 = vunpack.c.l.s4 1983009808
        %v616 = vunpack.c.0.s8 %v615
        %v617 = vlaneseq
        %v618 = vshrl.u32 %v617, 7
        %v619 = vsub.s32 %v616, %v618
        %v620 = vrot.slane %v564, %v619
        %v622 = vunpack.c.l.s4 1983009808
        %v623 = vunpack.c.0.s8 %v622
        %v624 = vlaneseq
        %v625 = vshrl.u32 %v624, 7
        %v626 = vsub.s32 %v623, %v625
        %v627 = vrot.slane %v565, %v626
        %v629 = vunpack.c.l.s4 1983009808
        %v630 = vunpack.c.0.s8 %v629
        %v631 = vlaneseq
        %v632 = vshrl.u32 %v631, 7
        %v633 = vsub.s32 %v630, %v632
        %v634 = vrot.slane %v566, %v633
        %v636 = vunpack.c.l.s4 1983009808
        %v637 = vunpack.c.0.s8 %v636
        %v638 = vlaneseq
        %v639 = vshrl.u32 %v638, 7
        %v640 = vsub.s32 %v637, %v639
        %v641 = vrot.slane %v567, %v640
        %v643 = vunpack.c.l.s4 1983009808
        %v644 = vunpack.c.0.s8 %v643
        %v645 = vlaneseq
        %v646 = vshrl.u32 %v645, 7
        %v647 = vsub.s32 %v644, %v646
        %v648 = vrot.slane %v568, %v647
        %v650 = vunpack.c.l.s4 1983009808
        %v651 = vunpack.c.0.s8 %v650
        %v652 = vlaneseq
        %v653 = vshrl.u32 %v652, 7
        %v654 = vsub.s32 %v651, %v653
        %v655 = vrot.slane %v569, %v654
        %v656 = vunpack.c.l.b16 %v606
        %v657 = vunpack.c.l.b16 %v613
        %v658 = vunpack.c.l.b16 %v620
        %v659 = vunpack.c.l.b16 %v627
        %v660 = vunpack.c.l.b16 %v634
        %v661 = vunpack.c.l.b16 %v641
        %v662 = vunpack.c.l.b16 %v648
        %v663 = vunpack.c.l.b16 %v655
        %v664 = vrot.slane %v657, 7
        %vm665 = vcmask 1041409
        %v666 = vsel %vm665, %v664, %v656
        %v667 = vrot.slane %v658, 6
        %vm668 = vcmask 1042434
        %v669 = vsel %vm668, %v667, %v666
        %v670 = vrot.slane %v659, 5
        %vm671 = vcmask 1043459
        %v672 = vsel %vm671, %v670, %v669
        %v673 = vrot.slane %v660, 4
        %vm674 = vcmask 1044484
        %v675 = vsel %vm674, %v673, %v672
        %v676 = vrot.slane %v661, 3
        %vm677 = vcmask 1045509
        %v678 = vsel %vm677, %v676, %v675
        %v679 = vrot.slane %v662, 2
        %vm680 = vcmask 1046534
        %v681 = vsel %vm680, %v679, %v678
        %v682 = vrot.slane %v663, 1
        %vm683 = vcmask 1047559
        %v684 = vsel %vm683, %v682, %v681
        %v685 = vpack.c.b16 %v684, %v684
        %v695 = vunpack.c.l.s4 1983009808
        %v696 = vunpack.c.0.s8 %v695
        %v697 = vlaneseq
        %v698 = vshrl.u32 %v697, 7
        %v699 = vsub.s32 %v696, %v698
        %v700 = vrot.slane %v570, %v699
        %v702 = vunpack.c.l.s4 1983009808
        %v703 = vunpack.c.0.s8 %v702
        %v704 = vlaneseq
        %v705 = vshrl.u32 %v704, 7
        %v706 = vsub.s32 %v703, %v705
        %v707 = vrot.slane %v571, %v706
        %v709 = vunpack.c.l.s4 1983009808
        %v710 = vunpack.c.0.s8 %v709
        %v711 = vlaneseq
        %v712 = vshrl.u32 %v711, 7
        %v713 = vsub.s32 %v710, %v712
        %v714 = vrot.slane %v572, %v713
        %v716 = vunpack.c.l.s4 1983009808
        %v717 = vunpack.c.0.s8 %v716
        %v718 = vlaneseq
        %v719 = vshrl.u32 %v718, 7
        %v720 = vsub.s32 %v717, %v719
        %v721 = vrot.slane %v573, %v720
        %v723 = vunpack.c.l.s4 1983009808
        %v724 = vunpack.c.0.s8 %v723
        %v725 = vlaneseq
        %v726 = vshrl.u32 %v725, 7
        %v727 = vsub.s32 %v724, %v726
        %v728 = vrot.slane %v574, %v727
        %v730 = vunpack.c.l.s4 1983009808
        %v731 = vunpack.c.0.s8 %v730
        %v732 = vlaneseq
        %v733 = vshrl.u32 %v732, 7
        %v734 = vsub.s32 %v731, %v733
        %v735 = vrot.slane %v575, %v734
        %v737 = vunpack.c.l.s4 1983009808
        %v738 = vunpack.c.0.s8 %v737
        %v739 = vlaneseq
        %v740 = vshrl.u32 %v739, 7
        %v741 = vsub.s32 %v738, %v740
        %v742 = vrot.slane %v576, %v741
        %v744 = vunpack.c.l.s4 1983009808
        %v745 = vunpack.c.0.s8 %v744
        %v746 = vlaneseq
        %v747 = vshrl.u32 %v746, 7
        %v748 = vsub.s32 %v745, %v747
        %v749 = vrot.slane %v577, %v748
        %v750 = vunpack.c.l.b16 %v700
        %v751 = vunpack.c.l.b16 %v707
        %v752 = vunpack.c.l.b16 %v714
        %v753 = vunpack.c.l.b16 %v721
        %v754 = vunpack.c.l.b16 %v728
        %v755 = vunpack.c.l.b16 %v735
        %v756 = vunpack.c.l.b16 %v742
        %v757 = vunpack.c.l.b16 %v749
        %v758 = vrot.slane %v751, 7
        %v759 = vsel %vm665, %v758, %v750
        %v760 = vrot.slane %v752, 6
        %v761 = vsel %vm668, %v760, %v759
        %v762 = vrot.slane %v753, 5
        %v763 = vsel %vm671, %v762, %v761
        %v764 = vrot.slane %v754, 4
        %v765 = vsel %vm674, %v764, %v763
        %v766 = vrot.slane %v755, 3
        %v767 = vsel %vm677, %v766, %v765
        %v768 = vrot.slane %v756, 2
        %v769 = vsel %vm680, %v768, %v767
        %v770 = vrot.slane %v757, 1
        %v771 = vsel %vm683, %v770, %v769
        %v772 = vpack.c.b16 %v771, %v771
        %vm773 = vcmask 64512
        %v775 = vsel %vm773, %v685, 0
        %v778 = vsel %vm773, %v772, 0
        %780 = vmatprep.subr.bf16.mxu0 0
        %781 = vmatpush1.bf16.xpose.msra.mxu0 %v778
        %782 = vmatprep.subr.bf16.mxu0 0
        %783 = vmatpush1.bf16.xpose.msra.mxu0 0
        %784 = vmatprep.subr.bf16.mxu0 0
        %785 = vmatpush1.bf16.xpose.msra.mxu0 0
        %786 = vmatprep.subr.bf16.mxu0 0
        %787 = vmatpush1.bf16.xpose.msra.mxu0 0
        %788 = vmatprep.subr.bf16.mxu0 0
        %789 = vmatpush1.bf16.xpose.msra.mxu0 0
        %790 = vmatprep.subr.bf16.mxu0 0
        %791 = vmatpush1.bf16.xpose.msra.mxu0 0
        %792 = vmatprep.subr.bf16.mxu0 0
        %793 = vmatpush1.bf16.xpose.msra.mxu0 0
        %794 = vmatprep.subr.bf16.mxu0 0
        %795 = vmatpush1.bf16.xpose.msra.mxu0 0
        %796 = vmatprep.subr.bf16.mxu0 0
        %797 = vmatpush1.bf16.xpose.msra.mxu0 0
        %798 = vmatprep.subr.bf16.mxu0 0
        %799 = vmatpush1.bf16.xpose.msra.mxu0 0
        %800 = vmatprep.subr.bf16.mxu0 0
        %801 = vmatpush1.bf16.xpose.msra.mxu0 0
        %802 = vmatprep.subr.bf16.mxu0 0
        %803 = vmatpush1.bf16.xpose.msra.mxu0 0
        %804 = vmatprep.subr.bf16.mxu0 0
        %805 = vmatpush1.bf16.xpose.msra.mxu0 0
        %806 = vmatprep.subr.bf16.mxu0 0
        %807 = vmatpush1.bf16.xpose.msra.mxu0 0
        %808 = vmatprep.subr.bf16.mxu0 0
        %809 = vmatpush1.bf16.xpose.msra.mxu0 0
        %810 = vmatprep.subr.bf16.mxu0 0
        %811 = vmatpush1.bf16.xpose.msra.mxu0 0
        %812 = vmatprep.mubr.bf16.mxu0 0
        %813 = vmatmul.mubr.bf16.gmra.mrb[0].mxu0 %v775
        %v814 = vpop.f32.mrb[0].mxu0
        %v815 = vadd.f32 %v590, %v814
        %v816 = vpop.f32.mrb[0].mxu0
        %v817 = vpop.f32.mrb[0].mxu0
        %v818 = vpop.f32.mrb[0].mxu0
        %819 = vdwg.mxu0
        %v820 = vld [vmem:[#allocation2] sm:$0xff]
        %v821 = vsel %vm773, %v815, -inf
        %822 = vmax.xlane.f32.xlu0 %v821
        %v823 = vpop.xlane.xlu0 %822
        %v824 = vmax.f32 %v820, %v823
        %v825 = vsub.f32 %v820, %v824
        %v826 = vmul.f32 %v825, 1.442695
        %v827 = vpow.pop %v826
        %829 = vset.pattern.permute.xlu0 0
        %830 = vperm.xlu0 %829, %v824
        %v831 = vpop.permute.xlu0 %830
        %v833 = vsub.f32 %v815, %v831
        %v834 = vpack.c.bf16 %v833, %v833
        %v836 = vmul.bf16 %v834, 1069105081
        %v837 = vpow.bf16.pop %v836
        %v838 = vunpack.c.l.bf16 %v837
        %v839 = vsel %vm773, %v838, 0.0
        %840 = vadd.xlane.f32.xlu0 %v839
        %v841 = vpop.xlane.xlu0 %840
        %v842 = vld [vmem:[#allocation3] sm:$0xff]
        %v843 = vmul.f32 %v827, %v842
        %v844 = vadd.f32 %v843, %v841
        %vm845 = vcmask 7168
        %846 = vst.msk [vmem:[#allocation3] sm:$0xff] %vm845, %v844
        %v847 = vld [vmem:[#allocation4] sm:$0xff]
        %849 = vset.pattern.permute.xlu0 0
        %850 = vperm.xlu0 %849, %v827
        %v851 = vpop.permute.xlu0 %850
        %v853 = vmul.f32 %v851, %v847
        %v863 = vunpack.c.l.s4 1983009808
        %v864 = vunpack.c.0.s8 %v863
        %v865 = vlaneseq
        %v866 = vshrl.u32 %v865, 7
        %v867 = vsub.s32 %v864, %v866
        %v868 = vrot.slane %v578, %v867
        %v870 = vunpack.c.l.s4 1983009808
        %v871 = vunpack.c.0.s8 %v870
        %v872 = vlaneseq
        %v873 = vshrl.u32 %v872, 7
        %v874 = vsub.s32 %v871, %v873
        %v875 = vrot.slane %v579, %v874
        %v877 = vunpack.c.l.s4 1983009808
        %v878 = vunpack.c.0.s8 %v877
        %v879 = vlaneseq
        %v880 = vshrl.u32 %v879, 7
        %v881 = vsub.s32 %v878, %v880
        %v882 = vrot.slane %v580, %v881
        %v884 = vunpack.c.l.s4 1983009808
        %v885 = vunpack.c.0.s8 %v884
        %v886 = vlaneseq
        %v887 = vshrl.u32 %v886, 7
        %v888 = vsub.s32 %v885, %v887
        %v889 = vrot.slane %v581, %v888
        %v891 = vunpack.c.l.s4 1983009808
        %v892 = vunpack.c.0.s8 %v891
        %v893 = vlaneseq
        %v894 = vshrl.u32 %v893, 7
        %v895 = vsub.s32 %v892, %v894
        %v896 = vrot.slane %v582, %v895
        %v898 = vunpack.c.l.s4 1983009808
        %v899 = vunpack.c.0.s8 %v898
        %v900 = vlaneseq
        %v901 = vshrl.u32 %v900, 7
        %v902 = vsub.s32 %v899, %v901
        %v903 = vrot.slane %v583, %v902
        %v905 = vunpack.c.l.s4 1983009808
        %v906 = vunpack.c.0.s8 %v905
        %v907 = vlaneseq
        %v908 = vshrl.u32 %v907, 7
        %v909 = vsub.s32 %v906, %v908
        %v910 = vrot.slane %v584, %v909
        %v912 = vunpack.c.l.s4 1983009808
        %v913 = vunpack.c.0.s8 %v912
        %v914 = vlaneseq
        %v915 = vshrl.u32 %v914, 7
        %v916 = vsub.s32 %v913, %v915
        %v917 = vrot.slane %v585, %v916
        %v918 = vunpack.c.l.b16 %v868
        %v919 = vunpack.c.l.b16 %v875
        %v920 = vunpack.c.l.b16 %v882
        %v921 = vunpack.c.l.b16 %v889
        %v922 = vunpack.c.l.b16 %v896
        %v923 = vunpack.c.l.b16 %v903
        %v924 = vunpack.c.l.b16 %v910
        %v925 = vunpack.c.l.b16 %v917
        %v926 = vrot.slane %v919, 7
        %v927 = vsel %vm665, %v926, %v918
        %v928 = vrot.slane %v920, 6
        %v929 = vsel %vm668, %v928, %v927
        %v930 = vrot.slane %v921, 5
        %v931 = vsel %vm671, %v930, %v929
        %v932 = vrot.slane %v922, 4
        %v933 = vsel %vm674, %v932, %v931
        %v934 = vrot.slane %v923, 3
        %v935 = vsel %vm677, %v934, %v933
        %v936 = vrot.slane %v924, 2
        %v937 = vsel %vm680, %v936, %v935
        %v938 = vrot.slane %v925, 1
        %v939 = vsel %vm683, %v938, %v937
        %v940 = vpack.c.b16 %v939, %v939
        %v942 = vsel %vm773, %v837, 0
        %vm944 = vcmask 1043456
        %v946 = vsel %vm944, %v940, 0
        %948 = vmatprep.subr.bf16.mxu0 0
        %949 = vmatpush1.bf16.msra.mxu0 %v946
        %950 = vmatprep.subr.bf16.mxu0 0
        %951 = vmatpush1.bf16.msra.mxu0 0
        %952 = vmatprep.subr.bf16.mxu0 0
        %953 = vmatpush1.bf16.msra.mxu0 0
        %954 = vmatprep.subr.bf16.mxu0 0
        %955 = vmatpush1.bf16.msra.mxu0 0
        %956 = vmatprep.subr.bf16.mxu0 0
        %957 = vmatpush1.bf16.msra.mxu0 0
        %958 = vmatprep.subr.bf16.mxu0 0
        %959 = vmatpush1.bf16.msra.mxu0 0
        %960 = vmatprep.subr.bf16.mxu0 0
        %961 = vmatpush1.bf16.msra.mxu0 0
        %962 = vmatprep.subr.bf16.mxu0 0
        %963 = vmatpush1.bf16.msra.mxu0 0
        %964 = vmatprep.subr.bf16.mxu0 0
        %965 = vmatpush1.bf16.msra.mxu0 0
        %966 = vmatprep.subr.bf16.mxu0 0
        %967 = vmatpush1.bf16.msra.mxu0 0
        %968 = vmatprep.subr.bf16.mxu0 0
        %969 = vmatpush1.bf16.msra.mxu0 0
        %970 = vmatprep.subr.bf16.mxu0 0
        %971 = vmatpush1.bf16.msra.mxu0 0
        %972 = vmatprep.subr.bf16.mxu0 0
        %973 = vmatpush1.bf16.msra.mxu0 0
        %974 = vmatprep.subr.bf16.mxu0 0
        %975 = vmatpush1.bf16.msra.mxu0 0
        %976 = vmatprep.subr.bf16.mxu0 0
        %977 = vmatpush1.bf16.msra.mxu0 0
        %978 = vmatprep.subr.bf16.mxu0 0
        %979 = vmatpush1.bf16.msra.mxu0 0
        %980 = vmatprep.mubr.bf16.mxu0 0
        %981 = vmatmul.mubr.bf16.gmra.mrb[0].mxu0 %v942
        %v982 = vpop.f32.mrb[0].mxu0
        %v983 = vadd.f32 0.0, %v982
        %v984 = vpop.f32.mrb[0].mxu0
        %v985 = vpop.f32.mrb[0].mxu0
        %v986 = vpop.f32.mrb[0].mxu0
        %987 = vdwg.mxu0
        %v988 = vadd.f32 %v853, %v983
        %989 = vst.msk [vmem:[#allocation4] sm:$0xff] %vm773, %v988
        %990 = vst.msk [vmem:[#allocation2] sm:$0xff] %vm845, %v824
        %v991 = vld [vmem:[%s467] sm:$0x1]
        %v992 = vld [vmem:[%s467 + $0x2] sm:$0x1]
        %v993 = vld [vmem:[%s467 + $0x4] sm:$0x1]
        %v994 = vld [vmem:[%s467 + $0x6] sm:$0x1]
        %v995 = vld [vmem:[%s467 + $0x8] sm:$0x1]
        %v996 = vld [vmem:[%s467 + $0xa] sm:$0x1]
        %v997 = vld [vmem:[%s467 + $0xc] sm:$0x1]
        %v998 = vld [vmem:[%s467 + $0xe] sm:$0x1]
        %v999 = vld [vmem:[%s474] sm:$0x1]
        %v1000 = vld [vmem:[%s474 + $0x2] sm:$0x1]
        %v1001 = vld [vmem:[%s474 + $0x4] sm:$0x1]
        %v1002 = vld [vmem:[%s474 + $0x6] sm:$0x1]
        %v1003 = vld [vmem:[%s474 + $0x8] sm:$0x1]
        %v1004 = vld [vmem:[%s474 + $0xa] sm:$0x1]
        %v1005 = vld [vmem:[%s474 + $0xc] sm:$0x1]
        %v1006 = vld [vmem:[%s474 + $0xe] sm:$0x1]
        %v1007 = vld [vmem:[%s481] sm:$0x1]
        %v1008 = vld [vmem:[%s481 + $0x2] sm:$0x1]
        %v1009 = vld [vmem:[%s481 + $0x4] sm:$0x1]
        %v1010 = vld [vmem:[%s481 + $0x6] sm:$0x1]
        %v1011 = vld [vmem:[%s481 + $0x8] sm:$0x1]
        %v1012 = vld [vmem:[%s481 + $0xa] sm:$0x1]
        %v1013 = vld [vmem:[%s481 + $0xc] sm:$0x1]
        %v1014 = vld [vmem:[%s481 + $0xe] sm:$0x1]
        %v1024 = vunpack.c.l.s4 1983009808
        %v1025 = vunpack.c.0.s8 %v1024
        %v1026 = vlaneseq
        %v1027 = vshrl.u32 %v1026, 7
        %v1028 = vsub.s32 %v1025, %v1027
        %v1029 = vrot.slane %v991, %v1028
        %v1031 = vunpack.c.l.s4 1983009808
        %v1032 = vunpack.c.0.s8 %v1031
        %v1033 = vlaneseq
        %v1034 = vshrl.u32 %v1033, 7
        %v1035 = vsub.s32 %v1032, %v1034
        %v1036 = vrot.slane %v992, %v1035
        %v1038 = vunpack.c.l.s4 1983009808
        %v1039 = vunpack.c.0.s8 %v1038
        %v1040 = vlaneseq
        %v1041 = vshrl.u32 %v1040, 7
        %v1042 = vsub.s32 %v1039, %v1041
        %v1043 = vrot.slane %v993, %v1042
        %v1045 = vunpack.c.l.s4 1983009808
        %v1046 = vunpack.c.0.s8 %v1045
        %v1047 = vlaneseq
        %v1048 = vshrl.u32 %v1047, 7
        %v1049 = vsub.s32 %v1046, %v1048
        %v1050 = vrot.slane %v994, %v1049
        %v1052 = vunpack.c.l.s4 1983009808
        %v1053 = vunpack.c.0.s8 %v1052
        %v1054 = vlaneseq
        %v1055 = vshrl.u32 %v1054, 7
        %v1056 = vsub.s32 %v1053, %v1055
        %v1057 = vrot.slane %v995, %v1056
        %v1059 = vunpack.c.l.s4 1983009808
        %v1060 = vunpack.c.0.s8 %v1059
        %v1061 = vlaneseq
        %v1062 = vshrl.u32 %v1061, 7
        %v1063 = vsub.s32 %v1060, %v1062
        %v1064 = vrot.slane %v996, %v1063
        %v1066 = vunpack.c.l.s4 1983009808
        %v1067 = vunpack.c.0.s8 %v1066
        %v1068 = vlaneseq
        %v1069 = vshrl.u32 %v1068, 7
        %v1070 = vsub.s32 %v1067, %v1069
        %v1071 = vrot.slane %v997, %v1070
        %v1073 = vunpack.c.l.s4 1983009808
        %v1074 = vunpack.c.0.s8 %v1073
        %v1075 = vlaneseq
        %v1076 = vshrl.u32 %v1075, 7
        %v1077 = vsub.s32 %v1074, %v1076
        %v1078 = vrot.slane %v998, %v1077
        %v1079 = vunpack.c.l.b16 %v1029
        %v1080 = vunpack.c.l.b16 %v1036
        %v1081 = vunpack.c.l.b16 %v1043
        %v1082 = vunpack.c.l.b16 %v1050
        %v1083 = vunpack.c.l.b16 %v1057
        %v1084 = vunpack.c.l.b16 %v1064
        %v1085 = vunpack.c.l.b16 %v1071
        %v1086 = vunpack.c.l.b16 %v1078
        %v1087 = vrot.slane %v1079, 1
        %v1088 = vsel %vm665, %v1080, %v1087
        %v1089 = vrot.slane %v1081, 7
        %v1090 = vsel %vm668, %v1089, %v1088
        %v1091 = vrot.slane %v1082, 6
        %v1092 = vsel %vm671, %v1091, %v1090
        %v1093 = vrot.slane %v1083, 5
        %v1094 = vsel %vm674, %v1093, %v1092
        %v1095 = vrot.slane %v1084, 4
        %v1096 = vsel %vm677, %v1095, %v1094
        %v1097 = vrot.slane %v1085, 3
        %v1098 = vsel %vm680, %v1097, %v1096
        %v1099 = vrot.slane %v1086, 2
        %v1100 = vsel %vm683, %v1099, %v1098
        %v1101 = vpack.c.b16 %v1100, %v1100
        %v1111 = vunpack.c.l.s4 1983009808
        %v1112 = vunpack.c.0.s8 %v1111
        %v1113 = vlaneseq
        %v1114 = vshrl.u32 %v1113, 7
        %v1115 = vsub.s32 %v1112, %v1114
        %v1116 = vrot.slane %v999, %v1115
        %v1118 = vunpack.c.l.s4 1983009808
        %v1119 = vunpack.c.0.s8 %v1118
        %v1120 = vlaneseq
        %v1121 = vshrl.u32 %v1120, 7
        %v1122 = vsub.s32 %v1119, %v1121
        %v1123 = vrot.slane %v1000, %v1122
        %v1125 = vunpack.c.l.s4 1983009808
        %v1126 = vunpack.c.0.s8 %v1125
        %v1127 = vlaneseq
        %v1128 = vshrl.u32 %v1127, 7
        %v1129 = vsub.s32 %v1126, %v1128
        %v1130 = vrot.slane %v1001, %v1129
        %v1132 = vunpack.c.l.s4 1983009808
        %v1133 = vunpack.c.0.s8 %v1132
        %v1134 = vlaneseq
        %v1135 = vshrl.u32 %v1134, 7
        %v1136 = vsub.s32 %v1133, %v1135
        %v1137 = vrot.slane %v1002, %v1136
        %v1139 = vunpack.c.l.s4 1983009808
        %v1140 = vunpack.c.0.s8 %v1139
        %v1141 = vlaneseq
        %v1142 = vshrl.u32 %v1141, 7
        %v1143 = vsub.s32 %v1140, %v1142
        %v1144 = vrot.slane %v1003, %v1143
        %v1146 = vunpack.c.l.s4 1983009808
        %v1147 = vunpack.c.0.s8 %v1146
        %v1148 = vlaneseq
        %v1149 = vshrl.u32 %v1148, 7
        %v1150 = vsub.s32 %v1147, %v1149
        %v1151 = vrot.slane %v1004, %v1150
        %v1153 = vunpack.c.l.s4 1983009808
        %v1154 = vunpack.c.0.s8 %v1153
        %v1155 = vlaneseq
        %v1156 = vshrl.u32 %v1155, 7
        %v1157 = vsub.s32 %v1154, %v1156
        %v1158 = vrot.slane %v1005, %v1157
        %v1160 = vunpack.c.l.s4 1983009808
        %v1161 = vunpack.c.0.s8 %v1160
        %v1162 = vlaneseq
        %v1163 = vshrl.u32 %v1162, 7
        %v1164 = vsub.s32 %v1161, %v1163
        %v1165 = vrot.slane %v1006, %v1164
        %v1166 = vunpack.c.l.b16 %v1116
        %v1167 = vunpack.c.l.b16 %v1123
        %v1168 = vunpack.c.l.b16 %v1130
        %v1169 = vunpack.c.l.b16 %v1137
        %v1170 = vunpack.c.l.b16 %v1144
        %v1171 = vunpack.c.l.b16 %v1151
        %v1172 = vunpack.c.l.b16 %v1158
        %v1173 = vunpack.c.l.b16 %v1165
        %v1174 = vrot.slane %v1166, 1
        %v1175 = vsel %vm665, %v1167, %v1174
        %v1176 = vrot.slane %v1168, 7
        %v1177 = vsel %vm668, %v1176, %v1175
        %v1178 = vrot.slane %v1169, 6
        %v1179 = vsel %vm671, %v1178, %v1177
        %v1180 = vrot.slane %v1170, 5
        %v1181 = vsel %vm674, %v1180, %v1179
        %v1182 = vrot.slane %v1171, 4
        %v1183 = vsel %vm677, %v1182, %v1181
        %v1184 = vrot.slane %v1172, 3
        %v1185 = vsel %vm680, %v1184, %v1183
        %v1186 = vrot.slane %v1173, 2
        %v1187 = vsel %vm683, %v1186, %v1185
        %v1188 = vpack.c.b16 %v1187, %v1187
        %v1190 = vsel %vm773, %v1101, 0
        %v1193 = vsel %vm773, %v1188, 0
        %1195 = vmatprep.subr.bf16.mxu0 0
        %1196 = vmatpush1.bf16.xpose.msra.mxu0 %v1193
        %1197 = vmatprep.subr.bf16.mxu0 0
        %1198 = vmatpush1.bf16.xpose.msra.mxu0 0
        %1199 = vmatprep.subr.bf16.mxu0 0
        %1200 = vmatpush1.bf16.xpose.msra.mxu0 0
        %1201 = vmatprep.subr.bf16.mxu0 0
        %1202 = vmatpush1.bf16.xpose.msra.mxu0 0
        %1203 = vmatprep.subr.bf16.mxu0 0
        %1204 = vmatpush1.bf16.xpose.msra.mxu0 0
        %1205 = vmatprep.subr.bf16.mxu0 0
        %1206 = vmatpush1.bf16.xpose.msra.mxu0 0
        %1207 = vmatprep.subr.bf16.mxu0 0
        %1208 = vmatpush1.bf16.xpose.msra.mxu0 0
        %1209 = vmatprep.subr.bf16.mxu0 0
        %1210 = vmatpush1.bf16.xpose.msra.mxu0 0
        %1211 = vmatprep.subr.bf16.mxu0 0
        %1212 = vmatpush1.bf16.xpose.msra.mxu0 0
        %1213 = vmatprep.subr.bf16.mxu0 0
        %1214 = vmatpush1.bf16.xpose.msra.mxu0 0
        %1215 = vmatprep.subr.bf16.mxu0 0
        %1216 = vmatpush1.bf16.xpose.msra.mxu0 0
        %1217 = vmatprep.subr.bf16.mxu0 0
        %1218 = vmatpush1.bf16.xpose.msra.mxu0 0
        %1219 = vmatprep.subr.bf16.mxu0 0
        %1220 = vmatpush1.bf16.xpose.msra.mxu0 0
        %1221 = vmatprep.subr.bf16.mxu0 0
        %1222 = vmatpush1.bf16.xpose.msra.mxu0 0
        %1223 = vmatprep.subr.bf16.mxu0 0
        %1224 = vmatpush1.bf16.xpose.msra.mxu0 0
        %1225 = vmatprep.subr.bf16.mxu0 0
        %1226 = vmatpush1.bf16.xpose.msra.mxu0 0
        %1227 = vmatprep.mubr.bf16.mxu0 0
        %1228 = vmatmul.mubr.bf16.gmra.mrb[0].mxu0 %v1190
        %v1229 = vpop.f32.mrb[0].mxu0
        %v1230 = vadd.f32 %v590, %v1229
        %v1231 = vpop.f32.mrb[0].mxu0
        %v1232 = vpop.f32.mrb[0].mxu0
        %v1233 = vpop.f32.mrb[0].mxu0
        %1234 = vdwg.mxu0
        %s1235 = scalar_lea.vmem [#allocation2], 8
        %v1236 = vld [vmem:[%s1235] sm:$0xff]
        %v1237 = vsel %vm773, %v1230, -inf
        %1238 = vmax.xlane.f32.xlu0 %v1237
        %v1239 = vpop.xlane.xlu0 %1238
        %v1240 = vmax.f32 %v1236, %v1239
        %v1241 = vsub.f32 %v1236, %v1240
        %v1242 = vmul.f32 %v1241, 1.442695
        %v1243 = vpow.pop %v1242
        %1245 = vset.pattern.permute.xlu0 0
        %1246 = vperm.xlu0 %1245, %v1240
        %v1247 = vpop.permute.xlu0 %1246
        %v1249 = vsub.f32 %v1230, %v1247
        %v1250 = vpack.c.bf16 %v1249, %v1249
        %v1252 = vmul.bf16 %v1250, 1069105081
        %v1253 = vpow.bf16.pop %v1252
        %v1254 = vunpack.c.l.bf16 %v1253
        %v1255 = vsel %vm773, %v1254, 0.0
        %1256 = vadd.xlane.f32.xlu0 %v1255
        %v1257 = vpop.xlane.xlu0 %1256
        %s1258 = scalar_lea.vmem [#allocation3], 8
        %v1259 = vld [vmem:[%s1258] sm:$0xff]
        %v1260 = vmul.f32 %v1243, %v1259
        %v1261 = vadd.f32 %v1260, %v1257
        %1262 = vst.msk [vmem:[%s1258] sm:$0xff] %vm845, %v1261
        %s1263 = scalar_lea.vmem [#allocation4], 8
        %v1264 = vld [vmem:[%s1263] sm:$0xff]
        %1266 = vset.pattern.permute.xlu0 0
        %1267 = vperm.xlu0 %1266, %v1243
        %v1268 = vpop.permute.xlu0 %1267
        %v1270 = vmul.f32 %v1268, %v1264
        %v1280 = vunpack.c.l.s4 1983009808
        %v1281 = vunpack.c.0.s8 %v1280
        %v1282 = vlaneseq
        %v1283 = vshrl.u32 %v1282, 7
        %v1284 = vsub.s32 %v1281, %v1283
        %v1285 = vrot.slane %v1007, %v1284
        %v1287 = vunpack.c.l.s4 1983009808
        %v1288 = vunpack.c.0.s8 %v1287
        %v1289 = vlaneseq
        %v1290 = vshrl.u32 %v1289, 7
        %v1291 = vsub.s32 %v1288, %v1290
        %v1292 = vrot.slane %v1008, %v1291
        %v1294 = vunpack.c.l.s4 1983009808
        %v1295 = vunpack.c.0.s8 %v1294
        %v1296 = vlaneseq
        %v1297 = vshrl.u32 %v1296, 7
        %v1298 = vsub.s32 %v1295, %v1297
        %v1299 = vrot.slane %v1009, %v1298
        %v1301 = vunpack.c.l.s4 1983009808
        %v1302 = vunpack.c.0.s8 %v1301
        %v1303 = vlaneseq
        %v1304 = vshrl.u32 %v1303, 7
        %v1305 = vsub.s32 %v1302, %v1304
        %v1306 = vrot.slane %v1010, %v1305
        %v1308 = vunpack.c.l.s4 1983009808
        %v1309 = vunpack.c.0.s8 %v1308
        %v1310 = vlaneseq
        %v1311 = vshrl.u32 %v1310, 7
        %v1312 = vsub.s32 %v1309, %v1311
        %v1313 = vrot.slane %v1011, %v1312
        %v1315 = vunpack.c.l.s4 1983009808
        %v1316 = vunpack.c.0.s8 %v1315
        %v1317 = vlaneseq
        %v1318 = vshrl.u32 %v1317, 7
        %v1319 = vsub.s32 %v1316, %v1318
        %v1320 = vrot.slane %v1012, %v1319
        %v1322 = vunpack.c.l.s4 1983009808
        %v1323 = vunpack.c.0.s8 %v1322
        %v1324 = vlaneseq
        %v1325 = vshrl.u32 %v1324, 7
        %v1326 = vsub.s32 %v1323, %v1325
        %v1327 = vrot.slane %v1013, %v1326
        %v1329 = vunpack.c.l.s4 1983009808
        %v1330 = vunpack.c.0.s8 %v1329
        %v1331 = vlaneseq
        %v1332 = vshrl.u32 %v1331, 7
        %v1333 = vsub.s32 %v1330, %v1332
        %v1334 = vrot.slane %v1014, %v1333
        %v1335 = vunpack.c.l.b16 %v1285
        %v1336 = vunpack.c.l.b16 %v1292
        %v1337 = vunpack.c.l.b16 %v1299
        %v1338 = vunpack.c.l.b16 %v1306
        %v1339 = vunpack.c.l.b16 %v1313
        %v1340 = vunpack.c.l.b16 %v1320
        %v1341 = vunpack.c.l.b16 %v1327
        %v1342 = vunpack.c.l.b16 %v1334
        %v1343 = vrot.slane %v1335, 1
        %v1344 = vsel %vm665, %v1336, %v1343
        %v1345 = vrot.slane %v1337, 7
        %v1346 = vsel %vm668, %v1345, %v1344
        %v1347 = vrot.slane %v1338, 6
        %v1348 = vsel %vm671, %v1347, %v1346
        %v1349 = vrot.slane %v1339, 5
        %v1350 = vsel %vm674, %v1349, %v1348
        %v1351 = vrot.slane %v1340, 4
        %v1352 = vsel %vm677, %v1351, %v1350
        %v1353 = vrot.slane %v1341, 3
        %v1354 = vsel %vm680, %v1353, %v1352
        %v1355 = vrot.slane %v1342, 2
        %v1356 = vsel %vm683, %v1355, %v1354
        %v1357 = vpack.c.b16 %v1356, %v1356
        %v1359 = vsel %vm773, %v1253, 0
        %v1362 = vsel %vm944, %v1357, 0
        %1364 = vmatprep.subr.bf16.mxu0 0
        %1365 = vmatpush1.bf16.msra.mxu0 %v1362
        %1366 = vmatprep.subr.bf16.mxu0 0
        %1367 = vmatpush1.bf16.msra.mxu0 0
        %1368 = vmatprep.subr.bf16.mxu0 0
        %1369 = vmatpush1.bf16.msra.mxu0 0
        %1370 = vmatprep.subr.bf16.mxu0 0
        %1371 = vmatpush1.bf16.msra.mxu0 0
        %1372 = vmatprep.subr.bf16.mxu0 0
        %1373 = vmatpush1.bf16.msra.mxu0 0
        %1374 = vmatprep.subr.bf16.mxu0 0
        %1375 = vmatpush1.bf16.msra.mxu0 0
        %1376 = vmatprep.subr.bf16.mxu0 0
        %1377 = vmatpush1.bf16.msra.mxu0 0
        %1378 = vmatprep.subr.bf16.mxu0 0
        %1379 = vmatpush1.bf16.msra.mxu0 0
        %1380 = vmatprep.subr.bf16.mxu0 0
        %1381 = vmatpush1.bf16.msra.mxu0 0
        %1382 = vmatprep.subr.bf16.mxu0 0
        %1383 = vmatpush1.bf16.msra.mxu0 0
        %1384 = vmatprep.subr.bf16.mxu0 0
        %1385 = vmatpush1.bf16.msra.mxu0 0
        %1386 = vmatprep.subr.bf16.mxu0 0
        %1387 = vmatpush1.bf16.msra.mxu0 0
        %1388 = vmatprep.subr.bf16.mxu0 0
        %1389 = vmatpush1.bf16.msra.mxu0 0
        %1390 = vmatprep.subr.bf16.mxu0 0
        %1391 = vmatpush1.bf16.msra.mxu0 0
        %1392 = vmatprep.subr.bf16.mxu0 0
        %1393 = vmatpush1.bf16.msra.mxu0 0
        %1394 = vmatprep.subr.bf16.mxu0 0
        %1395 = vmatpush1.bf16.msra.mxu0 0
        %1396 = vmatprep.mubr.bf16.mxu0 0
        %1397 = vmatmul.mubr.bf16.gmra.mrb[0].mxu0 %v1359
        %v1398 = vpop.f32.mrb[0].mxu0
        %v1399 = vadd.f32 0.0, %v1398
        %v1400 = vpop.f32.mrb[0].mxu0
        %v1401 = vpop.f32.mrb[0].mxu0
        %v1402 = vpop.f32.mrb[0].mxu0
        %1403 = vdwg.mxu0
        %v1404 = vadd.f32 %v1270, %v1399
        %1405 = vst.msk [vmem:[%s1263] sm:$0xff] %vm773, %v1404
        %1406 = vst.msk [vmem:[%s1235] sm:$0xff] %vm845, %v1240
        %v1407 = vld [vmem:[%s467] sm:$0x2]
        %v1408 = vld [vmem:[%s467 + $0x2] sm:$0x2]
        %v1409 = vld [vmem:[%s467 + $0x4] sm:$0x2]
        %v1410 = vld [vmem:[%s467 + $0x6] sm:$0x2]
        %v1411 = vld [vmem:[%s467 + $0x8] sm:$0x2]
        %v1412 = vld [vmem:[%s467 + $0xa] sm:$0x2]
        %v1413 = vld [vmem:[%s467 + $0xc] sm:$0x2]
        %v1414 = vld [vmem:[%s467 + $0xe] sm:$0x2]
        %v1415 = vld [vmem:[%s474] sm:$0x2]
        %v1416 = vld [vmem:[%s474 + $0x2] sm:$0x2]
        %v1417 = vld [vmem:[%s474 + $0x4] sm:$0x2]
        %v1418 = vld [vmem:[%s474 + $0x6] sm:$0x2]
        %v1419 = vld [vmem:[%s474 + $0x8] sm:$0x2]
        %v1420 = vld [vmem:[%s474 + $0xa] sm:$0x2]
        %v1421 = vld [vmem:[%s474 + $0xc] sm:$0x2]
        %v1422 = vld [vmem:[%s474 + $0xe] sm:$0x2]
        %v1423 = vld [vmem:[%s481] sm:$0x2]
        %v1424 = vld [vmem:[%s481 + $0x2] sm:$0x2]
        %v1425 = vld [vmem:[%s481 + $0x4] sm:$0x2]
        %v1426 = vld [vmem:[%s481 + $0x6] sm:$0x2]
        %v1427 = vld [vmem:[%s481 + $0x8] sm:$0x2]
        %v1428 = vld [vmem:[%s481 + $0xa] sm:$0x2]
        %v1429 = vld [vmem:[%s481 + $0xc] sm:$0x2]
        %v1430 = vld [vmem:[%s481 + $0xe] sm:$0x2]
        %v1440 = vunpack.c.l.s4 1983009808
        %v1441 = vunpack.c.0.s8 %v1440
        %v1442 = vlaneseq
        %v1443 = vshrl.u32 %v1442, 7
        %v1444 = vsub.s32 %v1441, %v1443
        %v1445 = vrot.slane %v1407, %v1444
        %v1447 = vunpack.c.l.s4 1983009808
        %v1448 = vunpack.c.0.s8 %v1447
        %v1449 = vlaneseq
        %v1450 = vshrl.u32 %v1449, 7
        %v1451 = vsub.s32 %v1448, %v1450
        %v1452 = vrot.slane %v1408, %v1451
        %v1454 = vunpack.c.l.s4 1983009808
        %v1455 = vunpack.c.0.s8 %v1454
        %v1456 = vlaneseq
        %v1457 = vshrl.u32 %v1456, 7
        %v1458 = vsub.s32 %v1455, %v1457
        %v1459 = vrot.slane %v1409, %v1458
        %v1461 = vunpack.c.l.s4 1983009808
        %v1462 = vunpack.c.0.s8 %v1461
        %v1463 = vlaneseq
        %v1464 = vshrl.u32 %v1463, 7
        %v1465 = vsub.s32 %v1462, %v1464
        %v1466 = vrot.slane %v1410, %v1465
        %v1468 = vunpack.c.l.s4 1983009808
        %v1469 = vunpack.c.0.s8 %v1468
        %v1470 = vlaneseq
        %v1471 = vshrl.u32 %v1470, 7
        %v1472 = vsub.s32 %v1469, %v1471
        %v1473 = vrot.slane %v1411, %v1472
        %v1475 = vunpack.c.l.s4 1983009808
        %v1476 = vunpack.c.0.s8 %v1475
        %v1477 = vlaneseq
        %v1478 = vshrl.u32 %v1477, 7
        %v1479 = vsub.s32 %v1476, %v1478
        %v1480 = vrot.slane %v1412, %v1479
        %v1482 = vunpack.c.l.s4 1983009808
        %v1483 = vunpack.c.0.s8 %v1482
        %v1484 = vlaneseq
        %v1485 = vshrl.u32 %v1484, 7
        %v1486 = vsub.s32 %v1483, %v1485
        %v1487 = vrot.slane %v1413, %v1486
        %v1489 = vunpack.c.l.s4 1983009808
        %v1490 = vunpack.c.0.s8 %v1489
        %v1491 = vlaneseq
        %v1492 = vshrl.u32 %v1491, 7
        %v1493 = vsub.s32 %v1490, %v1492
        %v1494 = vrot.slane %v1414, %v1493
        %v1495 = vunpack.c.l.b16 %v1445
        %v1496 = vunpack.c.l.b16 %v1452
        %v1497 = vunpack.c.l.b16 %v1459
        %v1498 = vunpack.c.l.b16 %v1466
        %v1499 = vunpack.c.l.b16 %v1473
        %v1500 = vunpack.c.l.b16 %v1480
        %v1501 = vunpack.c.l.b16 %v1487
        %v1502 = vunpack.c.l.b16 %v1494
        %v1503 = vrot.slane %v1495, 2
        %v1504 = vrot.slane %v1496, 1
        %v1505 = vsel %vm665, %v1504, %v1503
        %v1506 = vsel %vm668, %v1497, %v1505
        %v1507 = vrot.slane %v1498, 7
        %v1508 = vsel %vm671, %v1507, %v1506
        %v1509 = vrot.slane %v1499, 6
        %v1510 = vsel %vm674, %v1509, %v1508
        %v1511 = vrot.slane %v1500, 5
        %v1512 = vsel %vm677, %v1511, %v1510
        %v1513 = vrot.slane %v1501, 4
        %v1514 = vsel %vm680, %v1513, %v1512
        %v1515 = vrot.slane %v1502, 3
        %v1516 = vsel %vm683, %v1515, %v1514
        %v1517 = vpack.c.b16 %v1516, %v1516
        %v1527 = vunpack.c.l.s4 1983009808
        %v1528 = vunpack.c.0.s8 %v1527
        %v1529 = vlaneseq
        %v1530 = vshrl.u32 %v1529, 7
        %v1531 = vsub.s32 %v1528, %v1530
        %v1532 = vrot.slane %v1415, %v1531
        %v1534 = vunpack.c.l.s4 1983009808
        %v1535 = vunpack.c.0.s8 %v1534
        %v1536 = vlaneseq
        %v1537 = vshrl.u32 %v1536, 7
        %v1538 = vsub.s32 %v1535, %v1537
        %v1539 = vrot.slane %v1416, %v1538
        %v1541 = vunpack.c.l.s4 1983009808
        %v1542 = vunpack.c.0.s8 %v1541
        %v1543 = vlaneseq
        %v1544 = vshrl.u32 %v1543, 7
        %v1545 = vsub.s32 %v1542, %v1544
        %v1546 = vrot.slane %v1417, %v1545
        %v1548 = vunpack.c.l.s4 1983009808
        %v1549 = vunpack.c.0.s8 %v1548
        %v1550 = vlaneseq
        %v1551 = vshrl.u32 %v1550, 7
        %v1552 = vsub.s32 %v1549, %v1551
        %v1553 = vrot.slane %v1418, %v1552
        %v1555 = vunpack.c.l.s4 1983009808
        %v1556 = vunpack.c.0.s8 %v1555
        %v1557 = vlaneseq
        %v1558 = vshrl.u32 %v1557, 7
        %v1559 = vsub.s32 %v1556, %v1558
        %v1560 = vrot.slane %v1419, %v1559
        %v1562 = vunpack.c.l.s4 1983009808
        %v1563 = vunpack.c.0.s8 %v1562
        %v1564 = vlaneseq
        %v1565 = vshrl.u32 %v1564, 7
        %v1566 = vsub.s32 %v1563, %v1565
        %v1567 = vrot.slane %v1420, %v1566
        %v1569 = vunpack.c.l.s4 1983009808
        %v1570 = vunpack.c.0.s8 %v1569
        %v1571 = vlaneseq
        %v1572 = vshrl.u32 %v1571, 7
        %v1573 = vsub.s32 %v1570, %v1572
        %v1574 = vrot.slane %v1421, %v1573
        %v1576 = vunpack.c.l.s4 1983009808
        %v1577 = vunpack.c.0.s8 %v1576
        %v1578 = vlaneseq
        %v1579 = vshrl.u32 %v1578, 7
        %v1580 = vsub.s32 %v1577, %v1579
        %v1581 = vrot.slane %v1422, %v1580
        %v1582 = vunpack.c.l.b16 %v1532
        %v1583 = vunpack.c.l.b16 %v1539
        %v1584 = vunpack.c.l.b16 %v1546
        %v1585 = vunpack.c.l.b16 %v1553
        %v1586 = vunpack.c.l.b16 %v1560
        %v1587 = vunpack.c.l.b16 %v1567
        %v1588 = vunpack.c.l.b16 %v1574
        %v1589 = vunpack.c.l.b16 %v1581
        %v1590 = vrot.slane %v1582, 2
        %v1591 = vrot.slane %v1583, 1
        %v1592 = vsel %vm665, %v1591, %v1590
        %v1593 = vsel %vm668, %v1584, %v1592
        %v1594 = vrot.slane %v1585, 7
        %v1595 = vsel %vm671, %v1594, %v1593
        %v1596 = vrot.slane %v1586, 6
        %v1597 = vsel %vm674, %v1596, %v1595
        %v1598 = vrot.slane %v1587, 5
        %v1599 = vsel %vm677, %v1598, %v1597
        %v1600 = vrot.slane %v1588, 4
        %v1601 = vsel %vm680, %v1600, %v1599
        %v1602 = vrot.slane %v1589, 3
        %v1603 = vsel %vm683, %v1602, %v1601
        %v1604 = vpack.c.b16 %v1603, %v1603
        %v1606 = vsel %vm773, %v1517, 0
        %v1609 = vsel %vm773, %v1604, 0
        %1611 = vmatprep.subr.bf16.mxu0 0
        %1612 = vmatpush1.bf16.xpose.msra.mxu0 %v1609
        %1613 = vmatprep.subr.bf16.mxu0 0
        %1614 = vmatpush1.bf16.xpose.msra.mxu0 0
        %1615 = vmatprep.subr.bf16.mxu0 0
        %1616 = vmatpush1.bf16.xpose.msra.mxu0 0
        %1617 = vmatprep.subr.bf16.mxu0 0
        %1618 = vmatpush1.bf16.xpose.msra.mxu0 0
        %1619 = vmatprep.subr.bf16.mxu0 0
        %1620 = vmatpush1.bf16.xpose.msra.mxu0 0
        %1621 = vmatprep.subr.bf16.mxu0 0
        %1622 = vmatpush1.bf16.xpose.msra.mxu0 0
        %1623 = vmatprep.subr.bf16.mxu0 0
        %1624 = vmatpush1.bf16.xpose.msra.mxu0 0
        %1625 = vmatprep.subr.bf16.mxu0 0
        %1626 = vmatpush1.bf16.xpose.msra.mxu0 0
        %1627 = vmatprep.subr.bf16.mxu0 0
        %1628 = vmatpush1.bf16.xpose.msra.mxu0 0
        %1629 = vmatprep.subr.bf16.mxu0 0
        %1630 = vmatpush1.bf16.xpose.msra.mxu0 0
        %1631 = vmatprep.subr.bf16.mxu0 0
        %1632 = vmatpush1.bf16.xpose.msra.mxu0 0
        %1633 = vmatprep.subr.bf16.mxu0 0
        %1634 = vmatpush1.bf16.xpose.msra.mxu0 0
        %1635 = vmatprep.subr.bf16.mxu0 0
        %1636 = vmatpush1.bf16.xpose.msra.mxu0 0
        %1637 = vmatprep.subr.bf16.mxu0 0
        %1638 = vmatpush1.bf16.xpose.msra.mxu0 0
        %1639 = vmatprep.subr.bf16.mxu0 0
        %1640 = vmatpush1.bf16.xpose.msra.mxu0 0
        %1641 = vmatprep.subr.bf16.mxu0 0
        %1642 = vmatpush1.bf16.xpose.msra.mxu0 0
        %1643 = vmatprep.mubr.bf16.mxu0 0
        %1644 = vmatmul.mubr.bf16.gmra.mrb[0].mxu0 %v1606
        %v1645 = vpop.f32.mrb[0].mxu0
        %v1646 = vadd.f32 %v590, %v1645
        %v1647 = vpop.f32.mrb[0].mxu0
        %v1648 = vpop.f32.mrb[0].mxu0
        %v1649 = vpop.f32.mrb[0].mxu0
        %1650 = vdwg.mxu0
        %s1651 = scalar_lea.vmem [#allocation2], 16
        %v1652 = vld [vmem:[%s1651] sm:$0xff]
        %v1653 = vsel %vm773, %v1646, -inf
        %1654 = vmax.xlane.f32.xlu0 %v1653
        %v1655 = vpop.xlane.xlu0 %1654
        %v1656 = vmax.f32 %v1652, %v1655
        %v1657 = vsub.f32 %v1652, %v1656
        %v1658 = vmul.f32 %v1657, 1.442695
        %v1659 = vpow.pop %v1658
        %1661 = vset.pattern.permute.xlu0 0
        %1662 = vperm.xlu0 %1661, %v1656
        %v1663 = vpop.permute.xlu0 %1662
        %v1665 = vsub.f32 %v1646, %v1663
        %v1666 = vpack.c.bf16 %v1665, %v1665
        %v1668 = vmul.bf16 %v1666, 1069105081
        %v1669 = vpow.bf16.pop %v1668
        %v1670 = vunpack.c.l.bf16 %v1669
        %v1671 = vsel %vm773, %v1670, 0.0
        %1672 = vadd.xlane.f32.xlu0 %v1671
        %v1673 = vpop.xlane.xlu0 %1672
        %s1674 = scalar_lea.vmem [#allocation3], 16
        %v1675 = vld [vmem:[%s1674] sm:$0xff]
        %v1676 = vmul.f32 %v1659, %v1675
        %v1677 = vadd.f32 %v1676, %v1673
        %1678 = vst.msk [vmem:[%s1674] sm:$0xff] %vm845, %v1677
        %s1679 = scalar_lea.vmem [#allocation4], 16
        %v1680 = vld [vmem:[%s1679] sm:$0xff]
        %1682 = vset.pattern.permute.xlu0 0
        %1683 = vperm.xlu0 %1682, %v1659
        %v1684 = vpop.permute.xlu0 %1683
        %v1686 = vmul.f32 %v1684, %v1680
        %v1696 = vunpack.c.l.s4 1983009808
        %v1697 = vunpack.c.0.s8 %v1696
        %v1698 = vlaneseq
        %v1699 = vshrl.u32 %v1698, 7
        %v1700 = vsub.s32 %v1697, %v1699
        %v1701 = vrot.slane %v1423, %v1700
        %v1703 = vunpack.c.l.s4 1983009808
        %v1704 = vunpack.c.0.s8 %v1703
        %v1705 = vlaneseq
        %v1706 = vshrl.u32 %v1705, 7
        %v1707 = vsub.s32 %v1704, %v1706
        %v1708 = vrot.slane %v1424, %v1707
        %v1710 = vunpack.c.l.s4 1983009808
        %v1711 = vunpack.c.0.s8 %v1710
        %v1712 = vlaneseq
        %v1713 = vshrl.u32 %v1712, 7
        %v1714 = vsub.s32 %v1711, %v1713
        %v1715 = vrot.slane %v1425, %v1714
        %v1717 = vunpack.c.l.s4 1983009808
        %v1718 = vunpack.c.0.s8 %v1717
        %v1719 = vlaneseq
        %v1720 = vshrl.u32 %v1719, 7
        %v1721 = vsub.s32 %v1718, %v1720
        %v1722 = vrot.slane %v1426, %v1721
        %v1724 = vunpack.c.l.s4 1983009808
        %v1725 = vunpack.c.0.s8 %v1724
        %v1726 = vlaneseq
        %v1727 = vshrl.u32 %v1726, 7
        %v1728 = vsub.s32 %v1725, %v1727
        %v1729 = vrot.slane %v1427, %v1728
        %v1731 = vunpack.c.l.s4 1983009808
        %v1732 = vunpack.c.0.s8 %v1731
        %v1733 = vlaneseq
        %v1734 = vshrl.u32 %v1733, 7
        %v1735 = vsub.s32 %v1732, %v1734
        %v1736 = vrot.slane %v1428, %v1735
        %v1738 = vunpack.c.l.s4 1983009808
        %v1739 = vunpack.c.0.s8 %v1738
        %v1740 = vlaneseq
        %v1741 = vshrl.u32 %v1740, 7
        %v1742 = vsub.s32 %v1739, %v1741
        %v1743 = vrot.slane %v1429, %v1742
        %v1745 = vunpack.c.l.s4 1983009808
        %v1746 = vunpack.c.0.s8 %v1745
        %v1747 = vlaneseq
        %v1748 = vshrl.u32 %v1747, 7
        %v1749 = vsub.s32 %v1746, %v1748
        %v1750 = vrot.slane %v1430, %v1749
        %v1751 = vunpack.c.l.b16 %v1701
        %v1752 = vunpack.c.l.b16 %v1708
        %v1753 = vunpack.c.l.b16 %v1715
        %v1754 = vunpack.c.l.b16 %v1722
        %v1755 = vunpack.c.l.b16 %v1729
        %v1756 = vunpack.c.l.b16 %v1736
        %v1757 = vunpack.c.l.b16 %v1743
        %v1758 = vunpack.c.l.b16 %v1750
        %v1759 = vrot.slane %v1751, 2
        %v1760 = vrot.slane %v1752, 1
        %v1761 = vsel %vm665, %v1760, %v1759
        %v1762 = vsel %vm668, %v1753, %v1761
        %v1763 = vrot.slane %v1754, 7
        %v1764 = vsel %vm671, %v1763, %v1762
        %v1765 = vrot.slane %v1755, 6
        %v1766 = vsel %vm674, %v1765, %v1764
        %v1767 = vrot.slane %v1756, 5
        %v1768 = vsel %vm677, %v1767, %v1766
        %v1769 = vrot.slane %v1757, 4
        %v1770 = vsel %vm680, %v1769, %v1768
        %v1771 = vrot.slane %v1758, 3
        %v1772 = vsel %vm683, %v1771, %v1770
        %v1773 = vpack.c.b16 %v1772, %v1772
        %v1775 = vsel %vm773, %v1669, 0
        %v1778 = vsel %vm944, %v1773, 0
        %1780 = vmatprep.subr.bf16.mxu0 0
        %1781 = vmatpush1.bf16.msra.mxu0 %v1778
        %1782 = vmatprep.subr.bf16.mxu0 0
        %1783 = vmatpush1.bf16.msra.mxu0 0
        %1784 = vmatprep.subr.bf16.mxu0 0
        %1785 = vmatpush1.bf16.msra.mxu0 0
        %1786 = vmatprep.subr.bf16.mxu0 0
        %1787 = vmatpush1.bf16.msra.mxu0 0
        %1788 = vmatprep.subr.bf16.mxu0 0
        %1789 = vmatpush1.bf16.msra.mxu0 0
        %1790 = vmatprep.subr.bf16.mxu0 0
        %1791 = vmatpush1.bf16.msra.mxu0 0
        %1792 = vmatprep.subr.bf16.mxu0 0
        %1793 = vmatpush1.bf16.msra.mxu0 0
        %1794 = vmatprep.subr.bf16.mxu0 0
        %1795 = vmatpush1.bf16.msra.mxu0 0
        %1796 = vmatprep.subr.bf16.mxu0 0
        %1797 = vmatpush1.bf16.msra.mxu0 0
        %1798 = vmatprep.subr.bf16.mxu0 0
        %1799 = vmatpush1.bf16.msra.mxu0 0
        %1800 = vmatprep.subr.bf16.mxu0 0
        %1801 = vmatpush1.bf16.msra.mxu0 0
        %1802 = vmatprep.subr.bf16.mxu0 0
        %1803 = vmatpush1.bf16.msra.mxu0 0
        %1804 = vmatprep.subr.bf16.mxu0 0
        %1805 = vmatpush1.bf16.msra.mxu0 0
        %1806 = vmatprep.subr.bf16.mxu0 0
        %1807 = vmatpush1.bf16.msra.mxu0 0
        %1808 = vmatprep.subr.bf16.mxu0 0
        %1809 = vmatpush1.bf16.msra.mxu0 0
        %1810 = vmatprep.subr.bf16.mxu0 0
        %1811 = vmatpush1.bf16.msra.mxu0 0
        %1812 = vmatprep.mubr.bf16.mxu0 0
        %1813 = vmatmul.mubr.bf16.gmra.mrb[0].mxu0 %v1775
        %v1814 = vpop.f32.mrb[0].mxu0
        %v1815 = vadd.f32 0.0, %v1814
        %v1816 = vpop.f32.mrb[0].mxu0
        %v1817 = vpop.f32.mrb[0].mxu0
        %v1818 = vpop.f32.mrb[0].mxu0
        %1819 = vdwg.mxu0
        %v1820 = vadd.f32 %v1686, %v1815
        %1821 = vst.msk [vmem:[%s1679] sm:$0xff] %vm773, %v1820
        %1822 = vst.msk [vmem:[%s1651] sm:$0xff] %vm845, %v1656
        %v1823 = vld [vmem:[%s467] sm:$0x2]
        %v1824 = vld [vmem:[%s467 + $0x2] sm:$0x2]
        %v1825 = vld [vmem:[%s467 + $0x4] sm:$0x2]
        %v1826 = vld [vmem:[%s467 + $0x6] sm:$0x2]
        %v1827 = vld [vmem:[%s467 + $0x8] sm:$0x2]
        %v1828 = vld [vmem:[%s467 + $0xa] sm:$0x2]
        %v1829 = vld [vmem:[%s467 + $0xc] sm:$0x2]
        %v1830 = vld [vmem:[%s467 + $0xe] sm:$0x2]
        %v1831 = vld [vmem:[%s474] sm:$0x2]
        %v1832 = vld [vmem:[%s474 + $0x2] sm:$0x2]
        %v1833 = vld [vmem:[%s474 + $0x4] sm:$0x2]
        %v1834 = vld [vmem:[%s474 + $0x6] sm:$0x2]
        %v1835 = vld [vmem:[%s474 + $0x8] sm:$0x2]
        %v1836 = vld [vmem:[%s474 + $0xa] sm:$0x2]
        %v1837 = vld [vmem:[%s474 + $0xc] sm:$0x2]
        %v1838 = vld [vmem:[%s474 + $0xe] sm:$0x2]
        %v1839 = vld [vmem:[%s481] sm:$0x2]
        %v1840 = vld [vmem:[%s481 + $0x2] sm:$0x2]
        %v1841 = vld [vmem:[%s481 + $0x4] sm:$0x2]
        %v1842 = vld [vmem:[%s481 + $0x6] sm:$0x2]
        %v1843 = vld [vmem:[%s481 + $0x8] sm:$0x2]
        %v1844 = vld [vmem:[%s481 + $0xa] sm:$0x2]
        %v1845 = vld [vmem:[%s481 + $0xc] sm:$0x2]
        %v1846 = vld [vmem:[%s481 + $0xe] sm:$0x2]
        %v1856 = vunpack.c.l.s4 1983009808
        %v1857 = vunpack.c.0.s8 %v1856
        %v1858 = vlaneseq
        %v1859 = vshrl.u32 %v1858, 7
        %v1860 = vsub.s32 %v1857, %v1859
        %v1861 = vrot.slane %v1823, %v1860
        %v1863 = vunpack.c.l.s4 1983009808
        %v1864 = vunpack.c.0.s8 %v1863
        %v1865 = vlaneseq
        %v1866 = vshrl.u32 %v1865, 7
        %v1867 = vsub.s32 %v1864, %v1866
        %v1868 = vrot.slane %v1824, %v1867
        %v1870 = vunpack.c.l.s4 1983009808
        %v1871 = vunpack.c.0.s8 %v1870
        %v1872 = vlaneseq
        %v1873 = vshrl.u32 %v1872, 7
        %v1874 = vsub.s32 %v1871, %v1873
        %v1875 = vrot.slane %v1825, %v1874
        %v1877 = vunpack.c.l.s4 1983009808
        %v1878 = vunpack.c.0.s8 %v1877
        %v1879 = vlaneseq
        %v1880 = vshrl.u32 %v1879, 7
        %v1881 = vsub.s32 %v1878, %v1880
        %v1882 = vrot.slane %v1826, %v1881
        %v1884 = vunpack.c.l.s4 1983009808
        %v1885 = vunpack.c.0.s8 %v1884
        %v1886 = vlaneseq
        %v1887 = vshrl.u32 %v1886, 7
        %v1888 = vsub.s32 %v1885, %v1887
        %v1889 = vrot.slane %v1827, %v1888
        %v1891 = vunpack.c.l.s4 1983009808
        %v1892 = vunpack.c.0.s8 %v1891
        %v1893 = vlaneseq
        %v1894 = vshrl.u32 %v1893, 7
        %v1895 = vsub.s32 %v1892, %v1894
        %v1896 = vrot.slane %v1828, %v1895
        %v1898 = vunpack.c.l.s4 1983009808
        %v1899 = vunpack.c.0.s8 %v1898
        %v1900 = vlaneseq
        %v1901 = vshrl.u32 %v1900, 7
        %v1902 = vsub.s32 %v1899, %v1901
        %v1903 = vrot.slane %v1829, %v1902
        %v1905 = vunpack.c.l.s4 1983009808
        %v1906 = vunpack.c.0.s8 %v1905
        %v1907 = vlaneseq
        %v1908 = vshrl.u32 %v1907, 7
        %v1909 = vsub.s32 %v1906, %v1908
        %v1910 = vrot.slane %v1830, %v1909
        %v1911 = vunpack.c.l.b16 %v1861
        %v1912 = vunpack.c.l.b16 %v1868
        %v1913 = vunpack.c.l.b16 %v1875
        %v1914 = vunpack.c.l.b16 %v1882
        %v1915 = vunpack.c.l.b16 %v1889
        %v1916 = vunpack.c.l.b16 %v1896
        %v1917 = vunpack.c.l.b16 %v1903
        %v1918 = vunpack.c.l.b16 %v1910
        %v1919 = vrot.slane %v1911, 3
        %v1920 = vrot.slane %v1912, 2
        %v1921 = vsel %vm665, %v1920, %v1919
        %v1922 = vrot.slane %v1913, 1
        %v1923 = vsel %vm668, %v1922, %v1921
        %v1924 = vsel %vm671, %v1914, %v1923
        %v1925 = vrot.slane %v1915, 7
        %v1926 = vsel %vm674, %v1925, %v1924
        %v1927 = vrot.slane %v1916, 6
        %v1928 = vsel %vm677, %v1927, %v1926
        %v1929 = vrot.slane %v1917, 5
        %v1930 = vsel %vm680, %v1929, %v1928
        %v1931 = vrot.slane %v1918, 4
        %v1932 = vsel %vm683, %v1931, %v1930
        %v1933 = vpack.c.b16 %v1932, %v1932
        %v1943 = vunpack.c.l.s4 1983009808
        %v1944 = vunpack.c.0.s8 %v1943
        %v1945 = vlaneseq
        %v1946 = vshrl.u32 %v1945, 7
        %v1947 = vsub.s32 %v1944, %v1946
        %v1948 = vrot.slane %v1831, %v1947
        %v1950 = vunpack.c.l.s4 1983009808
        %v1951 = vunpack.c.0.s8 %v1950
        %v1952 = vlaneseq
        %v1953 = vshrl.u32 %v1952, 7
        %v1954 = vsub.s32 %v1951, %v1953
        %v1955 = vrot.slane %v1832, %v1954
        %v1957 = vunpack.c.l.s4 1983009808
        %v1958 = vunpack.c.0.s8 %v1957
        %v1959 = vlaneseq
        %v1960 = vshrl.u32 %v1959, 7
        %v1961 = vsub.s32 %v1958, %v1960
        %v1962 = vrot.slane %v1833, %v1961
        %v1964 = vunpack.c.l.s4 1983009808
        %v1965 = vunpack.c.0.s8 %v1964
        %v1966 = vlaneseq
        %v1967 = vshrl.u32 %v1966, 7
        %v1968 = vsub.s32 %v1965, %v1967
        %v1969 = vrot.slane %v1834, %v1968
        %v1971 = vunpack.c.l.s4 1983009808
        %v1972 = vunpack.c.0.s8 %v1971
        %v1973 = vlaneseq
        %v1974 = vshrl.u32 %v1973, 7
        %v1975 = vsub.s32 %v1972, %v1974
        %v1976 = vrot.slane %v1835, %v1975
        %v1978 = vunpack.c.l.s4 1983009808
        %v1979 = vunpack.c.0.s8 %v1978
        %v1980 = vlaneseq
        %v1981 = vshrl.u32 %v1980, 7
        %v1982 = vsub.s32 %v1979, %v1981
        %v1983 = vrot.slane %v1836, %v1982
        %v1985 = vunpack.c.l.s4 1983009808
        %v1986 = vunpack.c.0.s8 %v1985
        %v1987 = vlaneseq
        %v1988 = vshrl.u32 %v1987, 7
        %v1989 = vsub.s32 %v1986, %v1988
        %v1990 = vrot.slane %v1837, %v1989
        %v1992 = vunpack.c.l.s4 1983009808
        %v1993 = vunpack.c.0.s8 %v1992
        %v1994 = vlaneseq
        %v1995 = vshrl.u32 %v1994, 7
        %v1996 = vsub.s32 %v1993, %v1995
        %v1997 = vrot.slane %v1838, %v1996
        %v1998 = vunpack.c.l.b16 %v1948
        %v1999 = vunpack.c.l.b16 %v1955
        %v2000 = vunpack.c.l.b16 %v1962
        %v2001 = vunpack.c.l.b16 %v1969
        %v2002 = vunpack.c.l.b16 %v1976
        %v2003 = vunpack.c.l.b16 %v1983
        %v2004 = vunpack.c.l.b16 %v1990
        %v2005 = vunpack.c.l.b16 %v1997
        %v2006 = vrot.slane %v1998, 3
        %v2007 = vrot.slane %v1999, 2
        %v2008 = vsel %vm665, %v2007, %v2006
        %v2009 = vrot.slane %v2000, 1
        %v2010 = vsel %vm668, %v2009, %v2008
        %v2011 = vsel %vm671, %v2001, %v2010
        %v2012 = vrot.slane %v2002, 7
        %v2013 = vsel %vm674, %v2012, %v2011
        %v2014 = vrot.slane %v2003, 6
        %v2015 = vsel %vm677, %v2014, %v2013
        %v2016 = vrot.slane %v2004, 5
        %v2017 = vsel %vm680, %v2016, %v2015
        %v2018 = vrot.slane %v2005, 4
        %v2019 = vsel %vm683, %v2018, %v2017
        %v2020 = vpack.c.b16 %v2019, %v2019
        %v2022 = vsel %vm773, %v1933, 0
        %v2025 = vsel %vm773, %v2020, 0
        %2027 = vmatprep.subr.bf16.mxu0 0
        %2028 = vmatpush1.bf16.xpose.msra.mxu0 %v2025
        %2029 = vmatprep.subr.bf16.mxu0 0
        %2030 = vmatpush1.bf16.xpose.msra.mxu0 0
        %2031 = vmatprep.subr.bf16.mxu0 0
        %2032 = vmatpush1.bf16.xpose.msra.mxu0 0
        %2033 = vmatprep.subr.bf16.mxu0 0
        %2034 = vmatpush1.bf16.xpose.msra.mxu0 0
        %2035 = vmatprep.subr.bf16.mxu0 0
        %2036 = vmatpush1.bf16.xpose.msra.mxu0 0
        %2037 = vmatprep.subr.bf16.mxu0 0
        %2038 = vmatpush1.bf16.xpose.msra.mxu0 0
        %2039 = vmatprep.subr.bf16.mxu0 0
        %2040 = vmatpush1.bf16.xpose.msra.mxu0 0
        %2041 = vmatprep.subr.bf16.mxu0 0
        %2042 = vmatpush1.bf16.xpose.msra.mxu0 0
        %2043 = vmatprep.subr.bf16.mxu0 0
        %2044 = vmatpush1.bf16.xpose.msra.mxu0 0
        %2045 = vmatprep.subr.bf16.mxu0 0
        %2046 = vmatpush1.bf16.xpose.msra.mxu0 0
        %2047 = vmatprep.subr.bf16.mxu0 0
        %2048 = vmatpush1.bf16.xpose.msra.mxu0 0
        %2049 = vmatprep.subr.bf16.mxu0 0
        %2050 = vmatpush1.bf16.xpose.msra.mxu0 0
        %2051 = vmatprep.subr.bf16.mxu0 0
        %2052 = vmatpush1.bf16.xpose.msra.mxu0 0
        %2053 = vmatprep.subr.bf16.mxu0 0
        %2054 = vmatpush1.bf16.xpose.msra.mxu0 0
        %2055 = vmatprep.subr.bf16.mxu0 0
        %2056 = vmatpush1.bf16.xpose.msra.mxu0 0
        %2057 = vmatprep.subr.bf16.mxu0 0
        %2058 = vmatpush1.bf16.xpose.msra.mxu0 0
        %2059 = vmatprep.mubr.bf16.mxu0 0
        %2060 = vmatmul.mubr.bf16.gmra.mrb[0].mxu0 %v2022
        %v2061 = vpop.f32.mrb[0].mxu0
        %v2062 = vadd.f32 %v590, %v2061
        %v2063 = vpop.f32.mrb[0].mxu0
        %v2064 = vpop.f32.mrb[0].mxu0
        %v2065 = vpop.f32.mrb[0].mxu0
        %2066 = vdwg.mxu0
        %s2067 = scalar_lea.vmem [#allocation2], 24
        %v2068 = vld [vmem:[%s2067] sm:$0xff]
        %v2069 = vsel %vm773, %v2062, -inf
        %2070 = vmax.xlane.f32.xlu0 %v2069
        %v2071 = vpop.xlane.xlu0 %2070
        %v2072 = vmax.f32 %v2068, %v2071
        %v2073 = vsub.f32 %v2068, %v2072
        %v2074 = vmul.f32 %v2073, 1.442695
        %v2075 = vpow.pop %v2074
        %2077 = vset.pattern.permute.xlu0 0
        %2078 = vperm.xlu0 %2077, %v2072
        %v2079 = vpop.permute.xlu0 %2078
        %v2081 = vsub.f32 %v2062, %v2079
        %v2082 = vpack.c.bf16 %v2081, %v2081
        %v2084 = vmul.bf16 %v2082, 1069105081
        %v2085 = vpow.bf16.pop %v2084
        %v2086 = vunpack.c.l.bf16 %v2085
        %v2087 = vsel %vm773, %v2086, 0.0
        %2088 = vadd.xlane.f32.xlu0 %v2087
        %v2089 = vpop.xlane.xlu0 %2088
        %s2090 = scalar_lea.vmem [#allocation3], 24
        %v2091 = vld [vmem:[%s2090] sm:$0xff]
        %v2092 = vmul.f32 %v2075, %v2091
        %v2093 = vadd.f32 %v2092, %v2089
        %2094 = vst.msk [vmem:[%s2090] sm:$0xff] %vm845, %v2093
        %s2095 = scalar_lea.vmem [#allocation4], 24
        %v2096 = vld [vmem:[%s2095] sm:$0xff]
        %2098 = vset.pattern.permute.xlu0 0
        %2099 = vperm.xlu0 %2098, %v2075
        %v2100 = vpop.permute.xlu0 %2099
        %v2102 = vmul.f32 %v2100, %v2096
        %v2112 = vunpack.c.l.s4 1983009808
        %v2113 = vunpack.c.0.s8 %v2112
        %v2114 = vlaneseq
        %v2115 = vshrl.u32 %v2114, 7
        %v2116 = vsub.s32 %v2113, %v2115
        %v2117 = vrot.slane %v1839, %v2116
        %v2119 = vunpack.c.l.s4 1983009808
        %v2120 = vunpack.c.0.s8 %v2119
        %v2121 = vlaneseq
        %v2122 = vshrl.u32 %v2121, 7
        %v2123 = vsub.s32 %v2120, %v2122
        %v2124 = vrot.slane %v1840, %v2123
        %v2126 = vunpack.c.l.s4 1983009808
        %v2127 = vunpack.c.0.s8 %v2126
        %v2128 = vlaneseq
        %v2129 = vshrl.u32 %v2128, 7
        %v2130 = vsub.s32 %v2127, %v2129
        %v2131 = vrot.slane %v1841, %v2130
        %v2133 = vunpack.c.l.s4 1983009808
        %v2134 = vunpack.c.0.s8 %v2133
        %v2135 = vlaneseq
        %v2136 = vshrl.u32 %v2135, 7
        %v2137 = vsub.s32 %v2134, %v2136
        %v2138 = vrot.slane %v1842, %v2137
        %v2140 = vunpack.c.l.s4 1983009808
        %v2141 = vunpack.c.0.s8 %v2140
        %v2142 = vlaneseq
        %v2143 = vshrl.u32 %v2142, 7
        %v2144 = vsub.s32 %v2141, %v2143
        %v2145 = vrot.slane %v1843, %v2144
        %v2147 = vunpack.c.l.s4 1983009808
        %v2148 = vunpack.c.0.s8 %v2147
        %v2149 = vlaneseq
        %v2150 = vshrl.u32 %v2149, 7
        %v2151 = vsub.s32 %v2148, %v2150
        %v2152 = vrot.slane %v1844, %v2151
        %v2154 = vunpack.c.l.s4 1983009808
        %v2155 = vunpack.c.0.s8 %v2154
        %v2156 = vlaneseq
        %v2157 = vshrl.u32 %v2156, 7
        %v2158 = vsub.s32 %v2155, %v2157
        %v2159 = vrot.slane %v1845, %v2158
        %v2161 = vunpack.c.l.s4 1983009808
        %v2162 = vunpack.c.0.s8 %v2161
        %v2163 = vlaneseq
        %v2164 = vshrl.u32 %v2163, 7
        %v2165 = vsub.s32 %v2162, %v2164
        %v2166 = vrot.slane %v1846, %v2165
        %v2167 = vunpack.c.l.b16 %v2117
        %v2168 = vunpack.c.l.b16 %v2124
        %v2169 = vunpack.c.l.b16 %v2131
        %v2170 = vunpack.c.l.b16 %v2138
        %v2171 = vunpack.c.l.b16 %v2145
        %v2172 = vunpack.c.l.b16 %v2152
        %v2173 = vunpack.c.l.b16 %v2159
        %v2174 = vunpack.c.l.b16 %v2166
        %v2175 = vrot.slane %v2167, 3
        %v2176 = vrot.slane %v2168, 2
        %v2177 = vsel %vm665, %v2176, %v2175
        %v2178 = vrot.slane %v2169, 1
        %v2179 = vsel %vm668, %v2178, %v2177
        %v2180 = vsel %vm671, %v2170, %v2179
        %v2181 = vrot.slane %v2171, 7
        %v2182 = vsel %vm674, %v2181, %v2180
        %v2183 = vrot.slane %v2172, 6
        %v2184 = vsel %vm677, %v2183, %v2182
        %v2185 = vrot.slane %v2173, 5
        %v2186 = vsel %vm680, %v2185, %v2184
        %v2187 = vrot.slane %v2174, 4
        %v2188 = vsel %vm683, %v2187, %v2186
        %v2189 = vpack.c.b16 %v2188, %v2188
        %v2191 = vsel %vm773, %v2085, 0
        %v2194 = vsel %vm944, %v2189, 0
        %2196 = vmatprep.subr.bf16.mxu0 0
        %2197 = vmatpush1.bf16.msra.mxu0 %v2194
        %2198 = vmatprep.subr.bf16.mxu0 0
        %2199 = vmatpush1.bf16.msra.mxu0 0
        %2200 = vmatprep.subr.bf16.mxu0 0
        %2201 = vmatpush1.bf16.msra.mxu0 0
        %2202 = vmatprep.subr.bf16.mxu0 0
        %2203 = vmatpush1.bf16.msra.mxu0 0
        %2204 = vmatprep.subr.bf16.mxu0 0
        %2205 = vmatpush1.bf16.msra.mxu0 0
        %2206 = vmatprep.subr.bf16.mxu0 0
        %2207 = vmatpush1.bf16.msra.mxu0 0
        %2208 = vmatprep.subr.bf16.mxu0 0
        %2209 = vmatpush1.bf16.msra.mxu0 0
        %2210 = vmatprep.subr.bf16.mxu0 0
        %2211 = vmatpush1.bf16.msra.mxu0 0
        %2212 = vmatprep.subr.bf16.mxu0 0
        %2213 = vmatpush1.bf16.msra.mxu0 0
        %2214 = vmatprep.subr.bf16.mxu0 0
        %2215 = vmatpush1.bf16.msra.mxu0 0
        %2216 = vmatprep.subr.bf16.mxu0 0
        %2217 = vmatpush1.bf16.msra.mxu0 0
        %2218 = vmatprep.subr.bf16.mxu0 0
        %2219 = vmatpush1.bf16.msra.mxu0 0
        %2220 = vmatprep.subr.bf16.mxu0 0
        %2221 = vmatpush1.bf16.msra.mxu0 0
        %2222 = vmatprep.subr.bf16.mxu0 0
        %2223 = vmatpush1.bf16.msra.mxu0 0
        %2224 = vmatprep.subr.bf16.mxu0 0
        %2225 = vmatpush1.bf16.msra.mxu0 0
        %2226 = vmatprep.subr.bf16.mxu0 0
        %2227 = vmatpush1.bf16.msra.mxu0 0
        %2228 = vmatprep.mubr.bf16.mxu0 0
        %2229 = vmatmul.mubr.bf16.gmra.mrb[0].mxu0 %v2191
        %v2230 = vpop.f32.mrb[0].mxu0
        %v2231 = vadd.f32 0.0, %v2230
        %v2232 = vpop.f32.mrb[0].mxu0
        %v2233 = vpop.f32.mrb[0].mxu0
        %v2234 = vpop.f32.mrb[0].mxu0
        %2235 = vdwg.mxu0
        %v2236 = vadd.f32 %v2102, %v2231
        %2237 = vst.msk [vmem:[%s2095] sm:$0xff] %vm773, %v2236
        %2238 = vst.msk [vmem:[%s2067] sm:$0xff] %vm845, %v2072
        // Predicated region
        $region164: #{bert_forward.12} parent=146 // pred_check
          %p2239 = pneg %p543
        $region165: #{bert_forward.12} parent=146 // pred_check_branch
          %2241 = sbr.rel (%p2239) target = $region167
        $region166: #{bert_forward.12} parent=146 // pred_region
          %v2242 = vld [vmem:[#allocation3] sm:$0xff]
          %v2243 = vld [vmem:[#allocation3 + $0x8] sm:$0xff]
          %v2244 = vld [vmem:[#allocation3 + $0x10] sm:$0xff]
          %v2245 = vld [vmem:[#allocation3 + $0x18] sm:$0xff]
          %v2246 = vrcp.pop %v2242
          %v2247 = vrcp.pop %v2243
          %v2248 = vrcp.pop %v2244
          %v2249 = vrcp.pop %v2245
          %v2250 = vld [vmem:[#allocation4] sm:$0xff]
          %2252 = vset.pattern.permute.xlu0 0
          %2253 = vperm.xlu0 %2252, %v2246
          %v2254 = vpop.permute.xlu0 %2253
          %v2256 = vmul.f32 %v2250, %v2254
          %v2257 = vpack.c.bf16 %v2256, %v2256
          %vm2258 = vcmask 60416
          %2259 = vst.msk [vmem:[%s541] sm:$0xf] %vm2258, %v2257
          %v2260 = vld [vmem:[%s1263] sm:$0xff]
          %2262 = vset.pattern.permute.xlu0 0
          %2263 = vperm.xlu0 %2262, %v2247
          %v2264 = vpop.permute.xlu0 %2263
          %v2266 = vmul.f32 %v2260, %v2264
          %v2267 = vpack.c.bf16 %v2266, %v2266
          %v2269 = vunpack.c.l.b16 %v2267
          %v2270 = vpack.c.b16 %v2269, %v2269
          %2271 = vrot.lane.b32.xlu0 %v2270, 8
          %v2272 = vpop.permute.xlu0 %2271
          %vm2274 = vcmask 126016
          %2275 = vst.msk [vmem:[%s541] sm:$0xf] %vm2274, %v2272
          %v2276 = vld [vmem:[%s1679] sm:$0xff]
          %2278 = vset.pattern.permute.xlu0 0
          %2279 = vperm.xlu0 %2278, %v2248
          %v2280 = vpop.permute.xlu0 %2279
          %v2282 = vmul.f32 %v2276, %v2280
          %v2283 = vpack.c.bf16 %v2282, %v2282
          %v2285 = vunpack.c.l.b16 %v2283
          %v2286 = vpack.c.b16 %v2285, %v2285
          %2287 = vrot.lane.b32.xlu0 %v2286, 16
          %v2288 = vpop.permute.xlu0 %2287
          %vm2290 = vcmask 191616
          %2291 = vst.msk [vmem:[%s541] sm:$0xf] %vm2290, %v2288
          %v2292 = vld [vmem:[%s2095] sm:$0xff]
          %2294 = vset.pattern.permute.xlu0 0
          %2295 = vperm.xlu0 %2294, %v2249
          %v2296 = vpop.permute.xlu0 %2295
          %v2298 = vmul.f32 %v2292, %v2296
          %v2299 = vpack.c.bf16 %v2298, %v2298
          %v2301 = vunpack.c.l.b16 %v2299
          %v2302 = vpack.c.b16 %v2301, %v2301
          %2303 = vrot.lane.b32.xlu0 %v2302, 24
          %v2304 = vpop.permute.xlu0 %2303
          %vm2306 = vcmask 257216
          %2307 = vst.msk [vmem:[%s541] sm:$0xf] %vm2306, %v2304
        $region167: #{bert_forward.12} parent=146 // pred_fallthru
          _
        %p2308 = scmp.lt.s32.totalorder %s21, 1
        %s2309 = scalar_select %p2308, %s21, 1
        %p2310 = scmp.lt.s32.totalorder %s23, 0
        %s2311 = scalar_select %p2310, %s23, 0
        %p2312 = scmp.lt.s32.totalorder %s22, 0
        %s2313 = scalar_select %p2312, %s22, 0
        %s2314 = sadd.s32 %s2313, %s2311
        %s2315 = sadd.s32 %s2314, %s2309
        %s2316 = smul.addr %s2315, 4
        %s2317 = scalar_lea.vmem %s4, %s2316
        // Predicated region
        $region168: #{bert_forward.12} parent=146 // pred_check
          %p2318 = pneg %p181
        $region169: #{bert_forward.12} parent=146 // pred_check_branch
          %2320 = sbr.rel (%p2318) target = $region171
        $region170: #{bert_forward.12} parent=146 // pred_region
          _
        $region171: #{bert_forward.12} parent=146 // pred_fallthru
          _
      $region147: #{bert_forward.12} parent=5 // pred_fallthru
        _
      %p2321 = scmp.le.s32.totalorder 2, %s10
      // Predicated region
      $region172: #{bert_forward.12} parent=5 // pred_check
        %p2322 = pneg %p2321
      $region173: #{bert_forward.12} parent=5 // pred_check_branch
        %2324 = sbr.rel (%p2322) target = $region175
      $region174: #{bert_forward.12} parent=5 // pred_region
        %s2325 = ssub.s32 %s10, 2
        // Predicated region
        $region176: #{bert_forward.12} parent=174 // pred_check
          %p2326 = pneg %p187
        $region177: #{bert_forward.12} parent=174 // pred_check_branch
          %2328 = sbr.rel (%p2326) target = $region179
        $region178: #{bert_forward.12} parent=174 // pred_region
          %p2329 = scmp.lt.s32.totalorder %s25, 1
          %s2330 = scalar_select %p2329, %s25, 1
          %p2331 = scmp.lt.s32.totalorder %s27, 0
          %s2332 = scalar_select %p2331, %s27, 0
          %p2333 = scmp.lt.s32.totalorder %s26, 0
          %s2334 = scalar_select %p2333, %s26, 0
          %s2335 = sadd.s32 %s2334, %s2332
          %s2336 = sadd.s32 %s2335, %s2330
          %s2337 = smul.addr %s2336, 4
          %s2338 = scalar_lea.vmem %s4, %s2337
        $region179: #{bert_forward.12} parent=174 // pred_fallthru
          _
      $region175: #{bert_forward.12} parent=5 // pred_fallthru
        _
    $region6: #{bert_forward.12} parent=1 // loop_footer
      %s14 = sadd.s32 1, %s10
    $region7: #{bert_forward.12} parent=1 // loop_footer_branch
      %9 = sbr.rel target = $region3
    $region8: #{bert_forward.12} parent=1 // loop_exit
      _

</llo_original>
